<compile_context>
chip_gen: v7x
topology: tpu7x:2x2x1
jax: 0.10.0
libtpu: 0.0.40
codegen_flags: <defaults>
</compile_context>

<pallas_src>
import jax
import jax.numpy as jnp
from jax.experimental import pallas as pl
from jax.experimental.pallas import tpu as pltpu

N_MODELS = 40      # len(out_list) in the original script
BATCH = 8
HIDDEN = 32
OUT_DIM = 16


def _ensemble_kernel(x_ref, w_ref, b_ref, o_ref):
    # x_ref: (B, H)      shared input
    # w_ref: (N, H, D)   per-head weights (natural layout, no pre-packing)
    # b_ref: (N, 1, D)   per-head biases
    # o_ref: (N, B, D)   output already in torch.cat(dim=0) order
    x = x_ref[...]
    n = w_ref.shape[0]
    # Static unrolled loop: 40 tiny MXU matmuls; each result is stored
    # directly into its own (B, D) tile of the output, so no post-kernel
    # re-layout / transpose is needed anywhere.
    for m in range(n):
        o_ref[m] = (
            jnp.dot(x, w_ref[m], preferred_element_type=jnp.float32) + b_ref[m]
        ).astype(o_ref.dtype)


def list2model_forward(x, w, b):
    """x: (B, H), w: (N, H, D), b: (N, 1, D) -> (N*B, D)  (== torch.cat dim 0)."""
    n, h, d = w.shape
    bsz = x.shape[0]

    flops = 2 * n * bsz * h * d
    bytes_accessed = 4 * (x.size + w.size + b.size + n * bsz * d)

    out = pl.pallas_call(
        _ensemble_kernel,
        out_shape=jax.ShapeDtypeStruct((n, bsz, d), jnp.float32),
        in_specs=[
            pl.BlockSpec(memory_space=pltpu.MemorySpace.VMEM),
            pl.BlockSpec(memory_space=pltpu.MemorySpace.VMEM),
            pl.BlockSpec(memory_space=pltpu.MemorySpace.VMEM),
        ],
        out_specs=pl.BlockSpec(memory_space=pltpu.MemorySpace.VMEM),
        cost_estimate=pl.CostEstimate(
            flops=flops, transcendentals=0, bytes_accessed=bytes_accessed
        ),
    )(x, w, b)

    # (N, B, D) -> (N*B, D): collapses leading dims only -> free bitcast,
    # exactly torch.cat(dim=0) ordering.
    return out.reshape(n * bsz, d)


if __name__ == "__main__":
    key = jax.random.PRNGKey(0)
    kx, kw, kb = jax.random.split(key, 3)

    x = jax.random.normal(kx, (BATCH, HIDDEN), dtype=jnp.float32)
    w = jax.random.normal(kw, (N_MODELS, HIDDEN, OUT_DIM), dtype=jnp.float32) * 0.1
    b = jax.random.normal(kb, (N_MODELS, 1, OUT_DIM), dtype=jnp.float32) * 0.1

    fwd = jax.jit(list2model_forward)
    out = jax.block_until_ready(fwd(x, w, b))

    # pure-JAX reference: per-model linear head, concatenated along dim 0
    ref = jnp.concatenate([x @ w[m] + b[m] for m in range(N_MODELS)], axis=0)

    assert out.shape == (N_MODELS * BATCH, OUT_DIM), out.shape
    assert jnp.allclose(out, ref, atol=1e-4, rtol=1e-4)

    # TODO(synk): original sub-models come from an unavailable checkpoint
    # ('Multi_Adapt.model'); they are synthesized here as linear heads.
    print("KERNEL_OK")
</pallas_src>

<mosaic_0001>
module attributes {stable_mosaic.version = 11 : i64} {
  func.func @_ensemble_kernel(%arg0: memref<8x32xf32, #tpu.memory_space<vmem>>, %arg1: memref<40x32x16xf32, #tpu.memory_space<vmem>>, %arg2: memref<40x1x16xf32, #tpu.memory_space<vmem>>, %arg3: memref<40x8x16xf32, #tpu.memory_space<vmem>>) attributes {dimension_semantics = [], scalar_prefetch = 0 : i64, scratch_operands = 0 : i64, tpu.core_type = #tpu.core_type<tc>} {
    %c0 = arith.constant 0 : index
    %c0_0 = arith.constant 0 : index
    %0 = vector.load %arg0[%c0, %c0_0] : memref<8x32xf32, #tpu.memory_space<vmem>>, vector<8x32xf32>
    %c0_1 = arith.constant 0 : index
    %c0_2 = arith.constant 0 : index
    %c0_3 = arith.constant 0 : index
    %1 = vector.load %arg1[%c0_1, %c0_2, %c0_3] : memref<40x32x16xf32, #tpu.memory_space<vmem>>, vector<1x32x16xf32>
    %2 = vector.shape_cast %1 : vector<1x32x16xf32> to vector<32x16xf32>
    %cst = arith.constant dense<0.000000e+00> : vector<8x16xf32>
    %3 = tpu.matmul %0, %2, %cst {dimension_numbers = #tpu.dot_dimension_numbers<[1], [0], [0], [1], [0, 0, 1, 1], [], []>} : vector<8x32xf32>, vector<32x16xf32>, vector<8x16xf32> -> vector<8x16xf32>
    %c0_4 = arith.constant 0 : index
    %c0_5 = arith.constant 0 : index
    %c0_6 = arith.constant 0 : index
    %4 = vector.load %arg2[%c0_4, %c0_5, %c0_6] : memref<40x1x16xf32, #tpu.memory_space<vmem>>, vector<1x1x16xf32>
    %5 = vector.shape_cast %4 : vector<1x1x16xf32> to vector<1x16xf32>
    %6 = vector.broadcast %5 : vector<1x16xf32> to vector<8x16xf32>
    %7 = arith.addf %3, %6 : vector<8x16xf32>
    %c0_7 = arith.constant 0 : index
    %c0_8 = arith.constant 0 : index
    %c0_9 = arith.constant 0 : index
    %8 = vector.load %arg3[%c0_7, %c0_8, %c0_9] : memref<40x8x16xf32, #tpu.memory_space<vmem>>, vector<1x8x16xf32>
    %9 = vector.shape_cast %8 : vector<1x8x16xf32> to vector<8x16xf32>
    %10 = vector.shape_cast %7 : vector<8x16xf32> to vector<1x8x16xf32>
    tpu.vector_store %arg3[%c0_7, %c0_8, %c0_9], %10 {strides = array<i32>} : memref<40x8x16xf32, #tpu.memory_space<vmem>>, vector<1x8x16xf32>,
    %c1 = arith.constant 1 : index
    %c0_10 = arith.constant 0 : index
    %c0_11 = arith.constant 0 : index
    %11 = vector.load %arg1[%c1, %c0_10, %c0_11] : memref<40x32x16xf32, #tpu.memory_space<vmem>>, vector<1x32x16xf32>
    %12 = vector.shape_cast %11 : vector<1x32x16xf32> to vector<32x16xf32>
    %cst_12 = arith.constant dense<0.000000e+00> : vector<8x16xf32>
    %13 = tpu.matmul %0, %12, %cst_12 {dimension_numbers = #tpu.dot_dimension_numbers<[1], [0], [0], [1], [0, 0, 1, 1], [], []>} : vector<8x32xf32>, vector<32x16xf32>, vector<8x16xf32> -> vector<8x16xf32>
    %c1_13 = arith.constant 1 : index
    %c0_14 = arith.constant 0 : index
    %c0_15 = arith.constant 0 : index
    %14 = vector.load %arg2[%c1_13, %c0_14, %c0_15] : memref<40x1x16xf32, #tpu.memory_space<vmem>>, vector<1x1x16xf32>
    %15 = vector.shape_cast %14 : vector<1x1x16xf32> to vector<1x16xf32>
    %16 = vector.broadcast %15 : vector<1x16xf32> to vector<8x16xf32>
    %17 = arith.addf %13, %16 : vector<8x16xf32>
    %c1_16 = arith.constant 1 : index
    %c0_17 = arith.constant 0 : index
    %c0_18 = arith.constant 0 : index
    %18 = vector.load %arg3[%c1_16, %c0_17, %c0_18] : memref<40x8x16xf32, #tpu.memory_space<vmem>>, vector<1x8x16xf32>
    %19 = vector.shape_cast %18 : vector<1x8x16xf32> to vector<8x16xf32>
    %20 = vector.shape_cast %17 : vector<8x16xf32> to vector<1x8x16xf32>
    tpu.vector_store %arg3[%c1_16, %c0_17, %c0_18], %20 {strides = array<i32>} : memref<40x8x16xf32, #tpu.memory_space<vmem>>, vector<1x8x16xf32>,
    %c2 = arith.constant 2 : index
    %c0_19 = arith.constant 0 : index
    %c0_20 = arith.constant 0 : index
    %21 = vector.load %arg1[%c2, %c0_19, %c0_20] : memref<40x32x16xf32, #tpu.memory_space<vmem>>, vector<1x32x16xf32>
    %22 = vector.shape_cast %21 : vector<1x32x16xf32> to vector<32x16xf32>
    %cst_21 = arith.constant dense<0.000000e+00> : vector<8x16xf32>
    %23 = tpu.matmul %0, %22, %cst_21 {dimension_numbers = #tpu.dot_dimension_numbers<[1], [0], [0], [1], [0, 0, 1, 1], [], []>} : vector<8x32xf32>, vector<32x16xf32>, vector<8x16xf32> -> vector<8x16xf32>
    %c2_22 = arith.constant 2 : index
    %c0_23 = arith.constant 0 : index
    %c0_24 = arith.constant 0 : index
    %24 = vector.load %arg2[%c2_22, %c0_23, %c0_24] : memref<40x1x16xf32, #tpu.memory_space<vmem>>, vector<1x1x16xf32>
    %25 = vector.shape_cast %24 : vector<1x1x16xf32> to vector<1x16xf32>
    %26 = vector.broadcast %25 : vector<1x16xf32> to vector<8x16xf32>
    %27 = arith.addf %23, %26 : vector<8x16xf32>
    %c2_25 = arith.constant 2 : index
    %c0_26 = arith.constant 0 : index
    %c0_27 = arith.constant 0 : index
    %28 = vector.load %arg3[%c2_25, %c0_26, %c0_27] : memref<40x8x16xf32, #tpu.memory_space<vmem>>, vector<1x8x16xf32>
    %29 = vector.shape_cast %28 : vector<1x8x16xf32> to vector<8x16xf32>
    %30 = vector.shape_cast %27 : vector<8x16xf32> to vector<1x8x16xf32>
    tpu.vector_store %arg3[%c2_25, %c0_26, %c0_27], %30 {strides = array<i32>} : memref<40x8x16xf32, #tpu.memory_space<vmem>>, vector<1x8x16xf32>,
    %c3 = arith.constant 3 : index
    %c0_28 = arith.constant 0 : index
    %c0_29 = arith.constant 0 : index
    %31 = vector.load %arg1[%c3, %c0_28, %c0_29] : memref<40x32x16xf32, #tpu.memory_space<vmem>>, vector<1x32x16xf32>
    %32 = vector.shape_cast %31 : vector<1x32x16xf32> to vector<32x16xf32>
    %cst_30 = arith.constant dense<0.000000e+00> : vector<8x16xf32>
    %33 = tpu.matmul %0, %32, %cst_30 {dimension_numbers = #tpu.dot_dimension_numbers<[1], [0], [0], [1], [0, 0, 1, 1], [], []>} : vector<8x32xf32>, vector<32x16xf32>, vector<8x16xf32> -> vector<8x16xf32>
    %c3_31 = arith.constant 3 : index
    %c0_32 = arith.constant 0 : index
    %c0_33 = arith.constant 0 : index
    %34 = vector.load %arg2[%c3_31, %c0_32, %c0_33] : memref<40x1x16xf32, #tpu.memory_space<vmem>>, vector<1x1x16xf32>
    %35 = vector.shape_cast %34 : vector<1x1x16xf32> to vector<1x16xf32>
    %36 = vector.broadcast %35 : vector<1x16xf32> to vector<8x16xf32>
    %37 = arith.addf %33, %36 : vector<8x16xf32>
    %c3_34 = arith.constant 3 : index
    %c0_35 = arith.constant 0 : index
    %c0_36 = arith.constant 0 : index
    %38 = vector.load %arg3[%c3_34, %c0_35, %c0_36] : memref<40x8x16xf32, #tpu.memory_space<vmem>>, vector<1x8x16xf32>
    %39 = vector.shape_cast %38 : vector<1x8x16xf32> to vector<8x16xf32>
    %40 = vector.shape_cast %37 : vector<8x16xf32> to vector<1x8x16xf32>
    tpu.vector_store %arg3[%c3_34, %c0_35, %c0_36], %40 {strides = array<i32>} : memref<40x8x16xf32, #tpu.memory_space<vmem>>, vector<1x8x16xf32>,
    %c4 = arith.constant 4 : index
    %c0_37 = arith.constant 0 : index
    %c0_38 = arith.constant 0 : index
    %41 = vector.load %arg1[%c4, %c0_37, %c0_38] : memref<40x32x16xf32, #tpu.memory_space<vmem>>, vector<1x32x16xf32>
    %42 = vector.shape_cast %41 : vector<1x32x16xf32> to vector<32x16xf32>
    %cst_39 = arith.constant dense<0.000000e+00> : vector<8x16xf32>
    %43 = tpu.matmul %0, %42, %cst_39 {dimension_numbers = #tpu.dot_dimension_numbers<[1], [0], [0], [1], [0, 0, 1, 1], [], []>} : vector<8x32xf32>, vector<32x16xf32>, vector<8x16xf32> -> vector<8x16xf32>
    %c4_40 = arith.constant 4 : index
    %c0_41 = arith.constant 0 : index
    %c0_42 = arith.constant 0 : index
    %44 = vector.load %arg2[%c4_40, %c0_41, %c0_42] : memref<40x1x16xf32, #tpu.memory_space<vmem>>, vector<1x1x16xf32>
    %45 = vector.shape_cast %44 : vector<1x1x16xf32> to vector<1x16xf32>
    %46 = vector.broadcast %45 : vector<1x16xf32> to vector<8x16xf32>
    %47 = arith.addf %43, %46 : vector<8x16xf32>
    %c4_43 = arith.constant 4 : index
    %c0_44 = arith.constant 0 : index
    %c0_45 = arith.constant 0 : index
    %48 = vector.load %arg3[%c4_43, %c0_44, %c0_45] : memref<40x8x16xf32, #tpu.memory_space<vmem>>, vector<1x8x16xf32>
    %49 = vector.shape_cast %48 : vector<1x8x16xf32> to vector<8x16xf32>
    %50 = vector.shape_cast %47 : vector<8x16xf32> to vector<1x8x16xf32>
    tpu.vector_store %arg3[%c4_43, %c0_44, %c0_45], %50 {strides = array<i32>} : memref<40x8x16xf32, #tpu.memory_space<vmem>>, vector<1x8x16xf32>,
    %c5 = arith.constant 5 : index
    %c0_46 = arith.constant 0 : index
    %c0_47 = arith.constant 0 : index
    %51 = vector.load %arg1[%c5, %c0_46, %c0_47] : memref<40x32x16xf32, #tpu.memory_space<vmem>>, vector<1x32x16xf32>
    %52 = vector.shape_cast %51 : vector<1x32x16xf32> to vector<32x16xf32>
    %cst_48 = arith.constant dense<0.000000e+00> : vector<8x16xf32>
    %53 = tpu.matmul %0, %52, %cst_48 {dimension_numbers = #tpu.dot_dimension_numbers<[1], [0], [0], [1], [0, 0, 1, 1], [], []>} : vector<8x32xf32>, vector<32x16xf32>, vector<8x16xf32> -> vector<8x16xf32>
    %c5_49 = arith.constant 5 : index
    %c0_50 = arith.constant 0 : index
    %c0_51 = arith.constant 0 : index
    %54 = vector.load %arg2[%c5_49, %c0_50, %c0_51] : memref<40x1x16xf32, #tpu.memory_space<vmem>>, vector<1x1x16xf32>
    %55 = vector.shape_cast %54 : vector<1x1x16xf32> to vector<1x16xf32>
    %56 = vector.broadcast %55 : vector<1x16xf32> to vector<8x16xf32>
    %57 = arith.addf %53, %56 : vector<8x16xf32>
    %c5_52 = arith.constant 5 : index
    %c0_53 = arith.constant 0 : index
    %c0_54 = arith.constant 0 : index
    %58 = vector.load %arg3[%c5_52, %c0_53, %c0_54] : memref<40x8x16xf32, #tpu.memory_space<vmem>>, vector<1x8x16xf32>
    %59 = vector.shape_cast %58 : vector<1x8x16xf32> to vector<8x16xf32>
    %60 = vector.shape_cast %57 : vector<8x16xf32> to vector<1x8x16xf32>
    tpu.vector_store %arg3[%c5_52, %c0_53, %c0_54], %60 {strides = array<i32>} : memref<40x8x16xf32, #tpu.memory_space<vmem>>, vector<1x8x16xf32>,
    %c6 = arith.constant 6 : index
    %c0_55 = arith.constant 0 : index
    %c0_56 = arith.constant 0 : index
    %61 = vector.load %arg1[%c6, %c0_55, %c0_56] : memref<40x32x16xf32, #tpu.memory_space<vmem>>, vector<1x32x16xf32>
    %62 = vector.shape_cast %61 : vector<1x32x16xf32> to vector<32x16xf32>
    %cst_57 = arith.constant dense<0.000000e+00> : vector<8x16xf32>
    %63 = tpu.matmul %0, %62, %cst_57 {dimension_numbers = #tpu.dot_dimension_numbers<[1], [0], [0], [1], [0, 0, 1, 1], [], []>} : vector<8x32xf32>, vector<32x16xf32>, vector<8x16xf32> -> vector<8x16xf32>
    %c6_58 = arith.constant 6 : index
    %c0_59 = arith.constant 0 : index
    %c0_60 = arith.constant 0 : index
    %64 = vector.load %arg2[%c6_58, %c0_59, %c0_60] : memref<40x1x16xf32, #tpu.memory_space<vmem>>, vector<1x1x16xf32>
    %65 = vector.shape_cast %64 : vector<1x1x16xf32> to vector<1x16xf32>
    %66 = vector.broadcast %65 : vector<1x16xf32> to vector<8x16xf32>
    %67 = arith.addf %63, %66 : vector<8x16xf32>
    %c6_61 = arith.constant 6 : index
    %c0_62 = arith.constant 0 : index
    %c0_63 = arith.constant 0 : index
    %68 = vector.load %arg3[%c6_61, %c0_62, %c0_63] : memref<40x8x16xf32, #tpu.memory_space<vmem>>, vector<1x8x16xf32>
    %69 = vector.shape_cast %68 : vector<1x8x16xf32> to vector<8x16xf32>
    %70 = vector.shape_cast %67 : vector<8x16xf32> to vector<1x8x16xf32>
    tpu.vector_store %arg3[%c6_61, %c0_62, %c0_63], %70 {strides = array<i32>} : memref<40x8x16xf32, #tpu.memory_space<vmem>>, vector<1x8x16xf32>,
    %c7 = arith.constant 7 : index
    %c0_64 = arith.constant 0 : index
    %c0_65 = arith.constant 0 : index
    %71 = vector.load %arg1[%c7, %c0_64, %c0_65] : memref<40x32x16xf32, #tpu.memory_space<vmem>>, vector<1x32x16xf32>
    %72 = vector.shape_cast %71 : vector<1x32x16xf32> to vector<32x16xf32>
    %cst_66 = arith.constant dense<0.000000e+00> : vector<8x16xf32>
    %73 = tpu.matmul %0, %72, %cst_66 {dimension_numbers = #tpu.dot_dimension_numbers<[1], [0], [0], [1], [0, 0, 1, 1], [], []>} : vector<8x32xf32>, vector<32x16xf32>, vector<8x16xf32> -> vector<8x16xf32>
    %c7_67 = arith.constant 7 : index
    %c0_68 = arith.constant 0 : index
    %c0_69 = arith.constant 0 : index
    %74 = vector.load %arg2[%c7_67, %c0_68, %c0_69] : memref<40x1x16xf32, #tpu.memory_space<vmem>>, vector<1x1x16xf32>
    %75 = vector.shape_cast %74 : vector<1x1x16xf32> to vector<1x16xf32>
    %76 = vector.broadcast %75 : vector<1x16xf32> to vector<8x16xf32>
    %77 = arith.addf %73, %76 : vector<8x16xf32>
    %c7_70 = arith.constant 7 : index
    %c0_71 = arith.constant 0 : index
    %c0_72 = arith.constant 0 : index
    %78 = vector.load %arg3[%c7_70, %c0_71, %c0_72] : memref<40x8x16xf32, #tpu.memory_space<vmem>>, vector<1x8x16xf32>
    %79 = vector.shape_cast %78 : vector<1x8x16xf32> to vector<8x16xf32>
    %80 = vector.shape_cast %77 : vector<8x16xf32> to vector<1x8x16xf32>
    tpu.vector_store %arg3[%c7_70, %c0_71, %c0_72], %80 {strides = array<i32>} : memref<40x8x16xf32, #tpu.memory_space<vmem>>, vector<1x8x16xf32>,
    %c8 = arith.constant 8 : index
    %c0_73 = arith.constant 0 : index
    %c0_74 = arith.constant 0 : index
    %81 = vector.load %arg1[%c8, %c0_73, %c0_74] : memref<40x32x16xf32, #tpu.memory_space<vmem>>, vector<1x32x16xf32>
    %82 = vector.shape_cast %81 : vector<1x32x16xf32> to vector<32x16xf32>
    %cst_75 = arith.constant dense<0.000000e+00> : vector<8x16xf32>
    %83 = tpu.matmul %0, %82, %cst_75 {dimension_numbers = #tpu.dot_dimension_numbers<[1], [0], [0], [1], [0, 0, 1, 1], [], []>} : vector<8x32xf32>, vector<32x16xf32>, vector<8x16xf32> -> vector<8x16xf32>
    %c8_76 = arith.constant 8 : index
    %c0_77 = arith.constant 0 : index
    %c0_78 = arith.constant 0 : index
    %84 = vector.load %arg2[%c8_76, %c0_77, %c0_78] : memref<40x1x16xf32, #tpu.memory_space<vmem>>, vector<1x1x16xf32>
    %85 = vector.shape_cast %84 : vector<1x1x16xf32> to vector<1x16xf32>
    %86 = vector.broadcast %85 : vector<1x16xf32> to vector<8x16xf32>
    %87 = arith.addf %83, %86 : vector<8x16xf32>
    %c8_79 = arith.constant 8 : index
    %c0_80 = arith.constant 0 : index
    %c0_81 = arith.constant 0 : index
    %88 = vector.load %arg3[%c8_79, %c0_80, %c0_81] : memref<40x8x16xf32, #tpu.memory_space<vmem>>, vector<1x8x16xf32>
    %89 = vector.shape_cast %88 : vector<1x8x16xf32> to vector<8x16xf32>
    %90 = vector.shape_cast %87 : vector<8x16xf32> to vector<1x8x16xf32>
    tpu.vector_store %arg3[%c8_79, %c0_80, %c0_81], %90 {strides = array<i32>} : memref<40x8x16xf32, #tpu.memory_space<vmem>>, vector<1x8x16xf32>,
    %c9 = arith.constant 9 : index
    %c0_82 = arith.constant 0 : index
    %c0_83 = arith.constant 0 : index
    %91 = vector.load %arg1[%c9, %c0_82, %c0_83] : memref<40x32x16xf32, #tpu.memory_space<vmem>>, vector<1x32x16xf32>
    %92 = vector.shape_cast %91 : vector<1x32x16xf32> to vector<32x16xf32>
    %cst_84 = arith.constant dense<0.000000e+00> : vector<8x16xf32>
    %93 = tpu.matmul %0, %92, %cst_84 {dimension_numbers = #tpu.dot_dimension_numbers<[1], [0], [0], [1], [0, 0, 1, 1], [], []>} : vector<8x32xf32>, vector<32x16xf32>, vector<8x16xf32> -> vector<8x16xf32>
    %c9_85 = arith.constant 9 : index
    %c0_86 = arith.constant 0 : index
    %c0_87 = arith.constant 0 : index
    %94 = vector.load %arg2[%c9_85, %c0_86, %c0_87] : memref<40x1x16xf32, #tpu.memory_space<vmem>>, vector<1x1x16xf32>
    %95 = vector.shape_cast %94 : vector<1x1x16xf32> to vector<1x16xf32>
    %96 = vector.broadcast %95 : vector<1x16xf32> to vector<8x16xf32>
    %97 = arith.addf %93, %96 : vector<8x16xf32>
    %c9_88 = arith.constant 9 : index
    %c0_89 = arith.constant 0 : index
    %c0_90 = arith.constant 0 : index
    %98 = vector.load %arg3[%c9_88, %c0_89, %c0_90] : memref<40x8x16xf32, #tpu.memory_space<vmem>>, vector<1x8x16xf32>
    %99 = vector.shape_cast %98 : vector<1x8x16xf32> to vector<8x16xf32>
    %100 = vector.shape_cast %97 : vector<8x16xf32> to vector<1x8x16xf32>
    tpu.vector_store %arg3[%c9_88, %c0_89, %c0_90], %100 {strides = array<i32>} : memref<40x8x16xf32, #tpu.memory_space<vmem>>, vector<1x8x16xf32>,
    %c10 = arith.constant 10 : index
    %c0_91 = arith.constant 0 : index
    %c0_92 = arith.constant 0 : index
    %101 = vector.load %arg1[%c10, %c0_91, %c0_92] : memref<40x32x16xf32, #tpu.memory_space<vmem>>, vector<1x32x16xf32>
    %102 = vector.shape_cast %101 : vector<1x32x16xf32> to vector<32x16xf32>
    %cst_93 = arith.constant dense<0.000000e+00> : vector<8x16xf32>
    %103 = tpu.matmul %0, %102, %cst_93 {dimension_numbers = #tpu.dot_dimension_numbers<[1], [0], [0], [1], [0, 0, 1, 1], [], []>} : vector<8x32xf32>, vector<32x16xf32>, vector<8x16xf32> -> vector<8x16xf32>
    %c10_94 = arith.constant 10 : index
    %c0_95 = arith.constant 0 : index
    %c0_96 = arith.constant 0 : index
    %104 = vector.load %arg2[%c10_94, %c0_95, %c0_96] : memref<40x1x16xf32, #tpu.memory_space<vmem>>, vector<1x1x16xf32>
    %105 = vector.shape_cast %104 : vector<1x1x16xf32> to vector<1x16xf32>
    %106 = vector.broadcast %105 : vector<1x16xf32> to vector<8x16xf32>
    %107 = arith.addf %103, %106 : vector<8x16xf32>
    %c10_97 = arith.constant 10 : index
    %c0_98 = arith.constant 0 : index
    %c0_99 = arith.constant 0 : index
    %108 = vector.load %arg3[%c10_97, %c0_98, %c0_99] : memref<40x8x16xf32, #tpu.memory_space<vmem>>, vector<1x8x16xf32>
    %109 = vector.shape_cast %108 : vector<1x8x16xf32> to vector<8x16xf32>
    %110 = vector.shape_cast %107 : vector<8x16xf32> to vector<1x8x16xf32>
    tpu.vector_store %arg3[%c10_97, %c0_98, %c0_99], %110 {strides = array<i32>} : memref<40x8x16xf32, #tpu.memory_space<vmem>>, vector<1x8x16xf32>,
    %c11 = arith.constant 11 : index
    %c0_100 = arith.constant 0 : index
    %c0_101 = arith.constant 0 : index
    %111 = vector.load %arg1[%c11, %c0_100, %c0_101] : memref<40x32x16xf32, #tpu.memory_space<vmem>>, vector<1x32x16xf32>
    %112 = vector.shape_cast %111 : vector<1x32x16xf32> to vector<32x16xf32>
    %cst_102 = arith.constant dense<0.000000e+00> : vector<8x16xf32>
    %113 = tpu.matmul %0, %112, %cst_102 {dimension_numbers = #tpu.dot_dimension_numbers<[1], [0], [0], [1], [0, 0, 1, 1], [], []>} : vector<8x32xf32>, vector<32x16xf32>, vector<8x16xf32> -> vector<8x16xf32>
    %c11_103 = arith.constant 11 : index
    %c0_104 = arith.constant 0 : index
    %c0_105 = arith.constant 0 : index
    %114 = vector.load %arg2[%c11_103, %c0_104, %c0_105] : memref<40x1x16xf32, #tpu.memory_space<vmem>>, vector<1x1x16xf32>
    %115 = vector.shape_cast %114 : vector<1x1x16xf32> to vector<1x16xf32>
    %116 = vector.broadcast %115 : vector<1x16xf32> to vector<8x16xf32>
    %117 = arith.addf %113, %116 : vector<8x16xf32>
    %c11_106 = arith.constant 11 : index
    %c0_107 = arith.constant 0 : index
    %c0_108 = arith.constant 0 : index
    %118 = vector.load %arg3[%c11_106, %c0_107, %c0_108] : memref<40x8x16xf32, #tpu.memory_space<vmem>>, vector<1x8x16xf32>
    %119 = vector.shape_cast %118 : vector<1x8x16xf32> to vector<8x16xf32>
    %120 = vector.shape_cast %117 : vector<8x16xf32> to vector<1x8x16xf32>
    tpu.vector_store %arg3[%c11_106, %c0_107, %c0_108], %120 {strides = array<i32>} : memref<40x8x16xf32, #tpu.memory_space<vmem>>, vector<1x8x16xf32>,
    %c12 = arith.constant 12 : index
    %c0_109 = arith.constant 0 : index
    %c0_110 = arith.constant 0 : index
    %121 = vector.load %arg1[%c12, %c0_109, %c0_110] : memref<40x32x16xf32, #tpu.memory_space<vmem>>, vector<1x32x16xf32>
    %122 = vector.shape_cast %121 : vector<1x32x16xf32> to vector<32x16xf32>
    %cst_111 = arith.constant dense<0.000000e+00> : vector<8x16xf32>
    %123 = tpu.matmul %0, %122, %cst_111 {dimension_numbers = #tpu.dot_dimension_numbers<[1], [0], [0], [1], [0, 0, 1, 1], [], []>} : vector<8x32xf32>, vector<32x16xf32>, vector<8x16xf32> -> vector<8x16xf32>
    %c12_112 = arith.constant 12 : index
    %c0_113 = arith.constant 0 : index
    %c0_114 = arith.constant 0 : index
    %124 = vector.load %arg2[%c12_112, %c0_113, %c0_114] : memref<40x1x16xf32, #tpu.memory_space<vmem>>, vector<1x1x16xf32>
    %125 = vector.shape_cast %124 : vector<1x1x16xf32> to vector<1x16xf32>
    %126 = vector.broadcast %125 : vector<1x16xf32> to vector<8x16xf32>
    %127 = arith.addf %123, %126 : vector<8x16xf32>
    %c12_115 = arith.constant 12 : index
    %c0_116 = arith.constant 0 : index
    %c0_117 = arith.constant 0 : index
    %128 = vector.load %arg3[%c12_115, %c0_116, %c0_117] : memref<40x8x16xf32, #tpu.memory_space<vmem>>, vector<1x8x16xf32>
    %129 = vector.shape_cast %128 : vector<1x8x16xf32> to vector<8x16xf32>
    %130 = vector.shape_cast %127 : vector<8x16xf32> to vector<1x8x16xf32>
    tpu.vector_store %arg3[%c12_115, %c0_116, %c0_117], %130 {strides = array<i32>} : memref<40x8x16xf32, #tpu.memory_space<vmem>>, vector<1x8x16xf32>,
    %c13 = arith.constant 13 : index
    %c0_118 = arith.constant 0 : index
    %c0_119 = arith.constant 0 : index
    %131 = vector.load %arg1[%c13, %c0_118, %c0_119] : memref<40x32x16xf32, #tpu.memory_space<vmem>>, vector<1x32x16xf32>
    %132 = vector.shape_cast %131 : vector<1x32x16xf32> to vector<32x16xf32>
    %cst_120 = arith.constant dense<0.000000e+00> : vector<8x16xf32>
    %133 = tpu.matmul %0, %132, %cst_120 {dimension_numbers = #tpu.dot_dimension_numbers<[1], [0], [0], [1], [0, 0, 1, 1], [], []>} : vector<8x32xf32>, vector<32x16xf32>, vector<8x16xf32> -> vector<8x16xf32>
    %c13_121 = arith.constant 13 : index
    %c0_122 = arith.constant 0 : index
    %c0_123 = arith.constant 0 : index
    %134 = vector.load %arg2[%c13_121, %c0_122, %c0_123] : memref<40x1x16xf32, #tpu.memory_space<vmem>>, vector<1x1x16xf32>
    %135 = vector.shape_cast %134 : vector<1x1x16xf32> to vector<1x16xf32>
    %136 = vector.broadcast %135 : vector<1x16xf32> to vector<8x16xf32>
    %137 = arith.addf %133, %136 : vector<8x16xf32>
    %c13_124 = arith.constant 13 : index
    %c0_125 = arith.constant 0 : index
    %c0_126 = arith.constant 0 : index
    %138 = vector.load %arg3[%c13_124, %c0_125, %c0_126] : memref<40x8x16xf32, #tpu.memory_space<vmem>>, vector<1x8x16xf32>
    %139 = vector.shape_cast %138 : vector<1x8x16xf32> to vector<8x16xf32>
    %140 = vector.shape_cast %137 : vector<8x16xf32> to vector<1x8x16xf32>
    tpu.vector_store %arg3[%c13_124, %c0_125, %c0_126], %140 {strides = array<i32>} : memref<40x8x16xf32, #tpu.memory_space<vmem>>, vector<1x8x16xf32>,
    %c14 = arith.constant 14 : index
    %c0_127 = arith.constant 0 : index
    %c0_128 = arith.constant 0 : index
    %141 = vector.load %arg1[%c14, %c0_127, %c0_128] : memref<40x32x16xf32, #tpu.memory_space<vmem>>, vector<1x32x16xf32>
    %142 = vector.shape_cast %141 : vector<1x32x16xf32> to vector<32x16xf32>
    %cst_129 = arith.constant dense<0.000000e+00> : vector<8x16xf32>
    %143 = tpu.matmul %0, %142, %cst_129 {dimension_numbers = #tpu.dot_dimension_numbers<[1], [0], [0], [1], [0, 0, 1, 1], [], []>} : vector<8x32xf32>, vector<32x16xf32>, vector<8x16xf32> -> vector<8x16xf32>
    %c14_130 = arith.constant 14 : index
    %c0_131 = arith.constant 0 : index
    %c0_132 = arith.constant 0 : index
    %144 = vector.load %arg2[%c14_130, %c0_131, %c0_132] : memref<40x1x16xf32, #tpu.memory_space<vmem>>, vector<1x1x16xf32>
    %145 = vector.shape_cast %144 : vector<1x1x16xf32> to vector<1x16xf32>
    %146 = vector.broadcast %145 : vector<1x16xf32> to vector<8x16xf32>
    %147 = arith.addf %143, %146 : vector<8x16xf32>
    %c14_133 = arith.constant 14 : index
    %c0_134 = arith.constant 0 : index
    %c0_135 = arith.constant 0 : index
    %148 = vector.load %arg3[%c14_133, %c0_134, %c0_135] : memref<40x8x16xf32, #tpu.memory_space<vmem>>, vector<1x8x16xf32>
    %149 = vector.shape_cast %148 : vector<1x8x16xf32> to vector<8x16xf32>
    %150 = vector.shape_cast %147 : vector<8x16xf32> to vector<1x8x16xf32>
    tpu.vector_store %arg3[%c14_133, %c0_134, %c0_135], %150 {strides = array<i32>} : memref<40x8x16xf32, #tpu.memory_space<vmem>>, vector<1x8x16xf32>,
    %c15 = arith.constant 15 : index
    %c0_136 = arith.constant 0 : index
    %c0_137 = arith.constant 0 : index
    %151 = vector.load %arg1[%c15, %c0_136, %c0_137] : memref<40x32x16xf32, #tpu.memory_space<vmem>>, vector<1x32x16xf32>
    %152 = vector.shape_cast %151 : vector<1x32x16xf32> to vector<32x16xf32>
    %cst_138 = arith.constant dense<0.000000e+00> : vector<8x16xf32>
    %153 = tpu.matmul %0, %152, %cst_138 {dimension_numbers = #tpu.dot_dimension_numbers<[1], [0], [0], [1], [0, 0, 1, 1], [], []>} : vector<8x32xf32>, vector<32x16xf32>, vector<8x16xf32> -> vector<8x16xf32>
    %c15_139 = arith.constant 15 : index
    %c0_140 = arith.constant 0 : index
    %c0_141 = arith.constant 0 : index
    %154 = vector.load %arg2[%c15_139, %c0_140, %c0_141] : memref<40x1x16xf32, #tpu.memory_space<vmem>>, vector<1x1x16xf32>
    %155 = vector.shape_cast %154 : vector<1x1x16xf32> to vector<1x16xf32>
    %156 = vector.broadcast %155 : vector<1x16xf32> to vector<8x16xf32>
    %157 = arith.addf %153, %156 : vector<8x16xf32>
    %c15_142 = arith.constant 15 : index
    %c0_143 = arith.constant 0 : index
    %c0_144 = arith.constant 0 : index
    %158 = vector.load %arg3[%c15_142, %c0_143, %c0_144] : memref<40x8x16xf32, #tpu.memory_space<vmem>>, vector<1x8x16xf32>
    %159 = vector.shape_cast %158 : vector<1x8x16xf32> to vector<8x16xf32>
    %160 = vector.shape_cast %157 : vector<8x16xf32> to vector<1x8x16xf32>
    tpu.vector_store %arg3[%c15_142, %c0_143, %c0_144], %160 {strides = array<i32>} : memref<40x8x16xf32, #tpu.memory_space<vmem>>, vector<1x8x16xf32>,
    %c16 = arith.constant 16 : index
    %c0_145 = arith.constant 0 : index
    %c0_146 = arith.constant 0 : index
    %161 = vector.load %arg1[%c16, %c0_145, %c0_146] : memref<40x32x16xf32, #tpu.memory_space<vmem>>, vector<1x32x16xf32>
    %162 = vector.shape_cast %161 : vector<1x32x16xf32> to vector<32x16xf32>
    %cst_147 = arith.constant dense<0.000000e+00> : vector<8x16xf32>
    %163 = tpu.matmul %0, %162, %cst_147 {dimension_numbers = #tpu.dot_dimension_numbers<[1], [0], [0], [1], [0, 0, 1, 1], [], []>} : vector<8x32xf32>, vector<32x16xf32>, vector<8x16xf32> -> vector<8x16xf32>
    %c16_148 = arith.constant 16 : index
    %c0_149 = arith.constant 0 : index
    %c0_150 = arith.constant 0 : index
    %164 = vector.load %arg2[%c16_148, %c0_149, %c0_150] : memref<40x1x16xf32, #tpu.memory_space<vmem>>, vector<1x1x16xf32>
    %165 = vector.shape_cast %164 : vector<1x1x16xf32> to vector<1x16xf32>
    %166 = vector.broadcast %165 : vector<1x16xf32> to vector<8x16xf32>
    %167 = arith.addf %163, %166 : vector<8x16xf32>
    %c16_151 = arith.constant 16 : index
    %c0_152 = arith.constant 0 : index
    %c0_153 = arith.constant 0 : index
    %168 = vector.load %arg3[%c16_151, %c0_152, %c0_153] : memref<40x8x16xf32, #tpu.memory_space<vmem>>, vector<1x8x16xf32>
    %169 = vector.shape_cast %168 : vector<1x8x16xf32> to vector<8x16xf32>
    %170 = vector.shape_cast %167 : vector<8x16xf32> to vector<1x8x16xf32>
    tpu.vector_store %arg3[%c16_151, %c0_152, %c0_153], %170 {strides = array<i32>} : memref<40x8x16xf32, #tpu.memory_space<vmem>>, vector<1x8x16xf32>,
    %c17 = arith.constant 17 : index
    %c0_154 = arith.constant 0 : index
    %c0_155 = arith.constant 0 : index
    %171 = vector.load %arg1[%c17, %c0_154, %c0_155] : memref<40x32x16xf32, #tpu.memory_space<vmem>>, vector<1x32x16xf32>
    %172 = vector.shape_cast %171 : vector<1x32x16xf32> to vector<32x16xf32>
    %cst_156 = arith.constant dense<0.000000e+00> : vector<8x16xf32>
    %173 = tpu.matmul %0, %172, %cst_156 {dimension_numbers = #tpu.dot_dimension_numbers<[1], [0], [0], [1], [0, 0, 1, 1], [], []>} : vector<8x32xf32>, vector<32x16xf32>, vector<8x16xf32> -> vector<8x16xf32>
    %c17_157 = arith.constant 17 : index
    %c0_158 = arith.constant 0 : index
    %c0_159 = arith.constant 0 : index
    %174 = vector.load %arg2[%c17_157, %c0_158, %c0_159] : memref<40x1x16xf32, #tpu.memory_space<vmem>>, vector<1x1x16xf32>
    %175 = vector.shape_cast %174 : vector<1x1x16xf32> to vector<1x16xf32>
    %176 = vector.broadcast %175 : vector<1x16xf32> to vector<8x16xf32>
    %177 = arith.addf %173, %176 : vector<8x16xf32>
    %c17_160 = arith.constant 17 : index
    %c0_161 = arith.constant 0 : index
    %c0_162 = arith.constant 0 : index
    %178 = vector.load %arg3[%c17_160, %c0_161, %c0_162] : memref<40x8x16xf32, #tpu.memory_space<vmem>>, vector<1x8x16xf32>
    %179 = vector.shape_cast %178 : vector<1x8x16xf32> to vector<8x16xf32>
    %180 = vector.shape_cast %177 : vector<8x16xf32> to vector<1x8x16xf32>
    tpu.vector_store %arg3[%c17_160, %c0_161, %c0_162], %180 {strides = array<i32>} : memref<40x8x16xf32, #tpu.memory_space<vmem>>, vector<1x8x16xf32>,
    %c18 = arith.constant 18 : index
    %c0_163 = arith.constant 0 : index
    %c0_164 = arith.constant 0 : index
    %181 = vector.load %arg1[%c18, %c0_163, %c0_164] : memref<40x32x16xf32, #tpu.memory_space<vmem>>, vector<1x32x16xf32>
    %182 = vector.shape_cast %181 : vector<1x32x16xf32> to vector<32x16xf32>
    %cst_165 = arith.constant dense<0.000000e+00> : vector<8x16xf32>
    %183 = tpu.matmul %0, %182, %cst_165 {dimension_numbers = #tpu.dot_dimension_numbers<[1], [0], [0], [1], [0, 0, 1, 1], [], []>} : vector<8x32xf32>, vector<32x16xf32>, vector<8x16xf32> -> vector<8x16xf32>
    %c18_166 = arith.constant 18 : index
    %c0_167 = arith.constant 0 : index
    %c0_168 = arith.constant 0 : index
    %184 = vector.load %arg2[%c18_166, %c0_167, %c0_168] : memref<40x1x16xf32, #tpu.memory_space<vmem>>, vector<1x1x16xf32>
    %185 = vector.shape_cast %184 : vector<1x1x16xf32> to vector<1x16xf32>
    %186 = vector.broadcast %185 : vector<1x16xf32> to vector<8x16xf32>
    %187 = arith.addf %183, %186 : vector<8x16xf32>
    %c18_169 = arith.constant 18 : index
    %c0_170 = arith.constant 0 : index
    %c0_171 = arith.constant 0 : index
    %188 = vector.load %arg3[%c18_169, %c0_170, %c0_171] : memref<40x8x16xf32, #tpu.memory_space<vmem>>, vector<1x8x16xf32>
    %189 = vector.shape_cast %188 : vector<1x8x16xf32> to vector<8x16xf32>
    %190 = vector.shape_cast %187 : vector<8x16xf32> to vector<1x8x16xf32>
    tpu.vector_store %arg3[%c18_169, %c0_170, %c0_171], %190 {strides = array<i32>} : memref<40x8x16xf32, #tpu.memory_space<vmem>>, vector<1x8x16xf32>,
    %c19 = arith.constant 19 : index
    %c0_172 = arith.constant 0 : index
    %c0_173 = arith.constant 0 : index
    %191 = vector.load %arg1[%c19, %c0_172, %c0_173] : memref<40x32x16xf32, #tpu.memory_space<vmem>>, vector<1x32x16xf32>
    %192 = vector.shape_cast %191 : vector<1x32x16xf32> to vector<32x16xf32>
    %cst_174 = arith.constant dense<0.000000e+00> : vector<8x16xf32>
    %193 = tpu.matmul %0, %192, %cst_174 {dimension_numbers = #tpu.dot_dimension_numbers<[1], [0], [0], [1], [0, 0, 1, 1], [], []>} : vector<8x32xf32>, vector<32x16xf32>, vector<8x16xf32> -> vector<8x16xf32>
    %c19_175 = arith.constant 19 : index
    %c0_176 = arith.constant 0 : index
    %c0_177 = arith.constant 0 : index
    %194 = vector.load %arg2[%c19_175, %c0_176, %c0_177] : memref<40x1x16xf32, #tpu.memory_space<vmem>>, vector<1x1x16xf32>
    %195 = vector.shape_cast %194 : vector<1x1x16xf32> to vector<1x16xf32>
    %196 = vector.broadcast %195 : vector<1x16xf32> to vector<8x16xf32>
    %197 = arith.addf %193, %196 : vector<8x16xf32>
    %c19_178 = arith.constant 19 : index
    %c0_179 = arith.constant 0 : index
    %c0_180 = arith.constant 0 : index
    %198 = vector.load %arg3[%c19_178, %c0_179, %c0_180] : memref<40x8x16xf32, #tpu.memory_space<vmem>>, vector<1x8x16xf32>
    %199 = vector.shape_cast %198 : vector<1x8x16xf32> to vector<8x16xf32>
    %200 = vector.shape_cast %197 : vector<8x16xf32> to vector<1x8x16xf32>
    tpu.vector_store %arg3[%c19_178, %c0_179, %c0_180], %200 {strides = array<i32>} : memref<40x8x16xf32, #tpu.memory_space<vmem>>, vector<1x8x16xf32>,
    %c20 = arith.constant 20 : index
    %c0_181 = arith.constant 0 : index
    %c0_182 = arith.constant 0 : index
    %201 = vector.load %arg1[%c20, %c0_181, %c0_182] : memref<40x32x16xf32, #tpu.memory_space<vmem>>, vector<1x32x16xf32>
    %202 = vector.shape_cast %201 : vector<1x32x16xf32> to vector<32x16xf32>
    %cst_183 = arith.constant dense<0.000000e+00> : vector<8x16xf32>
    %203 = tpu.matmul %0, %202, %cst_183 {dimension_numbers = #tpu.dot_dimension_numbers<[1], [0], [0], [1], [0, 0, 1, 1], [], []>} : vector<8x32xf32>, vector<32x16xf32>, vector<8x16xf32> -> vector<8x16xf32>
    %c20_184 = arith.constant 20 : index
    %c0_185 = arith.constant 0 : index
    %c0_186 = arith.constant 0 : index
    %204 = vector.load %arg2[%c20_184, %c0_185, %c0_186] : memref<40x1x16xf32, #tpu.memory_space<vmem>>, vector<1x1x16xf32>
    %205 = vector.shape_cast %204 : vector<1x1x16xf32> to vector<1x16xf32>
    %206 = vector.broadcast %205 : vector<1x16xf32> to vector<8x16xf32>
    %207 = arith.addf %203, %206 : vector<8x16xf32>
    %c20_187 = arith.constant 20 : index
    %c0_188 = arith.constant 0 : index
    %c0_189 = arith.constant 0 : index
    %208 = vector.load %arg3[%c20_187, %c0_188, %c0_189] : memref<40x8x16xf32, #tpu.memory_space<vmem>>, vector<1x8x16xf32>
    %209 = vector.shape_cast %208 : vector<1x8x16xf32> to vector<8x16xf32>
    %210 = vector.shape_cast %207 : vector<8x16xf32> to vector<1x8x16xf32>
    tpu.vector_store %arg3[%c20_187, %c0_188, %c0_189], %210 {strides = array<i32>} : memref<40x8x16xf32, #tpu.memory_space<vmem>>, vector<1x8x16xf32>,
    %c21 = arith.constant 21 : index
    %c0_190 = arith.constant 0 : index
    %c0_191 = arith.constant 0 : index
    %211 = vector.load %arg1[%c21, %c0_190, %c0_191] : memref<40x32x16xf32, #tpu.memory_space<vmem>>, vector<1x32x16xf32>
    %212 = vector.shape_cast %211 : vector<1x32x16xf32> to vector<32x16xf32>
    %cst_192 = arith.constant dense<0.000000e+00> : vector<8x16xf32>
    %213 = tpu.matmul %0, %212, %cst_192 {dimension_numbers = #tpu.dot_dimension_numbers<[1], [0], [0], [1], [0, 0, 1, 1], [], []>} : vector<8x32xf32>, vector<32x16xf32>, vector<8x16xf32> -> vector<8x16xf32>
    %c21_193 = arith.constant 21 : index
    %c0_194 = arith.constant 0 : index
    %c0_195 = arith.constant 0 : index
    %214 = vector.load %arg2[%c21_193, %c0_194, %c0_195] : memref<40x1x16xf32, #tpu.memory_space<vmem>>, vector<1x1x16xf32>
    %215 = vector.shape_cast %214 : vector<1x1x16xf32> to vector<1x16xf32>
    %216 = vector.broadcast %215 : vector<1x16xf32> to vector<8x16xf32>
    %217 = arith.addf %213, %216 : vector<8x16xf32>
    %c21_196 = arith.constant 21 : index
    %c0_197 = arith.constant 0 : index
    %c0_198 = arith.constant 0 : index
    %218 = vector.load %arg3[%c21_196, %c0_197, %c0_198] : memref<40x8x16xf32, #tpu.memory_space<vmem>>, vector<1x8x16xf32>
    %219 = vector.shape_cast %218 : vector<1x8x16xf32> to vector<8x16xf32>
    %220 = vector.shape_cast %217 : vector<8x16xf32> to vector<1x8x16xf32>
    tpu.vector_store %arg3[%c21_196, %c0_197, %c0_198], %220 {strides = array<i32>} : memref<40x8x16xf32, #tpu.memory_space<vmem>>, vector<1x8x16xf32>,
    %c22 = arith.constant 22 : index
    %c0_199 = arith.constant 0 : index
    %c0_200 = arith.constant 0 : index
    %221 = vector.load %arg1[%c22, %c0_199, %c0_200] : memref<40x32x16xf32, #tpu.memory_space<vmem>>, vector<1x32x16xf32>
    %222 = vector.shape_cast %221 : vector<1x32x16xf32> to vector<32x16xf32>
    %cst_201 = arith.constant dense<0.000000e+00> : vector<8x16xf32>
    %223 = tpu.matmul %0, %222, %cst_201 {dimension_numbers = #tpu.dot_dimension_numbers<[1], [0], [0], [1], [0, 0, 1, 1], [], []>} : vector<8x32xf32>, vector<32x16xf32>, vector<8x16xf32> -> vector<8x16xf32>
    %c22_202 = arith.constant 22 : index
    %c0_203 = arith.constant 0 : index
    %c0_204 = arith.constant 0 : index
    %224 = vector.load %arg2[%c22_202, %c0_203, %c0_204] : memref<40x1x16xf32, #tpu.memory_space<vmem>>, vector<1x1x16xf32>
    %225 = vector.shape_cast %224 : vector<1x1x16xf32> to vector<1x16xf32>
    %226 = vector.broadcast %225 : vector<1x16xf32> to vector<8x16xf32>
    %227 = arith.addf %223, %226 : vector<8x16xf32>
    %c22_205 = arith.constant 22 : index
    %c0_206 = arith.constant 0 : index
    %c0_207 = arith.constant 0 : index
    %228 = vector.load %arg3[%c22_205, %c0_206, %c0_207] : memref<40x8x16xf32, #tpu.memory_space<vmem>>, vector<1x8x16xf32>
    %229 = vector.shape_cast %228 : vector<1x8x16xf32> to vector<8x16xf32>
    %230 = vector.shape_cast %227 : vector<8x16xf32> to vector<1x8x16xf32>
    tpu.vector_store %arg3[%c22_205, %c0_206, %c0_207], %230 {strides = array<i32>} : memref<40x8x16xf32, #tpu.memory_space<vmem>>, vector<1x8x16xf32>,
    %c23 = arith.constant 23 : index
    %c0_208 = arith.constant 0 : index
    %c0_209 = arith.constant 0 : index
    %231 = vector.load %arg1[%c23, %c0_208, %c0_209] : memref<40x32x16xf32, #tpu.memory_space<vmem>>, vector<1x32x16xf32>
    %232 = vector.shape_cast %231 : vector<1x32x16xf32> to vector<32x16xf32>
    %cst_210 = arith.constant dense<0.000000e+00> : vector<8x16xf32>
    %233 = tpu.matmul %0, %232, %cst_210 {dimension_numbers = #tpu.dot_dimension_numbers<[1], [0], [0], [1], [0, 0, 1, 1], [], []>} : vector<8x32xf32>, vector<32x16xf32>, vector<8x16xf32> -> vector<8x16xf32>
    %c23_211 = arith.constant 23 : index
    %c0_212 = arith.constant 0 : index
    %c0_213 = arith.constant 0 : index
    %234 = vector.load %arg2[%c23_211, %c0_212, %c0_213] : memref<40x1x16xf32, #tpu.memory_space<vmem>>, vector<1x1x16xf32>
    %235 = vector.shape_cast %234 : vector<1x1x16xf32> to vector<1x16xf32>
    %236 = vector.broadcast %235 : vector<1x16xf32> to vector<8x16xf32>
    %237 = arith.addf %233, %236 : vector<8x16xf32>
    %c23_214 = arith.constant 23 : index
    %c0_215 = arith.constant 0 : index
    %c0_216 = arith.constant 0 : index
    %238 = vector.load %arg3[%c23_214, %c0_215, %c0_216] : memref<40x8x16xf32, #tpu.memory_space<vmem>>, vector<1x8x16xf32>
    %239 = vector.shape_cast %238 : vector<1x8x16xf32> to vector<8x16xf32>
    %240 = vector.shape_cast %237 : vector<8x16xf32> to vector<1x8x16xf32>
    tpu.vector_store %arg3[%c23_214, %c0_215, %c0_216], %240 {strides = array<i32>} : memref<40x8x16xf32, #tpu.memory_space<vmem>>, vector<1x8x16xf32>,
    %c24 = arith.constant 24 : index
    %c0_217 = arith.constant 0 : index
    %c0_218 = arith.constant 0 : index
    %241 = vector.load %arg1[%c24, %c0_217, %c0_218] : memref<40x32x16xf32, #tpu.memory_space<vmem>>, vector<1x32x16xf32>
    %242 = vector.shape_cast %241 : vector<1x32x16xf32> to vector<32x16xf32>
    %cst_219 = arith.constant dense<0.000000e+00> : vector<8x16xf32>
    %243 = tpu.matmul %0, %242, %cst_219 {dimension_numbers = #tpu.dot_dimension_numbers<[1], [0], [0], [1], [0, 0, 1, 1], [], []>} : vector<8x32xf32>, vector<32x16xf32>, vector<8x16xf32> -> vector<8x16xf32>
    %c24_220 = arith.constant 24 : index
    %c0_221 = arith.constant 0 : index
    %c0_222 = arith.constant 0 : index
    %244 = vector.load %arg2[%c24_220, %c0_221, %c0_222] : memref<40x1x16xf32, #tpu.memory_space<vmem>>, vector<1x1x16xf32>
    %245 = vector.shape_cast %244 : vector<1x1x16xf32> to vector<1x16xf32>
    %246 = vector.broadcast %245 : vector<1x16xf32> to vector<8x16xf32>
    %247 = arith.addf %243, %246 : vector<8x16xf32>
    %c24_223 = arith.constant 24 : index
    %c0_224 = arith.constant 0 : index
    %c0_225 = arith.constant 0 : index
    %248 = vector.load %arg3[%c24_223, %c0_224, %c0_225] : memref<40x8x16xf32, #tpu.memory_space<vmem>>, vector<1x8x16xf32>
    %249 = vector.shape_cast %248 : vector<1x8x16xf32> to vector<8x16xf32>
    %250 = vector.shape_cast %247 : vector<8x16xf32> to vector<1x8x16xf32>
    tpu.vector_store %arg3[%c24_223, %c0_224, %c0_225], %250 {strides = array<i32>} : memref<40x8x16xf32, #tpu.memory_space<vmem>>, vector<1x8x16xf32>,
    %c25 = arith.constant 25 : index
    %c0_226 = arith.constant 0 : index
    %c0_227 = arith.constant 0 : index
    %251 = vector.load %arg1[%c25, %c0_226, %c0_227] : memref<40x32x16xf32, #tpu.memory_space<vmem>>, vector<1x32x16xf32>
    %252 = vector.shape_cast %251 : vector<1x32x16xf32> to vector<32x16xf32>
    %cst_228 = arith.constant dense<0.000000e+00> : vector<8x16xf32>
    %253 = tpu.matmul %0, %252, %cst_228 {dimension_numbers = #tpu.dot_dimension_numbers<[1], [0], [0], [1], [0, 0, 1, 1], [], []>} : vector<8x32xf32>, vector<32x16xf32>, vector<8x16xf32> -> vector<8x16xf32>
    %c25_229 = arith.constant 25 : index
    %c0_230 = arith.constant 0 : index
    %c0_231 = arith.constant 0 : index
    %254 = vector.load %arg2[%c25_229, %c0_230, %c0_231] : memref<40x1x16xf32, #tpu.memory_space<vmem>>, vector<1x1x16xf32>
    %255 = vector.shape_cast %254 : vector<1x1x16xf32> to vector<1x16xf32>
    %256 = vector.broadcast %255 : vector<1x16xf32> to vector<8x16xf32>
    %257 = arith.addf %253, %256 : vector<8x16xf32>
    %c25_232 = arith.constant 25 : index
    %c0_233 = arith.constant 0 : index
    %c0_234 = arith.constant 0 : index
    %258 = vector.load %arg3[%c25_232, %c0_233, %c0_234] : memref<40x8x16xf32, #tpu.memory_space<vmem>>, vector<1x8x16xf32>
    %259 = vector.shape_cast %258 : vector<1x8x16xf32> to vector<8x16xf32>
    %260 = vector.shape_cast %257 : vector<8x16xf32> to vector<1x8x16xf32>
    tpu.vector_store %arg3[%c25_232, %c0_233, %c0_234], %260 {strides = array<i32>} : memref<40x8x16xf32, #tpu.memory_space<vmem>>, vector<1x8x16xf32>,
    %c26 = arith.constant 26 : index
    %c0_235 = arith.constant 0 : index
    %c0_236 = arith.constant 0 : index
    %261 = vector.load %arg1[%c26, %c0_235, %c0_236] : memref<40x32x16xf32, #tpu.memory_space<vmem>>, vector<1x32x16xf32>
    %262 = vector.shape_cast %261 : vector<1x32x16xf32> to vector<32x16xf32>
    %cst_237 = arith.constant dense<0.000000e+00> : vector<8x16xf32>
    %263 = tpu.matmul %0, %262, %cst_237 {dimension_numbers = #tpu.dot_dimension_numbers<[1], [0], [0], [1], [0, 0, 1, 1], [], []>} : vector<8x32xf32>, vector<32x16xf32>, vector<8x16xf32> -> vector<8x16xf32>
    %c26_238 = arith.constant 26 : index
    %c0_239 = arith.constant 0 : index
    %c0_240 = arith.constant 0 : index
    %264 = vector.load %arg2[%c26_238, %c0_239, %c0_240] : memref<40x1x16xf32, #tpu.memory_space<vmem>>, vector<1x1x16xf32>
    %265 = vector.shape_cast %264 : vector<1x1x16xf32> to vector<1x16xf32>
    %266 = vector.broadcast %265 : vector<1x16xf32> to vector<8x16xf32>
    %267 = arith.addf %263, %266 : vector<8x16xf32>
    %c26_241 = arith.constant 26 : index
    %c0_242 = arith.constant 0 : index
    %c0_243 = arith.constant 0 : index
    %268 = vector.load %arg3[%c26_241, %c0_242, %c0_243] : memref<40x8x16xf32, #tpu.memory_space<vmem>>, vector<1x8x16xf32>
    %269 = vector.shape_cast %268 : vector<1x8x16xf32> to vector<8x16xf32>
    %270 = vector.shape_cast %267 : vector<8x16xf32> to vector<1x8x16xf32>
    tpu.vector_store %arg3[%c26_241, %c0_242, %c0_243], %270 {strides = array<i32>} : memref<40x8x16xf32, #tpu.memory_space<vmem>>, vector<1x8x16xf32>,
    %c27 = arith.constant 27 : index
    %c0_244 = arith.constant 0 : index
    %c0_245 = arith.constant 0 : index
    %271 = vector.load %arg1[%c27, %c0_244, %c0_245] : memref<40x32x16xf32, #tpu.memory_space<vmem>>, vector<1x32x16xf32>
    %272 = vector.shape_cast %271 : vector<1x32x16xf32> to vector<32x16xf32>
    %cst_246 = arith.constant dense<0.000000e+00> : vector<8x16xf32>
    %273 = tpu.matmul %0, %272, %cst_246 {dimension_numbers = #tpu.dot_dimension_numbers<[1], [0], [0], [1], [0, 0, 1, 1], [], []>} : vector<8x32xf32>, vector<32x16xf32>, vector<8x16xf32> -> vector<8x16xf32>
    %c27_247 = arith.constant 27 : index
    %c0_248 = arith.constant 0 : index
    %c0_249 = arith.constant 0 : index
    %274 = vector.load %arg2[%c27_247, %c0_248, %c0_249] : memref<40x1x16xf32, #tpu.memory_space<vmem>>, vector<1x1x16xf32>
    %275 = vector.shape_cast %274 : vector<1x1x16xf32> to vector<1x16xf32>
    %276 = vector.broadcast %275 : vector<1x16xf32> to vector<8x16xf32>
    %277 = arith.addf %273, %276 : vector<8x16xf32>
    %c27_250 = arith.constant 27 : index
    %c0_251 = arith.constant 0 : index
    %c0_252 = arith.constant 0 : index
    %278 = vector.load %arg3[%c27_250, %c0_251, %c0_252] : memref<40x8x16xf32, #tpu.memory_space<vmem>>, vector<1x8x16xf32>
    %279 = vector.shape_cast %278 : vector<1x8x16xf32> to vector<8x16xf32>
    %280 = vector.shape_cast %277 : vector<8x16xf32> to vector<1x8x16xf32>
    tpu.vector_store %arg3[%c27_250, %c0_251, %c0_252], %280 {strides = array<i32>} : memref<40x8x16xf32, #tpu.memory_space<vmem>>, vector<1x8x16xf32>,
    %c28 = arith.constant 28 : index
    %c0_253 = arith.constant 0 : index
    %c0_254 = arith.constant 0 : index
    %281 = vector.load %arg1[%c28, %c0_253, %c0_254] : memref<40x32x16xf32, #tpu.memory_space<vmem>>, vector<1x32x16xf32>
    %282 = vector.shape_cast %281 : vector<1x32x16xf32> to vector<32x16xf32>
    %cst_255 = arith.constant dense<0.000000e+00> : vector<8x16xf32>
    %283 = tpu.matmul %0, %282, %cst_255 {dimension_numbers = #tpu.dot_dimension_numbers<[1], [0], [0], [1], [0, 0, 1, 1], [], []>} : vector<8x32xf32>, vector<32x16xf32>, vector<8x16xf32> -> vector<8x16xf32>
    %c28_256 = arith.constant 28 : index
    %c0_257 = arith.constant 0 : index
    %c0_258 = arith.constant 0 : index
    %284 = vector.load %arg2[%c28_256, %c0_257, %c0_258] : memref<40x1x16xf32, #tpu.memory_space<vmem>>, vector<1x1x16xf32>
    %285 = vector.shape_cast %284 : vector<1x1x16xf32> to vector<1x16xf32>
    %286 = vector.broadcast %285 : vector<1x16xf32> to vector<8x16xf32>
    %287 = arith.addf %283, %286 : vector<8x16xf32>
    %c28_259 = arith.constant 28 : index
    %c0_260 = arith.constant 0 : index
    %c0_261 = arith.constant 0 : index
    %288 = vector.load %arg3[%c28_259, %c0_260, %c0_261] : memref<40x8x16xf32, #tpu.memory_space<vmem>>, vector<1x8x16xf32>
    %289 = vector.shape_cast %288 : vector<1x8x16xf32> to vector<8x16xf32>
    %290 = vector.shape_cast %287 : vector<8x16xf32> to vector<1x8x16xf32>
    tpu.vector_store %arg3[%c28_259, %c0_260, %c0_261], %290 {strides = array<i32>} : memref<40x8x16xf32, #tpu.memory_space<vmem>>, vector<1x8x16xf32>,
    %c29 = arith.constant 29 : index
    %c0_262 = arith.constant 0 : index
    %c0_263 = arith.constant 0 : index
    %291 = vector.load %arg1[%c29, %c0_262, %c0_263] : memref<40x32x16xf32, #tpu.memory_space<vmem>>, vector<1x32x16xf32>
    %292 = vector.shape_cast %291 : vector<1x32x16xf32> to vector<32x16xf32>
    %cst_264 = arith.constant dense<0.000000e+00> : vector<8x16xf32>
    %293 = tpu.matmul %0, %292, %cst_264 {dimension_numbers = #tpu.dot_dimension_numbers<[1], [0], [0], [1], [0, 0, 1, 1], [], []>} : vector<8x32xf32>, vector<32x16xf32>, vector<8x16xf32> -> vector<8x16xf32>
    %c29_265 = arith.constant 29 : index
    %c0_266 = arith.constant 0 : index
    %c0_267 = arith.constant 0 : index
    %294 = vector.load %arg2[%c29_265, %c0_266, %c0_267] : memref<40x1x16xf32, #tpu.memory_space<vmem>>, vector<1x1x16xf32>
    %295 = vector.shape_cast %294 : vector<1x1x16xf32> to vector<1x16xf32>
    %296 = vector.broadcast %295 : vector<1x16xf32> to vector<8x16xf32>
    %297 = arith.addf %293, %296 : vector<8x16xf32>
    %c29_268 = arith.constant 29 : index
    %c0_269 = arith.constant 0 : index
    %c0_270 = arith.constant 0 : index
    %298 = vector.load %arg3[%c29_268, %c0_269, %c0_270] : memref<40x8x16xf32, #tpu.memory_space<vmem>>, vector<1x8x16xf32>
    %299 = vector.shape_cast %298 : vector<1x8x16xf32> to vector<8x16xf32>
    %300 = vector.shape_cast %297 : vector<8x16xf32> to vector<1x8x16xf32>
    tpu.vector_store %arg3[%c29_268, %c0_269, %c0_270], %300 {strides = array<i32>} : memref<40x8x16xf32, #tpu.memory_space<vmem>>, vector<1x8x16xf32>,
    %c30 = arith.constant 30 : index
    %c0_271 = arith.constant 0 : index
    %c0_272 = arith.constant 0 : index
    %301 = vector.load %arg1[%c30, %c0_271, %c0_272] : memref<40x32x16xf32, #tpu.memory_space<vmem>>, vector<1x32x16xf32>
    %302 = vector.shape_cast %301 : vector<1x32x16xf32> to vector<32x16xf32>
    %cst_273 = arith.constant dense<0.000000e+00> : vector<8x16xf32>
    %303 = tpu.matmul %0, %302, %cst_273 {dimension_numbers = #tpu.dot_dimension_numbers<[1], [0], [0], [1], [0, 0, 1, 1], [], []>} : vector<8x32xf32>, vector<32x16xf32>, vector<8x16xf32> -> vector<8x16xf32>
    %c30_274 = arith.constant 30 : index
    %c0_275 = arith.constant 0 : index
    %c0_276 = arith.constant 0 : index
    %304 = vector.load %arg2[%c30_274, %c0_275, %c0_276] : memref<40x1x16xf32, #tpu.memory_space<vmem>>, vector<1x1x16xf32>
    %305 = vector.shape_cast %304 : vector<1x1x16xf32> to vector<1x16xf32>
    %306 = vector.broadcast %305 : vector<1x16xf32> to vector<8x16xf32>
    %307 = arith.addf %303, %306 : vector<8x16xf32>
    %c30_277 = arith.constant 30 : index
    %c0_278 = arith.constant 0 : index
    %c0_279 = arith.constant 0 : index
    %308 = vector.load %arg3[%c30_277, %c0_278, %c0_279] : memref<40x8x16xf32, #tpu.memory_space<vmem>>, vector<1x8x16xf32>
    %309 = vector.shape_cast %308 : vector<1x8x16xf32> to vector<8x16xf32>
    %310 = vector.shape_cast %307 : vector<8x16xf32> to vector<1x8x16xf32>
    tpu.vector_store %arg3[%c30_277, %c0_278, %c0_279], %310 {strides = array<i32>} : memref<40x8x16xf32, #tpu.memory_space<vmem>>, vector<1x8x16xf32>,
    %c31 = arith.constant 31 : index
    %c0_280 = arith.constant 0 : index
    %c0_281 = arith.constant 0 : index
    %311 = vector.load %arg1[%c31, %c0_280, %c0_281] : memref<40x32x16xf32, #tpu.memory_space<vmem>>, vector<1x32x16xf32>
    %312 = vector.shape_cast %311 : vector<1x32x16xf32> to vector<32x16xf32>
    %cst_282 = arith.constant dense<0.000000e+00> : vector<8x16xf32>
    %313 = tpu.matmul %0, %312, %cst_282 {dimension_numbers = #tpu.dot_dimension_numbers<[1], [0], [0], [1], [0, 0, 1, 1], [], []>} : vector<8x32xf32>, vector<32x16xf32>, vector<8x16xf32> -> vector<8x16xf32>
    %c31_283 = arith.constant 31 : index
    %c0_284 = arith.constant 0 : index
    %c0_285 = arith.constant 0 : index
    %314 = vector.load %arg2[%c31_283, %c0_284, %c0_285] : memref<40x1x16xf32, #tpu.memory_space<vmem>>, vector<1x1x16xf32>
    %315 = vector.shape_cast %314 : vector<1x1x16xf32> to vector<1x16xf32>
    %316 = vector.broadcast %315 : vector<1x16xf32> to vector<8x16xf32>
    %317 = arith.addf %313, %316 : vector<8x16xf32>
    %c31_286 = arith.constant 31 : index
    %c0_287 = arith.constant 0 : index
    %c0_288 = arith.constant 0 : index
    %318 = vector.load %arg3[%c31_286, %c0_287, %c0_288] : memref<40x8x16xf32, #tpu.memory_space<vmem>>, vector<1x8x16xf32>
    %319 = vector.shape_cast %318 : vector<1x8x16xf32> to vector<8x16xf32>
    %320 = vector.shape_cast %317 : vector<8x16xf32> to vector<1x8x16xf32>
    tpu.vector_store %arg3[%c31_286, %c0_287, %c0_288], %320 {strides = array<i32>} : memref<40x8x16xf32, #tpu.memory_space<vmem>>, vector<1x8x16xf32>,
    %c32 = arith.constant 32 : index
    %c0_289 = arith.constant 0 : index
    %c0_290 = arith.constant 0 : index
    %321 = vector.load %arg1[%c32, %c0_289, %c0_290] : memref<40x32x16xf32, #tpu.memory_space<vmem>>, vector<1x32x16xf32>
    %322 = vector.shape_cast %321 : vector<1x32x16xf32> to vector<32x16xf32>
    %cst_291 = arith.constant dense<0.000000e+00> : vector<8x16xf32>
    %323 = tpu.matmul %0, %322, %cst_291 {dimension_numbers = #tpu.dot_dimension_numbers<[1], [0], [0], [1], [0, 0, 1, 1], [], []>} : vector<8x32xf32>, vector<32x16xf32>, vector<8x16xf32> -> vector<8x16xf32>
    %c32_292 = arith.constant 32 : index
    %c0_293 = arith.constant 0 : index
    %c0_294 = arith.constant 0 : index
    %324 = vector.load %arg2[%c32_292, %c0_293, %c0_294] : memref<40x1x16xf32, #tpu.memory_space<vmem>>, vector<1x1x16xf32>
    %325 = vector.shape_cast %324 : vector<1x1x16xf32> to vector<1x16xf32>
    %326 = vector.broadcast %325 : vector<1x16xf32> to vector<8x16xf32>
    %327 = arith.addf %323, %326 : vector<8x16xf32>
    %c32_295 = arith.constant 32 : index
    %c0_296 = arith.constant 0 : index
    %c0_297 = arith.constant 0 : index
    %328 = vector.load %arg3[%c32_295, %c0_296, %c0_297] : memref<40x8x16xf32, #tpu.memory_space<vmem>>, vector<1x8x16xf32>
    %329 = vector.shape_cast %328 : vector<1x8x16xf32> to vector<8x16xf32>
    %330 = vector.shape_cast %327 : vector<8x16xf32> to vector<1x8x16xf32>
    tpu.vector_store %arg3[%c32_295, %c0_296, %c0_297], %330 {strides = array<i32>} : memref<40x8x16xf32, #tpu.memory_space<vmem>>, vector<1x8x16xf32>,
    %c33 = arith.constant 33 : index
    %c0_298 = arith.constant 0 : index
    %c0_299 = arith.constant 0 : index
    %331 = vector.load %arg1[%c33, %c0_298, %c0_299] : memref<40x32x16xf32, #tpu.memory_space<vmem>>, vector<1x32x16xf32>
    %332 = vector.shape_cast %331 : vector<1x32x16xf32> to vector<32x16xf32>
    %cst_300 = arith.constant dense<0.000000e+00> : vector<8x16xf32>
    %333 = tpu.matmul %0, %332, %cst_300 {dimension_numbers = #tpu.dot_dimension_numbers<[1], [0], [0], [1], [0, 0, 1, 1], [], []>} : vector<8x32xf32>, vector<32x16xf32>, vector<8x16xf32> -> vector<8x16xf32>
    %c33_301 = arith.constant 33 : index
    %c0_302 = arith.constant 0 : index
    %c0_303 = arith.constant 0 : index
    %334 = vector.load %arg2[%c33_301, %c0_302, %c0_303] : memref<40x1x16xf32, #tpu.memory_space<vmem>>, vector<1x1x16xf32>
    %335 = vector.shape_cast %334 : vector<1x1x16xf32> to vector<1x16xf32>
    %336 = vector.broadcast %335 : vector<1x16xf32> to vector<8x16xf32>
    %337 = arith.addf %333, %336 : vector<8x16xf32>
    %c33_304 = arith.constant 33 : index
    %c0_305 = arith.constant 0 : index
    %c0_306 = arith.constant 0 : index
    %338 = vector.load %arg3[%c33_304, %c0_305, %c0_306] : memref<40x8x16xf32, #tpu.memory_space<vmem>>, vector<1x8x16xf32>
    %339 = vector.shape_cast %338 : vector<1x8x16xf32> to vector<8x16xf32>
    %340 = vector.shape_cast %337 : vector<8x16xf32> to vector<1x8x16xf32>
    tpu.vector_store %arg3[%c33_304, %c0_305, %c0_306], %340 {strides = array<i32>} : memref<40x8x16xf32, #tpu.memory_space<vmem>>, vector<1x8x16xf32>,
    %c34 = arith.constant 34 : index
    %c0_307 = arith.constant 0 : index
    %c0_308 = arith.constant 0 : index
    %341 = vector.load %arg1[%c34, %c0_307, %c0_308] : memref<40x32x16xf32, #tpu.memory_space<vmem>>, vector<1x32x16xf32>
    %342 = vector.shape_cast %341 : vector<1x32x16xf32> to vector<32x16xf32>
    %cst_309 = arith.constant dense<0.000000e+00> : vector<8x16xf32>
    %343 = tpu.matmul %0, %342, %cst_309 {dimension_numbers = #tpu.dot_dimension_numbers<[1], [0], [0], [1], [0, 0, 1, 1], [], []>} : vector<8x32xf32>, vector<32x16xf32>, vector<8x16xf32> -> vector<8x16xf32>
    %c34_310 = arith.constant 34 : index
    %c0_311 = arith.constant 0 : index
    %c0_312 = arith.constant 0 : index
    %344 = vector.load %arg2[%c34_310, %c0_311, %c0_312] : memref<40x1x16xf32, #tpu.memory_space<vmem>>, vector<1x1x16xf32>
    %345 = vector.shape_cast %344 : vector<1x1x16xf32> to vector<1x16xf32>
    %346 = vector.broadcast %345 : vector<1x16xf32> to vector<8x16xf32>
    %347 = arith.addf %343, %346 : vector<8x16xf32>
    %c34_313 = arith.constant 34 : index
    %c0_314 = arith.constant 0 : index
    %c0_315 = arith.constant 0 : index
    %348 = vector.load %arg3[%c34_313, %c0_314, %c0_315] : memref<40x8x16xf32, #tpu.memory_space<vmem>>, vector<1x8x16xf32>
    %349 = vector.shape_cast %348 : vector<1x8x16xf32> to vector<8x16xf32>
    %350 = vector.shape_cast %347 : vector<8x16xf32> to vector<1x8x16xf32>
    tpu.vector_store %arg3[%c34_313, %c0_314, %c0_315], %350 {strides = array<i32>} : memref<40x8x16xf32, #tpu.memory_space<vmem>>, vector<1x8x16xf32>,
    %c35 = arith.constant 35 : index
    %c0_316 = arith.constant 0 : index
    %c0_317 = arith.constant 0 : index
    %351 = vector.load %arg1[%c35, %c0_316, %c0_317] : memref<40x32x16xf32, #tpu.memory_space<vmem>>, vector<1x32x16xf32>
    %352 = vector.shape_cast %351 : vector<1x32x16xf32> to vector<32x16xf32>
    %cst_318 = arith.constant dense<0.000000e+00> : vector<8x16xf32>
    %353 = tpu.matmul %0, %352, %cst_318 {dimension_numbers = #tpu.dot_dimension_numbers<[1], [0], [0], [1], [0, 0, 1, 1], [], []>} : vector<8x32xf32>, vector<32x16xf32>, vector<8x16xf32> -> vector<8x16xf32>
    %c35_319 = arith.constant 35 : index
    %c0_320 = arith.constant 0 : index
    %c0_321 = arith.constant 0 : index
    %354 = vector.load %arg2[%c35_319, %c0_320, %c0_321] : memref<40x1x16xf32, #tpu.memory_space<vmem>>, vector<1x1x16xf32>
    %355 = vector.shape_cast %354 : vector<1x1x16xf32> to vector<1x16xf32>
    %356 = vector.broadcast %355 : vector<1x16xf32> to vector<8x16xf32>
    %357 = arith.addf %353, %356 : vector<8x16xf32>
    %c35_322 = arith.constant 35 : index
    %c0_323 = arith.constant 0 : index
    %c0_324 = arith.constant 0 : index
    %358 = vector.load %arg3[%c35_322, %c0_323, %c0_324] : memref<40x8x16xf32, #tpu.memory_space<vmem>>, vector<1x8x16xf32>
    %359 = vector.shape_cast %358 : vector<1x8x16xf32> to vector<8x16xf32>
    %360 = vector.shape_cast %357 : vector<8x16xf32> to vector<1x8x16xf32>
    tpu.vector_store %arg3[%c35_322, %c0_323, %c0_324], %360 {strides = array<i32>} : memref<40x8x16xf32, #tpu.memory_space<vmem>>, vector<1x8x16xf32>,
    %c36 = arith.constant 36 : index
    %c0_325 = arith.constant 0 : index
    %c0_326 = arith.constant 0 : index
    %361 = vector.load %arg1[%c36, %c0_325, %c0_326] : memref<40x32x16xf32, #tpu.memory_space<vmem>>, vector<1x32x16xf32>
    %362 = vector.shape_cast %361 : vector<1x32x16xf32> to vector<32x16xf32>
    %cst_327 = arith.constant dense<0.000000e+00> : vector<8x16xf32>
    %363 = tpu.matmul %0, %362, %cst_327 {dimension_numbers = #tpu.dot_dimension_numbers<[1], [0], [0], [1], [0, 0, 1, 1], [], []>} : vector<8x32xf32>, vector<32x16xf32>, vector<8x16xf32> -> vector<8x16xf32>
    %c36_328 = arith.constant 36 : index
    %c0_329 = arith.constant 0 : index
    %c0_330 = arith.constant 0 : index
    %364 = vector.load %arg2[%c36_328, %c0_329, %c0_330] : memref<40x1x16xf32, #tpu.memory_space<vmem>>, vector<1x1x16xf32>
    %365 = vector.shape_cast %364 : vector<1x1x16xf32> to vector<1x16xf32>
    %366 = vector.broadcast %365 : vector<1x16xf32> to vector<8x16xf32>
    %367 = arith.addf %363, %366 : vector<8x16xf32>
    %c36_331 = arith.constant 36 : index
    %c0_332 = arith.constant 0 : index
    %c0_333 = arith.constant 0 : index
    %368 = vector.load %arg3[%c36_331, %c0_332, %c0_333] : memref<40x8x16xf32, #tpu.memory_space<vmem>>, vector<1x8x16xf32>
    %369 = vector.shape_cast %368 : vector<1x8x16xf32> to vector<8x16xf32>
    %370 = vector.shape_cast %367 : vector<8x16xf32> to vector<1x8x16xf32>
    tpu.vector_store %arg3[%c36_331, %c0_332, %c0_333], %370 {strides = array<i32>} : memref<40x8x16xf32, #tpu.memory_space<vmem>>, vector<1x8x16xf32>,
    %c37 = arith.constant 37 : index
    %c0_334 = arith.constant 0 : index
    %c0_335 = arith.constant 0 : index
    %371 = vector.load %arg1[%c37, %c0_334, %c0_335] : memref<40x32x16xf32, #tpu.memory_space<vmem>>, vector<1x32x16xf32>
    %372 = vector.shape_cast %371 : vector<1x32x16xf32> to vector<32x16xf32>
    %cst_336 = arith.constant dense<0.000000e+00> : vector<8x16xf32>
    %373 = tpu.matmul %0, %372, %cst_336 {dimension_numbers = #tpu.dot_dimension_numbers<[1], [0], [0], [1], [0, 0, 1, 1], [], []>} : vector<8x32xf32>, vector<32x16xf32>, vector<8x16xf32> -> vector<8x16xf32>
    %c37_337 = arith.constant 37 : index
    %c0_338 = arith.constant 0 : index
    %c0_339 = arith.constant 0 : index
    %374 = vector.load %arg2[%c37_337, %c0_338, %c0_339] : memref<40x1x16xf32, #tpu.memory_space<vmem>>, vector<1x1x16xf32>
    %375 = vector.shape_cast %374 : vector<1x1x16xf32> to vector<1x16xf32>
    %376 = vector.broadcast %375 : vector<1x16xf32> to vector<8x16xf32>
    %377 = arith.addf %373, %376 : vector<8x16xf32>
    %c37_340 = arith.constant 37 : index
    %c0_341 = arith.constant 0 : index
    %c0_342 = arith.constant 0 : index
    %378 = vector.load %arg3[%c37_340, %c0_341, %c0_342] : memref<40x8x16xf32, #tpu.memory_space<vmem>>, vector<1x8x16xf32>
    %379 = vector.shape_cast %378 : vector<1x8x16xf32> to vector<8x16xf32>
    %380 = vector.shape_cast %377 : vector<8x16xf32> to vector<1x8x16xf32>
    tpu.vector_store %arg3[%c37_340, %c0_341, %c0_342], %380 {strides = array<i32>} : memref<40x8x16xf32, #tpu.memory_space<vmem>>, vector<1x8x16xf32>,
    %c38 = arith.constant 38 : index
    %c0_343 = arith.constant 0 : index
    %c0_344 = arith.constant 0 : index
    %381 = vector.load %arg1[%c38, %c0_343, %c0_344] : memref<40x32x16xf32, #tpu.memory_space<vmem>>, vector<1x32x16xf32>
    %382 = vector.shape_cast %381 : vector<1x32x16xf32> to vector<32x16xf32>
    %cst_345 = arith.constant dense<0.000000e+00> : vector<8x16xf32>
    %383 = tpu.matmul %0, %382, %cst_345 {dimension_numbers = #tpu.dot_dimension_numbers<[1], [0], [0], [1], [0, 0, 1, 1], [], []>} : vector<8x32xf32>, vector<32x16xf32>, vector<8x16xf32> -> vector<8x16xf32>
    %c38_346 = arith.constant 38 : index
    %c0_347 = arith.constant 0 : index
    %c0_348 = arith.constant 0 : index
    %384 = vector.load %arg2[%c38_346, %c0_347, %c0_348] : memref<40x1x16xf32, #tpu.memory_space<vmem>>, vector<1x1x16xf32>
    %385 = vector.shape_cast %384 : vector<1x1x16xf32> to vector<1x16xf32>
    %386 = vector.broadcast %385 : vector<1x16xf32> to vector<8x16xf32>
    %387 = arith.addf %383, %386 : vector<8x16xf32>
    %c38_349 = arith.constant 38 : index
    %c0_350 = arith.constant 0 : index
    %c0_351 = arith.constant 0 : index
    %388 = vector.load %arg3[%c38_349, %c0_350, %c0_351] : memref<40x8x16xf32, #tpu.memory_space<vmem>>, vector<1x8x16xf32>
    %389 = vector.shape_cast %388 : vector<1x8x16xf32> to vector<8x16xf32>
    %390 = vector.shape_cast %387 : vector<8x16xf32> to vector<1x8x16xf32>
    tpu.vector_store %arg3[%c38_349, %c0_350, %c0_351], %390 {strides = array<i32>} : memref<40x8x16xf32, #tpu.memory_space<vmem>>, vector<1x8x16xf32>,
    %c39 = arith.constant 39 : index
    %c0_352 = arith.constant 0 : index
    %c0_353 = arith.constant 0 : index
    %391 = vector.load %arg1[%c39, %c0_352, %c0_353] : memref<40x32x16xf32, #tpu.memory_space<vmem>>, vector<1x32x16xf32>
    %392 = vector.shape_cast %391 : vector<1x32x16xf32> to vector<32x16xf32>
    %cst_354 = arith.constant dense<0.000000e+00> : vector<8x16xf32>
    %393 = tpu.matmul %0, %392, %cst_354 {dimension_numbers = #tpu.dot_dimension_numbers<[1], [0], [0], [1], [0, 0, 1, 1], [], []>} : vector<8x32xf32>, vector<32x16xf32>, vector<8x16xf32> -> vector<8x16xf32>
    %c39_355 = arith.constant 39 : index
    %c0_356 = arith.constant 0 : index
    %c0_357 = arith.constant 0 : index
    %394 = vector.load %arg2[%c39_355, %c0_356, %c0_357] : memref<40x1x16xf32, #tpu.memory_space<vmem>>, vector<1x1x16xf32>
    %395 = vector.shape_cast %394 : vector<1x1x16xf32> to vector<1x16xf32>
    %396 = vector.broadcast %395 : vector<1x16xf32> to vector<8x16xf32>
    %397 = arith.addf %393, %396 : vector<8x16xf32>
    %c39_358 = arith.constant 39 : index
    %c0_359 = arith.constant 0 : index
    %c0_360 = arith.constant 0 : index
    %398 = vector.load %arg3[%c39_358, %c0_359, %c0_360] : memref<40x8x16xf32, #tpu.memory_space<vmem>>, vector<1x8x16xf32>
    %399 = vector.shape_cast %398 : vector<1x8x16xf32> to vector<8x16xf32>
    %400 = vector.shape_cast %397 : vector<8x16xf32> to vector<1x8x16xf32>
    tpu.vector_store %arg3[%c39_358, %c0_359, %c0_360], %400 {strides = array<i32>} : memref<40x8x16xf32, #tpu.memory_space<vmem>>, vector<1x8x16xf32>,
    return
  }
}

</mosaic_0001>

<llo_original>
// kernel: list2model_forward.1
$region0: #{list2model_forward.1}
  #allocation0 [shape = 'u32[]', space=smem, size = 0x4, offset = 0x4, fixed_abs, tag = 'smem constant byte address 0x4 - core index']
  #allocation1 [shape = 'u32[144,128]{1,0:T(1,128)}', space=vmem, size = 0x12000, scoped, tag = 'internal scratch']
  %s0 = inlined_call_operand.vmem [shape: f32[8,32], index: 0, kind: input, shape index: {}]
  %s1 = inlined_call_operand.vmem [shape: f32[40,32,16], index: 1, kind: input, shape index: {}]
  %s2 = inlined_call_operand.vmem [shape: f32[40,1,16], index: 2, kind: input, shape index: {}]
  %s3 = inlined_call_operand.vmem [shape: f32[40,8,16], index: 3, kind: output, shape index: {}]
  %s4 = sld [smem:[#allocation0]]
  $region22: #{list2model_forward.1} parent=0
    _
  %s6 = ssub.s32 1, %s4
  %s7 = scalar_select 0, %s6, %s4
  // Predicated region
  $region2: #{list2model_forward.1} parent=0 // pred_check
    _
  $region3: #{list2model_forward.1} parent=0 // pred_check_branch
    %9 = sbr.rel (0) target = $region5
  $region4: #{list2model_forward.1} parent=0 // pred_region
    _
  $region5: #{list2model_forward.1} parent=0 // pred_fallthru
    _
  // Predicated region
  $region6: #{list2model_forward.1} parent=0 // pred_check
    _
  $region7: #{list2model_forward.1} parent=0 // pred_check_branch
    %11 = sbr.rel (0) target = $region9
  $region8: #{list2model_forward.1} parent=0 // pred_region
    _
  $region9: #{list2model_forward.1} parent=0 // pred_fallthru
    _
  // Predicated region
  $region10: #{list2model_forward.1} parent=0 // pred_check
    _
  $region11: #{list2model_forward.1} parent=0 // pred_check_branch
    %13 = sbr.rel (0) target = $region13
  $region12: #{list2model_forward.1} parent=0 // pred_region
    _
  $region13: #{list2model_forward.1} parent=0 // pred_fallthru
    _
  %v14 = vld [vmem:[%s0] sm:$0xff]
  %v15 = vld [vmem:[%s1] sm:$0xff]
  %v16 = vld [vmem:[%s1 + $0x8] sm:$0xff]
  %v17 = vld [vmem:[%s1 + $0x10] sm:$0xff]
  %v18 = vld [vmem:[%s1 + $0x18] sm:$0xff]
  %v19 = vld [vmem:[%s2] sm:$0x1]
  %v21 = vlaneseq
  %v22 = vshrl.u32 %v21, 7
  %v23 = vsub.s32 0, %v22
  %v24 = vrot.slane %v19, %v23
  %vm26 = vcmask 261120
  %v28 = vsel %vm26, %v14, 0
  %30 = vmatprep.subr.mxu0 0.0
  %31 = vmatpush1.msra.mxu0 %v15
  %32 = vmatprep.subr.mxu0 0.0
  %33 = vmatpush1.msra.mxu0 %v16
  %34 = vmatprep.subr.mxu0 0.0
  %35 = vmatpush1.msra.mxu0 %v17
  %36 = vmatprep.subr.mxu0 0.0
  %37 = vmatpush1.msra.mxu0 %v18
  %38 = vmatprep.subr.mxu0 0.0
  %39 = vmatpush1.msra.mxu0 0.0
  %40 = vmatprep.subr.mxu0 0.0
  %41 = vmatpush1.msra.mxu0 0.0
  %42 = vmatprep.subr.mxu0 0.0
  %43 = vmatpush1.msra.mxu0 0.0
  %44 = vmatprep.subr.mxu0 0.0
  %45 = vmatpush1.msra.mxu0 0.0
  %46 = vmatprep.subr.mxu0 0.0
  %47 = vmatpush1.msra.mxu0 0.0
  %48 = vmatprep.subr.mxu0 0.0
  %49 = vmatpush1.msra.mxu0 0.0
  %50 = vmatprep.subr.mxu0 0.0
  %51 = vmatpush1.msra.mxu0 0.0
  %52 = vmatprep.subr.mxu0 0.0
  %53 = vmatpush1.msra.mxu0 0.0
  %54 = vmatprep.subr.mxu0 0.0
  %55 = vmatpush1.msra.mxu0 0.0
  %56 = vmatprep.subr.mxu0 0.0
  %57 = vmatpush1.msra.mxu0 0.0
  %58 = vmatprep.subr.mxu0 0.0
  %59 = vmatpush1.msra.mxu0 0.0
  %60 = vmatprep.subr.mxu0 0.0
  %61 = vmatpush1.msra.mxu0 0.0
  %62 = vmatprep.subr.mxu0 0.0
  %63 = vmatpush1.msra.mxu0 0.0
  %64 = vmatprep.subr.mxu0 0.0
  %65 = vmatpush1.msra.mxu0 0.0
  %66 = vmatprep.subr.mxu0 0.0
  %67 = vmatpush1.msra.mxu0 0.0
  %68 = vmatprep.subr.mxu0 0.0
  %69 = vmatpush1.msra.mxu0 0.0
  %70 = vmatprep.subr.mxu0 0.0
  %71 = vmatpush1.msra.mxu0 0.0
  %72 = vmatprep.subr.mxu0 0.0
  %73 = vmatpush1.msra.mxu0 0.0
  %74 = vmatprep.subr.mxu0 0.0
  %75 = vmatpush1.msra.mxu0 0.0
  %76 = vmatprep.subr.mxu0 0.0
  %77 = vmatpush1.msra.mxu0 0.0
  %78 = vmatprep.subr.mxu0 0.0
  %79 = vmatpush1.msra.mxu0 0.0
  %80 = vmatprep.subr.mxu0 0.0
  %81 = vmatpush1.msra.mxu0 0.0
  %82 = vmatprep.subr.mxu0 0.0
  %83 = vmatpush1.msra.mxu0 0.0
  %84 = vmatprep.subr.mxu0 0.0
  %85 = vmatpush1.msra.mxu0 0.0
  %86 = vmatprep.subr.mxu0 0.0
  %87 = vmatpush1.msra.mxu0 0.0
  %88 = vmatprep.subr.mxu0 0.0
  %89 = vmatpush1.msra.mxu0 0.0
  %90 = vmatprep.subr.mxu0 0.0
  %91 = vmatpush1.msra.mxu0 0.0
  %92 = vmatprep.subr.mxu0 0.0
  %93 = vmatpush1.msra.mxu0 0.0
  %94 = vmatprep.mubr.f32.mxu0 0.0
  %95 = vmatmul.mubr.f32.gmra.mrb[0].mxu0 %v28
  %v96 = vpop.f32.mrb[0].mxu0
  %v97 = vadd.f32 %v24, %v96
  %v98 = vpop.f32.mrb[0].mxu0
  %99 = vdwg.mxu0
  %vm100 = vcmask 130048
  %101 = vst.msk [vmem:[%s3] sm:$0xff] %vm100, %v97
  %s102 = scalar_lea.vmem %s1, 32
  %v103 = vld [vmem:[%s102] sm:$0xff]
  %v104 = vld [vmem:[%s102 + $0x8] sm:$0xff]
  %v105 = vld [vmem:[%s102 + $0x10] sm:$0xff]
  %v106 = vld [vmem:[%s102 + $0x18] sm:$0xff]
  %s107 = scalar_lea.vmem %s2, 1
  %v108 = vld [vmem:[%s107] sm:$0x1]
  %v110 = vlaneseq
  %v111 = vshrl.u32 %v110, 7
  %v112 = vsub.s32 0, %v111
  %v113 = vrot.slane %v108, %v112
  %115 = vmatprep.subr.mxu0 0.0
  %116 = vmatpush1.msra.mxu0 %v103
  %117 = vmatprep.subr.mxu0 0.0
  %118 = vmatpush1.msra.mxu0 %v104
  %119 = vmatprep.subr.mxu0 0.0
  %120 = vmatpush1.msra.mxu0 %v105
  %121 = vmatprep.subr.mxu0 0.0
  %122 = vmatpush1.msra.mxu0 %v106
  %123 = vmatprep.subr.mxu0 0.0
  %124 = vmatpush1.msra.mxu0 0.0
  %125 = vmatprep.subr.mxu0 0.0
  %126 = vmatpush1.msra.mxu0 0.0
  %127 = vmatprep.subr.mxu0 0.0
  %128 = vmatpush1.msra.mxu0 0.0
  %129 = vmatprep.subr.mxu0 0.0
  %130 = vmatpush1.msra.mxu0 0.0
  %131 = vmatprep.subr.mxu0 0.0
  %132 = vmatpush1.msra.mxu0 0.0
  %133 = vmatprep.subr.mxu0 0.0
  %134 = vmatpush1.msra.mxu0 0.0
  %135 = vmatprep.subr.mxu0 0.0
  %136 = vmatpush1.msra.mxu0 0.0
  %137 = vmatprep.subr.mxu0 0.0
  %138 = vmatpush1.msra.mxu0 0.0
  %139 = vmatprep.subr.mxu0 0.0
  %140 = vmatpush1.msra.mxu0 0.0
  %141 = vmatprep.subr.mxu0 0.0
  %142 = vmatpush1.msra.mxu0 0.0
  %143 = vmatprep.subr.mxu0 0.0
  %144 = vmatpush1.msra.mxu0 0.0
  %145 = vmatprep.subr.mxu0 0.0
  %146 = vmatpush1.msra.mxu0 0.0
  %147 = vmatprep.subr.mxu0 0.0
  %148 = vmatpush1.msra.mxu0 0.0
  %149 = vmatprep.subr.mxu0 0.0
  %150 = vmatpush1.msra.mxu0 0.0
  %151 = vmatprep.subr.mxu0 0.0
  %152 = vmatpush1.msra.mxu0 0.0
  %153 = vmatprep.subr.mxu0 0.0
  %154 = vmatpush1.msra.mxu0 0.0
  %155 = vmatprep.subr.mxu0 0.0
  %156 = vmatpush1.msra.mxu0 0.0
  %157 = vmatprep.subr.mxu0 0.0
  %158 = vmatpush1.msra.mxu0 0.0
  %159 = vmatprep.subr.mxu0 0.0
  %160 = vmatpush1.msra.mxu0 0.0
  %161 = vmatprep.subr.mxu0 0.0
  %162 = vmatpush1.msra.mxu0 0.0
  %163 = vmatprep.subr.mxu0 0.0
  %164 = vmatpush1.msra.mxu0 0.0
  %165 = vmatprep.subr.mxu0 0.0
  %166 = vmatpush1.msra.mxu0 0.0
  %167 = vmatprep.subr.mxu0 0.0
  %168 = vmatpush1.msra.mxu0 0.0
  %169 = vmatprep.subr.mxu0 0.0
  %170 = vmatpush1.msra.mxu0 0.0
  %171 = vmatprep.subr.mxu0 0.0
  %172 = vmatpush1.msra.mxu0 0.0
  %173 = vmatprep.subr.mxu0 0.0
  %174 = vmatpush1.msra.mxu0 0.0
  %175 = vmatprep.subr.mxu0 0.0
  %176 = vmatpush1.msra.mxu0 0.0
  %177 = vmatprep.subr.mxu0 0.0
  %178 = vmatpush1.msra.mxu0 0.0
  %179 = vmatprep.mubr.f32.mxu0 0.0
  %180 = vmatmul.mubr.f32.gmra.mrb[0].mxu0 %v28
  %v181 = vpop.f32.mrb[0].mxu0
  %v182 = vadd.f32 %v113, %v181
  %v183 = vpop.f32.mrb[0].mxu0
  %184 = vdwg.mxu0
  %s185 = scalar_lea.vmem %s3, 8
  %186 = vst.msk [vmem:[%s185] sm:$0xff] %vm100, %v182
  %s187 = scalar_lea.vmem %s1, 64
  %v188 = vld [vmem:[%s187] sm:$0xff]
  %v189 = vld [vmem:[%s187 + $0x8] sm:$0xff]
  %v190 = vld [vmem:[%s187 + $0x10] sm:$0xff]
  %v191 = vld [vmem:[%s187 + $0x18] sm:$0xff]
  %s192 = scalar_lea.vmem %s2, 2
  %v193 = vld [vmem:[%s192] sm:$0x1]
  %v195 = vlaneseq
  %v196 = vshrl.u32 %v195, 7
  %v197 = vsub.s32 0, %v196
  %v198 = vrot.slane %v193, %v197
  %200 = vmatprep.subr.mxu0 0.0
  %201 = vmatpush1.msra.mxu0 %v188
  %202 = vmatprep.subr.mxu0 0.0
  %203 = vmatpush1.msra.mxu0 %v189
  %204 = vmatprep.subr.mxu0 0.0
  %205 = vmatpush1.msra.mxu0 %v190
  %206 = vmatprep.subr.mxu0 0.0
  %207 = vmatpush1.msra.mxu0 %v191
  %208 = vmatprep.subr.mxu0 0.0
  %209 = vmatpush1.msra.mxu0 0.0
  %210 = vmatprep.subr.mxu0 0.0
  %211 = vmatpush1.msra.mxu0 0.0
  %212 = vmatprep.subr.mxu0 0.0
  %213 = vmatpush1.msra.mxu0 0.0
  %214 = vmatprep.subr.mxu0 0.0
  %215 = vmatpush1.msra.mxu0 0.0
  %216 = vmatprep.subr.mxu0 0.0
  %217 = vmatpush1.msra.mxu0 0.0
  %218 = vmatprep.subr.mxu0 0.0
  %219 = vmatpush1.msra.mxu0 0.0
  %220 = vmatprep.subr.mxu0 0.0
  %221 = vmatpush1.msra.mxu0 0.0
  %222 = vmatprep.subr.mxu0 0.0
  %223 = vmatpush1.msra.mxu0 0.0
  %224 = vmatprep.subr.mxu0 0.0
  %225 = vmatpush1.msra.mxu0 0.0
  %226 = vmatprep.subr.mxu0 0.0
  %227 = vmatpush1.msra.mxu0 0.0
  %228 = vmatprep.subr.mxu0 0.0
  %229 = vmatpush1.msra.mxu0 0.0
  %230 = vmatprep.subr.mxu0 0.0
  %231 = vmatpush1.msra.mxu0 0.0
  %232 = vmatprep.subr.mxu0 0.0
  %233 = vmatpush1.msra.mxu0 0.0
  %234 = vmatprep.subr.mxu0 0.0
  %235 = vmatpush1.msra.mxu0 0.0
  %236 = vmatprep.subr.mxu0 0.0
  %237 = vmatpush1.msra.mxu0 0.0
  %238 = vmatprep.subr.mxu0 0.0
  %239 = vmatpush1.msra.mxu0 0.0
  %240 = vmatprep.subr.mxu0 0.0
  %241 = vmatpush1.msra.mxu0 0.0
  %242 = vmatprep.subr.mxu0 0.0
  %243 = vmatpush1.msra.mxu0 0.0
  %244 = vmatprep.subr.mxu0 0.0
  %245 = vmatpush1.msra.mxu0 0.0
  %246 = vmatprep.subr.mxu0 0.0
  %247 = vmatpush1.msra.mxu0 0.0
  %248 = vmatprep.subr.mxu0 0.0
  %249 = vmatpush1.msra.mxu0 0.0
  %250 = vmatprep.subr.mxu0 0.0
  %251 = vmatpush1.msra.mxu0 0.0
  %252 = vmatprep.subr.mxu0 0.0
  %253 = vmatpush1.msra.mxu0 0.0
  %254 = vmatprep.subr.mxu0 0.0
  %255 = vmatpush1.msra.mxu0 0.0
  %256 = vmatprep.subr.mxu0 0.0
  %257 = vmatpush1.msra.mxu0 0.0
  %258 = vmatprep.subr.mxu0 0.0
  %259 = vmatpush1.msra.mxu0 0.0
  %260 = vmatprep.subr.mxu0 0.0
  %261 = vmatpush1.msra.mxu0 0.0
  %262 = vmatprep.subr.mxu0 0.0
  %263 = vmatpush1.msra.mxu0 0.0
  %264 = vmatprep.mubr.f32.mxu0 0.0
  %265 = vmatmul.mubr.f32.gmra.mrb[0].mxu0 %v28
  %v266 = vpop.f32.mrb[0].mxu0
  %v267 = vadd.f32 %v198, %v266
  %v268 = vpop.f32.mrb[0].mxu0
  %269 = vdwg.mxu0
  %s270 = scalar_lea.vmem %s3, 16
  %271 = vst.msk [vmem:[%s270] sm:$0xff] %vm100, %v267
  %s272 = scalar_lea.vmem %s1, 96
  %v273 = vld [vmem:[%s272] sm:$0xff]
  %v274 = vld [vmem:[%s272 + $0x8] sm:$0xff]
  %v275 = vld [vmem:[%s272 + $0x10] sm:$0xff]
  %v276 = vld [vmem:[%s272 + $0x18] sm:$0xff]
  %s277 = scalar_lea.vmem %s2, 3
  %v278 = vld [vmem:[%s277] sm:$0x1]
  %v280 = vlaneseq
  %v281 = vshrl.u32 %v280, 7
  %v282 = vsub.s32 0, %v281
  %v283 = vrot.slane %v278, %v282
  %285 = vmatprep.subr.mxu0 0.0
  %286 = vmatpush1.msra.mxu0 %v273
  %287 = vmatprep.subr.mxu0 0.0
  %288 = vmatpush1.msra.mxu0 %v274
  %289 = vmatprep.subr.mxu0 0.0
  %290 = vmatpush1.msra.mxu0 %v275
  %291 = vmatprep.subr.mxu0 0.0
  %292 = vmatpush1.msra.mxu0 %v276
  %293 = vmatprep.subr.mxu0 0.0
  %294 = vmatpush1.msra.mxu0 0.0
  %295 = vmatprep.subr.mxu0 0.0
  %296 = vmatpush1.msra.mxu0 0.0
  %297 = vmatprep.subr.mxu0 0.0
  %298 = vmatpush1.msra.mxu0 0.0
  %299 = vmatprep.subr.mxu0 0.0
  %300 = vmatpush1.msra.mxu0 0.0
  %301 = vmatprep.subr.mxu0 0.0
  %302 = vmatpush1.msra.mxu0 0.0
  %303 = vmatprep.subr.mxu0 0.0
  %304 = vmatpush1.msra.mxu0 0.0
  %305 = vmatprep.subr.mxu0 0.0
  %306 = vmatpush1.msra.mxu0 0.0
  %307 = vmatprep.subr.mxu0 0.0
  %308 = vmatpush1.msra.mxu0 0.0
  %309 = vmatprep.subr.mxu0 0.0
  %310 = vmatpush1.msra.mxu0 0.0
  %311 = vmatprep.subr.mxu0 0.0
  %312 = vmatpush1.msra.mxu0 0.0
  %313 = vmatprep.subr.mxu0 0.0
  %314 = vmatpush1.msra.mxu0 0.0
  %315 = vmatprep.subr.mxu0 0.0
  %316 = vmatpush1.msra.mxu0 0.0
  %317 = vmatprep.subr.mxu0 0.0
  %318 = vmatpush1.msra.mxu0 0.0
  %319 = vmatprep.subr.mxu0 0.0
  %320 = vmatpush1.msra.mxu0 0.0
  %321 = vmatprep.subr.mxu0 0.0
  %322 = vmatpush1.msra.mxu0 0.0
  %323 = vmatprep.subr.mxu0 0.0
  %324 = vmatpush1.msra.mxu0 0.0
  %325 = vmatprep.subr.mxu0 0.0
  %326 = vmatpush1.msra.mxu0 0.0
  %327 = vmatprep.subr.mxu0 0.0
  %328 = vmatpush1.msra.mxu0 0.0
  %329 = vmatprep.subr.mxu0 0.0
  %330 = vmatpush1.msra.mxu0 0.0
  %331 = vmatprep.subr.mxu0 0.0
  %332 = vmatpush1.msra.mxu0 0.0
  %333 = vmatprep.subr.mxu0 0.0
  %334 = vmatpush1.msra.mxu0 0.0
  %335 = vmatprep.subr.mxu0 0.0
  %336 = vmatpush1.msra.mxu0 0.0
  %337 = vmatprep.subr.mxu0 0.0
  %338 = vmatpush1.msra.mxu0 0.0
  %339 = vmatprep.subr.mxu0 0.0
  %340 = vmatpush1.msra.mxu0 0.0
  %341 = vmatprep.subr.mxu0 0.0
  %342 = vmatpush1.msra.mxu0 0.0
  %343 = vmatprep.subr.mxu0 0.0
  %344 = vmatpush1.msra.mxu0 0.0
  %345 = vmatprep.subr.mxu0 0.0
  %346 = vmatpush1.msra.mxu0 0.0
  %347 = vmatprep.subr.mxu0 0.0
  %348 = vmatpush1.msra.mxu0 0.0
  %349 = vmatprep.mubr.f32.mxu0 0.0
  %350 = vmatmul.mubr.f32.gmra.mrb[0].mxu0 %v28
  %v351 = vpop.f32.mrb[0].mxu0
  %v352 = vadd.f32 %v283, %v351
  %v353 = vpop.f32.mrb[0].mxu0
  %354 = vdwg.mxu0
  %s355 = scalar_lea.vmem %s3, 24
  %356 = vst.msk [vmem:[%s355] sm:$0xff] %vm100, %v352
  %s357 = scalar_lea.vmem %s1, 128
  %v358 = vld [vmem:[%s357] sm:$0xff]
  %v359 = vld [vmem:[%s357 + $0x8] sm:$0xff]
  %v360 = vld [vmem:[%s357 + $0x10] sm:$0xff]
  %v361 = vld [vmem:[%s357 + $0x18] sm:$0xff]
  %s362 = scalar_lea.vmem %s2, 4
  %v363 = vld [vmem:[%s362] sm:$0x1]
  %v365 = vlaneseq
  %v366 = vshrl.u32 %v365, 7
  %v367 = vsub.s32 0, %v366
  %v368 = vrot.slane %v363, %v367
  %370 = vmatprep.subr.mxu0 0.0
  %371 = vmatpush1.msra.mxu0 %v358
  %372 = vmatprep.subr.mxu0 0.0
  %373 = vmatpush1.msra.mxu0 %v359
  %374 = vmatprep.subr.mxu0 0.0
  %375 = vmatpush1.msra.mxu0 %v360
  %376 = vmatprep.subr.mxu0 0.0
  %377 = vmatpush1.msra.mxu0 %v361
  %378 = vmatprep.subr.mxu0 0.0
  %379 = vmatpush1.msra.mxu0 0.0
  %380 = vmatprep.subr.mxu0 0.0
  %381 = vmatpush1.msra.mxu0 0.0
  %382 = vmatprep.subr.mxu0 0.0
  %383 = vmatpush1.msra.mxu0 0.0
  %384 = vmatprep.subr.mxu0 0.0
  %385 = vmatpush1.msra.mxu0 0.0
  %386 = vmatprep.subr.mxu0 0.0
  %387 = vmatpush1.msra.mxu0 0.0
  %388 = vmatprep.subr.mxu0 0.0
  %389 = vmatpush1.msra.mxu0 0.0
  %390 = vmatprep.subr.mxu0 0.0
  %391 = vmatpush1.msra.mxu0 0.0
  %392 = vmatprep.subr.mxu0 0.0
  %393 = vmatpush1.msra.mxu0 0.0
  %394 = vmatprep.subr.mxu0 0.0
  %395 = vmatpush1.msra.mxu0 0.0
  %396 = vmatprep.subr.mxu0 0.0
  %397 = vmatpush1.msra.mxu0 0.0
  %398 = vmatprep.subr.mxu0 0.0
  %399 = vmatpush1.msra.mxu0 0.0
  %400 = vmatprep.subr.mxu0 0.0
  %401 = vmatpush1.msra.mxu0 0.0
  %402 = vmatprep.subr.mxu0 0.0
  %403 = vmatpush1.msra.mxu0 0.0
  %404 = vmatprep.subr.mxu0 0.0
  %405 = vmatpush1.msra.mxu0 0.0
  %406 = vmatprep.subr.mxu0 0.0
  %407 = vmatpush1.msra.mxu0 0.0
  %408 = vmatprep.subr.mxu0 0.0
  %409 = vmatpush1.msra.mxu0 0.0
  %410 = vmatprep.subr.mxu0 0.0
  %411 = vmatpush1.msra.mxu0 0.0
  %412 = vmatprep.subr.mxu0 0.0
  %413 = vmatpush1.msra.mxu0 0.0
  %414 = vmatprep.subr.mxu0 0.0
  %415 = vmatpush1.msra.mxu0 0.0
  %416 = vmatprep.subr.mxu0 0.0
  %417 = vmatpush1.msra.mxu0 0.0
  %418 = vmatprep.subr.mxu0 0.0
  %419 = vmatpush1.msra.mxu0 0.0
  %420 = vmatprep.subr.mxu0 0.0
  %421 = vmatpush1.msra.mxu0 0.0
  %422 = vmatprep.subr.mxu0 0.0
  %423 = vmatpush1.msra.mxu0 0.0
  %424 = vmatprep.subr.mxu0 0.0
  %425 = vmatpush1.msra.mxu0 0.0
  %426 = vmatprep.subr.mxu0 0.0
  %427 = vmatpush1.msra.mxu0 0.0
  %428 = vmatprep.subr.mxu0 0.0
  %429 = vmatpush1.msra.mxu0 0.0
  %430 = vmatprep.subr.mxu0 0.0
  %431 = vmatpush1.msra.mxu0 0.0
  %432 = vmatprep.subr.mxu0 0.0
  %433 = vmatpush1.msra.mxu0 0.0
  %434 = vmatprep.mubr.f32.mxu0 0.0
  %435 = vmatmul.mubr.f32.gmra.mrb[0].mxu0 %v28
  %v436 = vpop.f32.mrb[0].mxu0
  %v437 = vadd.f32 %v368, %v436
  %v438 = vpop.f32.mrb[0].mxu0
  %439 = vdwg.mxu0
  %s440 = scalar_lea.vmem %s3, 32
  %441 = vst.msk [vmem:[%s440] sm:$0xff] %vm100, %v437
  %s442 = scalar_lea.vmem %s1, 160
  %v443 = vld [vmem:[%s442] sm:$0xff]
  %v444 = vld [vmem:[%s442 + $0x8] sm:$0xff]
  %v445 = vld [vmem:[%s442 + $0x10] sm:$0xff]
  %v446 = vld [vmem:[%s442 + $0x18] sm:$0xff]
  %s447 = scalar_lea.vmem %s2, 5
  %v448 = vld [vmem:[%s447] sm:$0x1]
  %v450 = vlaneseq
  %v451 = vshrl.u32 %v450, 7
  %v452 = vsub.s32 0, %v451
  %v453 = vrot.slane %v448, %v452
  %455 = vmatprep.subr.mxu0 0.0
  %456 = vmatpush1.msra.mxu0 %v443
  %457 = vmatprep.subr.mxu0 0.0
  %458 = vmatpush1.msra.mxu0 %v444
  %459 = vmatprep.subr.mxu0 0.0
  %460 = vmatpush1.msra.mxu0 %v445
  %461 = vmatprep.subr.mxu0 0.0
  %462 = vmatpush1.msra.mxu0 %v446
  %463 = vmatprep.subr.mxu0 0.0
  %464 = vmatpush1.msra.mxu0 0.0
  %465 = vmatprep.subr.mxu0 0.0
  %466 = vmatpush1.msra.mxu0 0.0
  %467 = vmatprep.subr.mxu0 0.0
  %468 = vmatpush1.msra.mxu0 0.0
  %469 = vmatprep.subr.mxu0 0.0
  %470 = vmatpush1.msra.mxu0 0.0
  %471 = vmatprep.subr.mxu0 0.0
  %472 = vmatpush1.msra.mxu0 0.0
  %473 = vmatprep.subr.mxu0 0.0
  %474 = vmatpush1.msra.mxu0 0.0
  %475 = vmatprep.subr.mxu0 0.0
  %476 = vmatpush1.msra.mxu0 0.0
  %477 = vmatprep.subr.mxu0 0.0
  %478 = vmatpush1.msra.mxu0 0.0
  %479 = vmatprep.subr.mxu0 0.0
  %480 = vmatpush1.msra.mxu0 0.0
  %481 = vmatprep.subr.mxu0 0.0
  %482 = vmatpush1.msra.mxu0 0.0
  %483 = vmatprep.subr.mxu0 0.0
  %484 = vmatpush1.msra.mxu0 0.0
  %485 = vmatprep.subr.mxu0 0.0
  %486 = vmatpush1.msra.mxu0 0.0
  %487 = vmatprep.subr.mxu0 0.0
  %488 = vmatpush1.msra.mxu0 0.0
  %489 = vmatprep.subr.mxu0 0.0
  %490 = vmatpush1.msra.mxu0 0.0
  %491 = vmatprep.subr.mxu0 0.0
  %492 = vmatpush1.msra.mxu0 0.0
  %493 = vmatprep.subr.mxu0 0.0
  %494 = vmatpush1.msra.mxu0 0.0
  %495 = vmatprep.subr.mxu0 0.0
  %496 = vmatpush1.msra.mxu0 0.0
  %497 = vmatprep.subr.mxu0 0.0
  %498 = vmatpush1.msra.mxu0 0.0
  %499 = vmatprep.subr.mxu0 0.0
  %500 = vmatpush1.msra.mxu0 0.0
  %501 = vmatprep.subr.mxu0 0.0
  %502 = vmatpush1.msra.mxu0 0.0
  %503 = vmatprep.subr.mxu0 0.0
  %504 = vmatpush1.msra.mxu0 0.0
  %505 = vmatprep.subr.mxu0 0.0
  %506 = vmatpush1.msra.mxu0 0.0
  %507 = vmatprep.subr.mxu0 0.0
  %508 = vmatpush1.msra.mxu0 0.0
  %509 = vmatprep.subr.mxu0 0.0
  %510 = vmatpush1.msra.mxu0 0.0
  %511 = vmatprep.subr.mxu0 0.0
  %512 = vmatpush1.msra.mxu0 0.0
  %513 = vmatprep.subr.mxu0 0.0
  %514 = vmatpush1.msra.mxu0 0.0
  %515 = vmatprep.subr.mxu0 0.0
  %516 = vmatpush1.msra.mxu0 0.0
  %517 = vmatprep.subr.mxu0 0.0
  %518 = vmatpush1.msra.mxu0 0.0
  %519 = vmatprep.mubr.f32.mxu0 0.0
  %520 = vmatmul.mubr.f32.gmra.mrb[0].mxu0 %v28
  %v521 = vpop.f32.mrb[0].mxu0
  %v522 = vadd.f32 %v453, %v521
  %v523 = vpop.f32.mrb[0].mxu0
  %524 = vdwg.mxu0
  %s525 = scalar_lea.vmem %s3, 40
  %526 = vst.msk [vmem:[%s525] sm:$0xff] %vm100, %v522
  %s527 = scalar_lea.vmem %s1, 192
  %v528 = vld [vmem:[%s527] sm:$0xff]
  %v529 = vld [vmem:[%s527 + $0x8] sm:$0xff]
  %v530 = vld [vmem:[%s527 + $0x10] sm:$0xff]
  %v531 = vld [vmem:[%s527 + $0x18] sm:$0xff]
  %s532 = scalar_lea.vmem %s2, 6
  %v533 = vld [vmem:[%s532] sm:$0x1]
  %v535 = vlaneseq
  %v536 = vshrl.u32 %v535, 7
  %v537 = vsub.s32 0, %v536
  %v538 = vrot.slane %v533, %v537
  %540 = vmatprep.subr.mxu0 0.0
  %541 = vmatpush1.msra.mxu0 %v528
  %542 = vmatprep.subr.mxu0 0.0
  %543 = vmatpush1.msra.mxu0 %v529
  %544 = vmatprep.subr.mxu0 0.0
  %545 = vmatpush1.msra.mxu0 %v530
  %546 = vmatprep.subr.mxu0 0.0
  %547 = vmatpush1.msra.mxu0 %v531
  %548 = vmatprep.subr.mxu0 0.0
  %549 = vmatpush1.msra.mxu0 0.0
  %550 = vmatprep.subr.mxu0 0.0
  %551 = vmatpush1.msra.mxu0 0.0
  %552 = vmatprep.subr.mxu0 0.0
  %553 = vmatpush1.msra.mxu0 0.0
  %554 = vmatprep.subr.mxu0 0.0
  %555 = vmatpush1.msra.mxu0 0.0
  %556 = vmatprep.subr.mxu0 0.0
  %557 = vmatpush1.msra.mxu0 0.0
  %558 = vmatprep.subr.mxu0 0.0
  %559 = vmatpush1.msra.mxu0 0.0
  %560 = vmatprep.subr.mxu0 0.0
  %561 = vmatpush1.msra.mxu0 0.0
  %562 = vmatprep.subr.mxu0 0.0
  %563 = vmatpush1.msra.mxu0 0.0
  %564 = vmatprep.subr.mxu0 0.0
  %565 = vmatpush1.msra.mxu0 0.0
  %566 = vmatprep.subr.mxu0 0.0
  %567 = vmatpush1.msra.mxu0 0.0
  %568 = vmatprep.subr.mxu0 0.0
  %569 = vmatpush1.msra.mxu0 0.0
  %570 = vmatprep.subr.mxu0 0.0
  %571 = vmatpush1.msra.mxu0 0.0
  %572 = vmatprep.subr.mxu0 0.0
  %573 = vmatpush1.msra.mxu0 0.0
  %574 = vmatprep.subr.mxu0 0.0
  %575 = vmatpush1.msra.mxu0 0.0
  %576 = vmatprep.subr.mxu0 0.0
  %577 = vmatpush1.msra.mxu0 0.0
  %578 = vmatprep.subr.mxu0 0.0
  %579 = vmatpush1.msra.mxu0 0.0
  %580 = vmatprep.subr.mxu0 0.0
  %581 = vmatpush1.msra.mxu0 0.0
  %582 = vmatprep.subr.mxu0 0.0
  %583 = vmatpush1.msra.mxu0 0.0
  %584 = vmatprep.subr.mxu0 0.0
  %585 = vmatpush1.msra.mxu0 0.0
  %586 = vmatprep.subr.mxu0 0.0
  %587 = vmatpush1.msra.mxu0 0.0
  %588 = vmatprep.subr.mxu0 0.0
  %589 = vmatpush1.msra.mxu0 0.0
  %590 = vmatprep.subr.mxu0 0.0
  %591 = vmatpush1.msra.mxu0 0.0
  %592 = vmatprep.subr.mxu0 0.0
  %593 = vmatpush1.msra.mxu0 0.0
  %594 = vmatprep.subr.mxu0 0.0
  %595 = vmatpush1.msra.mxu0 0.0
  %596 = vmatprep.subr.mxu0 0.0
  %597 = vmatpush1.msra.mxu0 0.0
  %598 = vmatprep.subr.mxu0 0.0
  %599 = vmatpush1.msra.mxu0 0.0
  %600 = vmatprep.subr.mxu0 0.0
  %601 = vmatpush1.msra.mxu0 0.0
  %602 = vmatprep.subr.mxu0 0.0
  %603 = vmatpush1.msra.mxu0 0.0
  %604 = vmatprep.mubr.f32.mxu0 0.0
  %605 = vmatmul.mubr.f32.gmra.mrb[0].mxu0 %v28
  %v606 = vpop.f32.mrb[0].mxu0
  %v607 = vadd.f32 %v538, %v606
  %v608 = vpop.f32.mrb[0].mxu0
  %609 = vdwg.mxu0
  %s610 = scalar_lea.vmem %s3, 48
  %611 = vst.msk [vmem:[%s610] sm:$0xff] %vm100, %v607
  %s612 = scalar_lea.vmem %s1, 224
  %v613 = vld [vmem:[%s612] sm:$0xff]
  %v614 = vld [vmem:[%s612 + $0x8] sm:$0xff]
  %v615 = vld [vmem:[%s612 + $0x10] sm:$0xff]
  %v616 = vld [vmem:[%s612 + $0x18] sm:$0xff]
  %s617 = scalar_lea.vmem %s2, 7
  %v618 = vld [vmem:[%s617] sm:$0x1]
  %v620 = vlaneseq
  %v621 = vshrl.u32 %v620, 7
  %v622 = vsub.s32 0, %v621
  %v623 = vrot.slane %v618, %v622
  %625 = vmatprep.subr.mxu0 0.0
  %626 = vmatpush1.msra.mxu0 %v613
  %627 = vmatprep.subr.mxu0 0.0
  %628 = vmatpush1.msra.mxu0 %v614
  %629 = vmatprep.subr.mxu0 0.0
  %630 = vmatpush1.msra.mxu0 %v615
  %631 = vmatprep.subr.mxu0 0.0
  %632 = vmatpush1.msra.mxu0 %v616
  %633 = vmatprep.subr.mxu0 0.0
  %634 = vmatpush1.msra.mxu0 0.0
  %635 = vmatprep.subr.mxu0 0.0
  %636 = vmatpush1.msra.mxu0 0.0
  %637 = vmatprep.subr.mxu0 0.0
  %638 = vmatpush1.msra.mxu0 0.0
  %639 = vmatprep.subr.mxu0 0.0
  %640 = vmatpush1.msra.mxu0 0.0
  %641 = vmatprep.subr.mxu0 0.0
  %642 = vmatpush1.msra.mxu0 0.0
  %643 = vmatprep.subr.mxu0 0.0
  %644 = vmatpush1.msra.mxu0 0.0
  %645 = vmatprep.subr.mxu0 0.0
  %646 = vmatpush1.msra.mxu0 0.0
  %647 = vmatprep.subr.mxu0 0.0
  %648 = vmatpush1.msra.mxu0 0.0
  %649 = vmatprep.subr.mxu0 0.0
  %650 = vmatpush1.msra.mxu0 0.0
  %651 = vmatprep.subr.mxu0 0.0
  %652 = vmatpush1.msra.mxu0 0.0
  %653 = vmatprep.subr.mxu0 0.0
  %654 = vmatpush1.msra.mxu0 0.0
  %655 = vmatprep.subr.mxu0 0.0
  %656 = vmatpush1.msra.mxu0 0.0
  %657 = vmatprep.subr.mxu0 0.0
  %658 = vmatpush1.msra.mxu0 0.0
  %659 = vmatprep.subr.mxu0 0.0
  %660 = vmatpush1.msra.mxu0 0.0
  %661 = vmatprep.subr.mxu0 0.0
  %662 = vmatpush1.msra.mxu0 0.0
  %663 = vmatprep.subr.mxu0 0.0
  %664 = vmatpush1.msra.mxu0 0.0
  %665 = vmatprep.subr.mxu0 0.0
  %666 = vmatpush1.msra.mxu0 0.0
  %667 = vmatprep.subr.mxu0 0.0
  %668 = vmatpush1.msra.mxu0 0.0
  %669 = vmatprep.subr.mxu0 0.0
  %670 = vmatpush1.msra.mxu0 0.0
  %671 = vmatprep.subr.mxu0 0.0
  %672 = vmatpush1.msra.mxu0 0.0
  %673 = vmatprep.subr.mxu0 0.0
  %674 = vmatpush1.msra.mxu0 0.0
  %675 = vmatprep.subr.mxu0 0.0
  %676 = vmatpush1.msra.mxu0 0.0
  %677 = vmatprep.subr.mxu0 0.0
  %678 = vmatpush1.msra.mxu0 0.0
  %679 = vmatprep.subr.mxu0 0.0
  %680 = vmatpush1.msra.mxu0 0.0
  %681 = vmatprep.subr.mxu0 0.0
  %682 = vmatpush1.msra.mxu0 0.0
  %683 = vmatprep.subr.mxu0 0.0
  %684 = vmatpush1.msra.mxu0 0.0
  %685 = vmatprep.subr.mxu0 0.0
  %686 = vmatpush1.msra.mxu0 0.0
  %687 = vmatprep.subr.mxu0 0.0
  %688 = vmatpush1.msra.mxu0 0.0
  %689 = vmatprep.mubr.f32.mxu0 0.0
  %690 = vmatmul.mubr.f32.gmra.mrb[0].mxu0 %v28
  %v691 = vpop.f32.mrb[0].mxu0
  %v692 = vadd.f32 %v623, %v691
  %v693 = vpop.f32.mrb[0].mxu0
  %694 = vdwg.mxu0
  %s695 = scalar_lea.vmem %s3, 56
  %696 = vst.msk [vmem:[%s695] sm:$0xff] %vm100, %v692
  %s697 = scalar_lea.vmem %s1, 256
  %v698 = vld [vmem:[%s697] sm:$0xff]
  %v699 = vld [vmem:[%s697 + $0x8] sm:$0xff]
  %v700 = vld [vmem:[%s697 + $0x10] sm:$0xff]
  %v701 = vld [vmem:[%s697 + $0x18] sm:$0xff]
  %s702 = scalar_lea.vmem %s2, 8
  %v703 = vld [vmem:[%s702] sm:$0x1]
  %v705 = vlaneseq
  %v706 = vshrl.u32 %v705, 7
  %v707 = vsub.s32 0, %v706
  %v708 = vrot.slane %v703, %v707
  %710 = vmatprep.subr.mxu0 0.0
  %711 = vmatpush1.msra.mxu0 %v698
  %712 = vmatprep.subr.mxu0 0.0
  %713 = vmatpush1.msra.mxu0 %v699
  %714 = vmatprep.subr.mxu0 0.0
  %715 = vmatpush1.msra.mxu0 %v700
  %716 = vmatprep.subr.mxu0 0.0
  %717 = vmatpush1.msra.mxu0 %v701
  %718 = vmatprep.subr.mxu0 0.0
  %719 = vmatpush1.msra.mxu0 0.0
  %720 = vmatprep.subr.mxu0 0.0
  %721 = vmatpush1.msra.mxu0 0.0
  %722 = vmatprep.subr.mxu0 0.0
  %723 = vmatpush1.msra.mxu0 0.0
  %724 = vmatprep.subr.mxu0 0.0
  %725 = vmatpush1.msra.mxu0 0.0
  %726 = vmatprep.subr.mxu0 0.0
  %727 = vmatpush1.msra.mxu0 0.0
  %728 = vmatprep.subr.mxu0 0.0
  %729 = vmatpush1.msra.mxu0 0.0
  %730 = vmatprep.subr.mxu0 0.0
  %731 = vmatpush1.msra.mxu0 0.0
  %732 = vmatprep.subr.mxu0 0.0
  %733 = vmatpush1.msra.mxu0 0.0
  %734 = vmatprep.subr.mxu0 0.0
  %735 = vmatpush1.msra.mxu0 0.0
  %736 = vmatprep.subr.mxu0 0.0
  %737 = vmatpush1.msra.mxu0 0.0
  %738 = vmatprep.subr.mxu0 0.0
  %739 = vmatpush1.msra.mxu0 0.0
  %740 = vmatprep.subr.mxu0 0.0
  %741 = vmatpush1.msra.mxu0 0.0
  %742 = vmatprep.subr.mxu0 0.0
  %743 = vmatpush1.msra.mxu0 0.0
  %744 = vmatprep.subr.mxu0 0.0
  %745 = vmatpush1.msra.mxu0 0.0
  %746 = vmatprep.subr.mxu0 0.0
  %747 = vmatpush1.msra.mxu0 0.0
  %748 = vmatprep.subr.mxu0 0.0
  %749 = vmatpush1.msra.mxu0 0.0
  %750 = vmatprep.subr.mxu0 0.0
  %751 = vmatpush1.msra.mxu0 0.0
  %752 = vmatprep.subr.mxu0 0.0
  %753 = vmatpush1.msra.mxu0 0.0
  %754 = vmatprep.subr.mxu0 0.0
  %755 = vmatpush1.msra.mxu0 0.0
  %756 = vmatprep.subr.mxu0 0.0
  %757 = vmatpush1.msra.mxu0 0.0
  %758 = vmatprep.subr.mxu0 0.0
  %759 = vmatpush1.msra.mxu0 0.0
  %760 = vmatprep.subr.mxu0 0.0
  %761 = vmatpush1.msra.mxu0 0.0
  %762 = vmatprep.subr.mxu0 0.0
  %763 = vmatpush1.msra.mxu0 0.0
  %764 = vmatprep.subr.mxu0 0.0
  %765 = vmatpush1.msra.mxu0 0.0
  %766 = vmatprep.subr.mxu0 0.0
  %767 = vmatpush1.msra.mxu0 0.0
  %768 = vmatprep.subr.mxu0 0.0
  %769 = vmatpush1.msra.mxu0 0.0
  %770 = vmatprep.subr.mxu0 0.0
  %771 = vmatpush1.msra.mxu0 0.0
  %772 = vmatprep.subr.mxu0 0.0
  %773 = vmatpush1.msra.mxu0 0.0
  %774 = vmatprep.mubr.f32.mxu0 0.0
  %775 = vmatmul.mubr.f32.gmra.mrb[0].mxu0 %v28
  %v776 = vpop.f32.mrb[0].mxu0
  %v777 = vadd.f32 %v708, %v776
  %v778 = vpop.f32.mrb[0].mxu0
  %779 = vdwg.mxu0
  %s780 = scalar_lea.vmem %s3, 64
  %781 = vst.msk [vmem:[%s780] sm:$0xff] %vm100, %v777
  %s782 = scalar_lea.vmem %s1, 288
  %v783 = vld [vmem:[%s782] sm:$0xff]
  %v784 = vld [vmem:[%s782 + $0x8] sm:$0xff]
  %v785 = vld [vmem:[%s782 + $0x10] sm:$0xff]
  %v786 = vld [vmem:[%s782 + $0x18] sm:$0xff]
  %s787 = scalar_lea.vmem %s2, 9
  %v788 = vld [vmem:[%s787] sm:$0x1]
  %v790 = vlaneseq
  %v791 = vshrl.u32 %v790, 7
  %v792 = vsub.s32 0, %v791
  %v793 = vrot.slane %v788, %v792
  %795 = vmatprep.subr.mxu0 0.0
  %796 = vmatpush1.msra.mxu0 %v783
  %797 = vmatprep.subr.mxu0 0.0
  %798 = vmatpush1.msra.mxu0 %v784
  %799 = vmatprep.subr.mxu0 0.0
  %800 = vmatpush1.msra.mxu0 %v785
  %801 = vmatprep.subr.mxu0 0.0
  %802 = vmatpush1.msra.mxu0 %v786
  %803 = vmatprep.subr.mxu0 0.0
  %804 = vmatpush1.msra.mxu0 0.0
  %805 = vmatprep.subr.mxu0 0.0
  %806 = vmatpush1.msra.mxu0 0.0
  %807 = vmatprep.subr.mxu0 0.0
  %808 = vmatpush1.msra.mxu0 0.0
  %809 = vmatprep.subr.mxu0 0.0
  %810 = vmatpush1.msra.mxu0 0.0
  %811 = vmatprep.subr.mxu0 0.0
  %812 = vmatpush1.msra.mxu0 0.0
  %813 = vmatprep.subr.mxu0 0.0
  %814 = vmatpush1.msra.mxu0 0.0
  %815 = vmatprep.subr.mxu0 0.0
  %816 = vmatpush1.msra.mxu0 0.0
  %817 = vmatprep.subr.mxu0 0.0
  %818 = vmatpush1.msra.mxu0 0.0
  %819 = vmatprep.subr.mxu0 0.0
  %820 = vmatpush1.msra.mxu0 0.0
  %821 = vmatprep.subr.mxu0 0.0
  %822 = vmatpush1.msra.mxu0 0.0
  %823 = vmatprep.subr.mxu0 0.0
  %824 = vmatpush1.msra.mxu0 0.0
  %825 = vmatprep.subr.mxu0 0.0
  %826 = vmatpush1.msra.mxu0 0.0
  %827 = vmatprep.subr.mxu0 0.0
  %828 = vmatpush1.msra.mxu0 0.0
  %829 = vmatprep.subr.mxu0 0.0
  %830 = vmatpush1.msra.mxu0 0.0
  %831 = vmatprep.subr.mxu0 0.0
  %832 = vmatpush1.msra.mxu0 0.0
  %833 = vmatprep.subr.mxu0 0.0
  %834 = vmatpush1.msra.mxu0 0.0
  %835 = vmatprep.subr.mxu0 0.0
  %836 = vmatpush1.msra.mxu0 0.0
  %837 = vmatprep.subr.mxu0 0.0
  %838 = vmatpush1.msra.mxu0 0.0
  %839 = vmatprep.subr.mxu0 0.0
  %840 = vmatpush1.msra.mxu0 0.0
  %841 = vmatprep.subr.mxu0 0.0
  %842 = vmatpush1.msra.mxu0 0.0
  %843 = vmatprep.subr.mxu0 0.0
  %844 = vmatpush1.msra.mxu0 0.0
  %845 = vmatprep.subr.mxu0 0.0
  %846 = vmatpush1.msra.mxu0 0.0
  %847 = vmatprep.subr.mxu0 0.0
  %848 = vmatpush1.msra.mxu0 0.0
  %849 = vmatprep.subr.mxu0 0.0
  %850 = vmatpush1.msra.mxu0 0.0
  %851 = vmatprep.subr.mxu0 0.0
  %852 = vmatpush1.msra.mxu0 0.0
  %853 = vmatprep.subr.mxu0 0.0
  %854 = vmatpush1.msra.mxu0 0.0
  %855 = vmatprep.subr.mxu0 0.0
  %856 = vmatpush1.msra.mxu0 0.0
  %857 = vmatprep.subr.mxu0 0.0
  %858 = vmatpush1.msra.mxu0 0.0
  %859 = vmatprep.mubr.f32.mxu0 0.0
  %860 = vmatmul.mubr.f32.gmra.mrb[0].mxu0 %v28
  %v861 = vpop.f32.mrb[0].mxu0
  %v862 = vadd.f32 %v793, %v861
  %v863 = vpop.f32.mrb[0].mxu0
  %864 = vdwg.mxu0
  %s865 = scalar_lea.vmem %s3, 72
  %866 = vst.msk [vmem:[%s865] sm:$0xff] %vm100, %v862
  %s867 = scalar_lea.vmem %s1, 320
  %v868 = vld [vmem:[%s867] sm:$0xff]
  %v869 = vld [vmem:[%s867 + $0x8] sm:$0xff]
  %v870 = vld [vmem:[%s867 + $0x10] sm:$0xff]
  %v871 = vld [vmem:[%s867 + $0x18] sm:$0xff]
  %s872 = scalar_lea.vmem %s2, 10
  %v873 = vld [vmem:[%s872] sm:$0x1]
  %v875 = vlaneseq
  %v876 = vshrl.u32 %v875, 7
  %v877 = vsub.s32 0, %v876
  %v878 = vrot.slane %v873, %v877
  %880 = vmatprep.subr.mxu0 0.0
  %881 = vmatpush1.msra.mxu0 %v868
  %882 = vmatprep.subr.mxu0 0.0
  %883 = vmatpush1.msra.mxu0 %v869
  %884 = vmatprep.subr.mxu0 0.0
  %885 = vmatpush1.msra.mxu0 %v870
  %886 = vmatprep.subr.mxu0 0.0
  %887 = vmatpush1.msra.mxu0 %v871
  %888 = vmatprep.subr.mxu0 0.0
  %889 = vmatpush1.msra.mxu0 0.0
  %890 = vmatprep.subr.mxu0 0.0
  %891 = vmatpush1.msra.mxu0 0.0
  %892 = vmatprep.subr.mxu0 0.0
  %893 = vmatpush1.msra.mxu0 0.0
  %894 = vmatprep.subr.mxu0 0.0
  %895 = vmatpush1.msra.mxu0 0.0
  %896 = vmatprep.subr.mxu0 0.0
  %897 = vmatpush1.msra.mxu0 0.0
  %898 = vmatprep.subr.mxu0 0.0
  %899 = vmatpush1.msra.mxu0 0.0
  %900 = vmatprep.subr.mxu0 0.0
  %901 = vmatpush1.msra.mxu0 0.0
  %902 = vmatprep.subr.mxu0 0.0
  %903 = vmatpush1.msra.mxu0 0.0
  %904 = vmatprep.subr.mxu0 0.0
  %905 = vmatpush1.msra.mxu0 0.0
  %906 = vmatprep.subr.mxu0 0.0
  %907 = vmatpush1.msra.mxu0 0.0
  %908 = vmatprep.subr.mxu0 0.0
  %909 = vmatpush1.msra.mxu0 0.0
  %910 = vmatprep.subr.mxu0 0.0
  %911 = vmatpush1.msra.mxu0 0.0
  %912 = vmatprep.subr.mxu0 0.0
  %913 = vmatpush1.msra.mxu0 0.0
  %914 = vmatprep.subr.mxu0 0.0
  %915 = vmatpush1.msra.mxu0 0.0
  %916 = vmatprep.subr.mxu0 0.0
  %917 = vmatpush1.msra.mxu0 0.0
  %918 = vmatprep.subr.mxu0 0.0
  %919 = vmatpush1.msra.mxu0 0.0
  %920 = vmatprep.subr.mxu0 0.0
  %921 = vmatpush1.msra.mxu0 0.0
  %922 = vmatprep.subr.mxu0 0.0
  %923 = vmatpush1.msra.mxu0 0.0
  %924 = vmatprep.subr.mxu0 0.0
  %925 = vmatpush1.msra.mxu0 0.0
  %926 = vmatprep.subr.mxu0 0.0
  %927 = vmatpush1.msra.mxu0 0.0
  %928 = vmatprep.subr.mxu0 0.0
  %929 = vmatpush1.msra.mxu0 0.0
  %930 = vmatprep.subr.mxu0 0.0
  %931 = vmatpush1.msra.mxu0 0.0
  %932 = vmatprep.subr.mxu0 0.0
  %933 = vmatpush1.msra.mxu0 0.0
  %934 = vmatprep.subr.mxu0 0.0
  %935 = vmatpush1.msra.mxu0 0.0
  %936 = vmatprep.subr.mxu0 0.0
  %937 = vmatpush1.msra.mxu0 0.0
  %938 = vmatprep.subr.mxu0 0.0
  %939 = vmatpush1.msra.mxu0 0.0
  %940 = vmatprep.subr.mxu0 0.0
  %941 = vmatpush1.msra.mxu0 0.0
  %942 = vmatprep.subr.mxu0 0.0
  %943 = vmatpush1.msra.mxu0 0.0
  %944 = vmatprep.mubr.f32.mxu0 0.0
  %945 = vmatmul.mubr.f32.gmra.mrb[0].mxu0 %v28
  %v946 = vpop.f32.mrb[0].mxu0
  %v947 = vadd.f32 %v878, %v946
  %v948 = vpop.f32.mrb[0].mxu0
  %949 = vdwg.mxu0
  %s950 = scalar_lea.vmem %s3, 80
  %951 = vst.msk [vmem:[%s950] sm:$0xff] %vm100, %v947
  %s952 = scalar_lea.vmem %s1, 352
  %v953 = vld [vmem:[%s952] sm:$0xff]
  %v954 = vld [vmem:[%s952 + $0x8] sm:$0xff]
  %v955 = vld [vmem:[%s952 + $0x10] sm:$0xff]
  %v956 = vld [vmem:[%s952 + $0x18] sm:$0xff]
  %s957 = scalar_lea.vmem %s2, 11
  %v958 = vld [vmem:[%s957] sm:$0x1]
  %v960 = vlaneseq
  %v961 = vshrl.u32 %v960, 7
  %v962 = vsub.s32 0, %v961
  %v963 = vrot.slane %v958, %v962
  %965 = vmatprep.subr.mxu0 0.0
  %966 = vmatpush1.msra.mxu0 %v953
  %967 = vmatprep.subr.mxu0 0.0
  %968 = vmatpush1.msra.mxu0 %v954
  %969 = vmatprep.subr.mxu0 0.0
  %970 = vmatpush1.msra.mxu0 %v955
  %971 = vmatprep.subr.mxu0 0.0
  %972 = vmatpush1.msra.mxu0 %v956
  %973 = vmatprep.subr.mxu0 0.0
  %974 = vmatpush1.msra.mxu0 0.0
  %975 = vmatprep.subr.mxu0 0.0
  %976 = vmatpush1.msra.mxu0 0.0
  %977 = vmatprep.subr.mxu0 0.0
  %978 = vmatpush1.msra.mxu0 0.0
  %979 = vmatprep.subr.mxu0 0.0
  %980 = vmatpush1.msra.mxu0 0.0
  %981 = vmatprep.subr.mxu0 0.0
  %982 = vmatpush1.msra.mxu0 0.0
  %983 = vmatprep.subr.mxu0 0.0
  %984 = vmatpush1.msra.mxu0 0.0
  %985 = vmatprep.subr.mxu0 0.0
  %986 = vmatpush1.msra.mxu0 0.0
  %987 = vmatprep.subr.mxu0 0.0
  %988 = vmatpush1.msra.mxu0 0.0
  %989 = vmatprep.subr.mxu0 0.0
  %990 = vmatpush1.msra.mxu0 0.0
  %991 = vmatprep.subr.mxu0 0.0
  %992 = vmatpush1.msra.mxu0 0.0
  %993 = vmatprep.subr.mxu0 0.0
  %994 = vmatpush1.msra.mxu0 0.0
  %995 = vmatprep.subr.mxu0 0.0
  %996 = vmatpush1.msra.mxu0 0.0
  %997 = vmatprep.subr.mxu0 0.0
  %998 = vmatpush1.msra.mxu0 0.0
  %999 = vmatprep.subr.mxu0 0.0
  %1000 = vmatpush1.msra.mxu0 0.0
  %1001 = vmatprep.subr.mxu0 0.0
  %1002 = vmatpush1.msra.mxu0 0.0
  %1003 = vmatprep.subr.mxu0 0.0
  %1004 = vmatpush1.msra.mxu0 0.0
  %1005 = vmatprep.subr.mxu0 0.0
  %1006 = vmatpush1.msra.mxu0 0.0
  %1007 = vmatprep.subr.mxu0 0.0
  %1008 = vmatpush1.msra.mxu0 0.0
  %1009 = vmatprep.subr.mxu0 0.0
  %1010 = vmatpush1.msra.mxu0 0.0
  %1011 = vmatprep.subr.mxu0 0.0
  %1012 = vmatpush1.msra.mxu0 0.0
  %1013 = vmatprep.subr.mxu0 0.0
  %1014 = vmatpush1.msra.mxu0 0.0
  %1015 = vmatprep.subr.mxu0 0.0
  %1016 = vmatpush1.msra.mxu0 0.0
  %1017 = vmatprep.subr.mxu0 0.0
  %1018 = vmatpush1.msra.mxu0 0.0
  %1019 = vmatprep.subr.mxu0 0.0
  %1020 = vmatpush1.msra.mxu0 0.0
  %1021 = vmatprep.subr.mxu0 0.0
  %1022 = vmatpush1.msra.mxu0 0.0
  %1023 = vmatprep.subr.mxu0 0.0
  %1024 = vmatpush1.msra.mxu0 0.0
  %1025 = vmatprep.subr.mxu0 0.0
  %1026 = vmatpush1.msra.mxu0 0.0
  %1027 = vmatprep.subr.mxu0 0.0
  %1028 = vmatpush1.msra.mxu0 0.0
  %1029 = vmatprep.mubr.f32.mxu0 0.0
  %1030 = vmatmul.mubr.f32.gmra.mrb[0].mxu0 %v28
  %v1031 = vpop.f32.mrb[0].mxu0
  %v1032 = vadd.f32 %v963, %v1031
  %v1033 = vpop.f32.mrb[0].mxu0
  %1034 = vdwg.mxu0
  %s1035 = scalar_lea.vmem %s3, 88
  %1036 = vst.msk [vmem:[%s1035] sm:$0xff] %vm100, %v1032
  %s1037 = scalar_lea.vmem %s1, 384
  %v1038 = vld [vmem:[%s1037] sm:$0xff]
  %v1039 = vld [vmem:[%s1037 + $0x8] sm:$0xff]
  %v1040 = vld [vmem:[%s1037 + $0x10] sm:$0xff]
  %v1041 = vld [vmem:[%s1037 + $0x18] sm:$0xff]
  %s1042 = scalar_lea.vmem %s2, 12
  %v1043 = vld [vmem:[%s1042] sm:$0x1]
  %v1045 = vlaneseq
  %v1046 = vshrl.u32 %v1045, 7
  %v1047 = vsub.s32 0, %v1046
  %v1048 = vrot.slane %v1043, %v1047
  %1050 = vmatprep.subr.mxu0 0.0
  %1051 = vmatpush1.msra.mxu0 %v1038
  %1052 = vmatprep.subr.mxu0 0.0
  %1053 = vmatpush1.msra.mxu0 %v1039
  %1054 = vmatprep.subr.mxu0 0.0
  %1055 = vmatpush1.msra.mxu0 %v1040
  %1056 = vmatprep.subr.mxu0 0.0
  %1057 = vmatpush1.msra.mxu0 %v1041
  %1058 = vmatprep.subr.mxu0 0.0
  %1059 = vmatpush1.msra.mxu0 0.0
  %1060 = vmatprep.subr.mxu0 0.0
  %1061 = vmatpush1.msra.mxu0 0.0
  %1062 = vmatprep.subr.mxu0 0.0
  %1063 = vmatpush1.msra.mxu0 0.0
  %1064 = vmatprep.subr.mxu0 0.0
  %1065 = vmatpush1.msra.mxu0 0.0
  %1066 = vmatprep.subr.mxu0 0.0
  %1067 = vmatpush1.msra.mxu0 0.0
  %1068 = vmatprep.subr.mxu0 0.0
  %1069 = vmatpush1.msra.mxu0 0.0
  %1070 = vmatprep.subr.mxu0 0.0
  %1071 = vmatpush1.msra.mxu0 0.0
  %1072 = vmatprep.subr.mxu0 0.0
  %1073 = vmatpush1.msra.mxu0 0.0
  %1074 = vmatprep.subr.mxu0 0.0
  %1075 = vmatpush1.msra.mxu0 0.0
  %1076 = vmatprep.subr.mxu0 0.0
  %1077 = vmatpush1.msra.mxu0 0.0
  %1078 = vmatprep.subr.mxu0 0.0
  %1079 = vmatpush1.msra.mxu0 0.0
  %1080 = vmatprep.subr.mxu0 0.0
  %1081 = vmatpush1.msra.mxu0 0.0
  %1082 = vmatprep.subr.mxu0 0.0
  %1083 = vmatpush1.msra.mxu0 0.0
  %1084 = vmatprep.subr.mxu0 0.0
  %1085 = vmatpush1.msra.mxu0 0.0
  %1086 = vmatprep.subr.mxu0 0.0
  %1087 = vmatpush1.msra.mxu0 0.0
  %1088 = vmatprep.subr.mxu0 0.0
  %1089 = vmatpush1.msra.mxu0 0.0
  %1090 = vmatprep.subr.mxu0 0.0
  %1091 = vmatpush1.msra.mxu0 0.0
  %1092 = vmatprep.subr.mxu0 0.0
  %1093 = vmatpush1.msra.mxu0 0.0
  %1094 = vmatprep.subr.mxu0 0.0
  %1095 = vmatpush1.msra.mxu0 0.0
  %1096 = vmatprep.subr.mxu0 0.0
  %1097 = vmatpush1.msra.mxu0 0.0
  %1098 = vmatprep.subr.mxu0 0.0
  %1099 = vmatpush1.msra.mxu0 0.0
  %1100 = vmatprep.subr.mxu0 0.0
  %1101 = vmatpush1.msra.mxu0 0.0
  %1102 = vmatprep.subr.mxu0 0.0
  %1103 = vmatpush1.msra.mxu0 0.0
  %1104 = vmatprep.subr.mxu0 0.0
  %1105 = vmatpush1.msra.mxu0 0.0
  %1106 = vmatprep.subr.mxu0 0.0
  %1107 = vmatpush1.msra.mxu0 0.0
  %1108 = vmatprep.subr.mxu0 0.0
  %1109 = vmatpush1.msra.mxu0 0.0
  %1110 = vmatprep.subr.mxu0 0.0
  %1111 = vmatpush1.msra.mxu0 0.0
  %1112 = vmatprep.subr.mxu0 0.0
  %1113 = vmatpush1.msra.mxu0 0.0
  %1114 = vmatprep.mubr.f32.mxu0 0.0
  %1115 = vmatmul.mubr.f32.gmra.mrb[0].mxu0 %v28
  %v1116 = vpop.f32.mrb[0].mxu0
  %v1117 = vadd.f32 %v1048, %v1116
  %v1118 = vpop.f32.mrb[0].mxu0
  %1119 = vdwg.mxu0
  %s1120 = scalar_lea.vmem %s3, 96
  %1121 = vst.msk [vmem:[%s1120] sm:$0xff] %vm100, %v1117
  %s1122 = scalar_lea.vmem %s1, 416
  %v1123 = vld [vmem:[%s1122] sm:$0xff]
  %v1124 = vld [vmem:[%s1122 + $0x8] sm:$0xff]
  %v1125 = vld [vmem:[%s1122 + $0x10] sm:$0xff]
  %v1126 = vld [vmem:[%s1122 + $0x18] sm:$0xff]
  %s1127 = scalar_lea.vmem %s2, 13
  %v1128 = vld [vmem:[%s1127] sm:$0x1]
  %v1130 = vlaneseq
  %v1131 = vshrl.u32 %v1130, 7
  %v1132 = vsub.s32 0, %v1131
  %v1133 = vrot.slane %v1128, %v1132
  %1135 = vmatprep.subr.mxu0 0.0
  %1136 = vmatpush1.msra.mxu0 %v1123
  %1137 = vmatprep.subr.mxu0 0.0
  %1138 = vmatpush1.msra.mxu0 %v1124
  %1139 = vmatprep.subr.mxu0 0.0
  %1140 = vmatpush1.msra.mxu0 %v1125
  %1141 = vmatprep.subr.mxu0 0.0
  %1142 = vmatpush1.msra.mxu0 %v1126
  %1143 = vmatprep.subr.mxu0 0.0
  %1144 = vmatpush1.msra.mxu0 0.0
  %1145 = vmatprep.subr.mxu0 0.0
  %1146 = vmatpush1.msra.mxu0 0.0
  %1147 = vmatprep.subr.mxu0 0.0
  %1148 = vmatpush1.msra.mxu0 0.0
  %1149 = vmatprep.subr.mxu0 0.0
  %1150 = vmatpush1.msra.mxu0 0.0
  %1151 = vmatprep.subr.mxu0 0.0
  %1152 = vmatpush1.msra.mxu0 0.0
  %1153 = vmatprep.subr.mxu0 0.0
  %1154 = vmatpush1.msra.mxu0 0.0
  %1155 = vmatprep.subr.mxu0 0.0
  %1156 = vmatpush1.msra.mxu0 0.0
  %1157 = vmatprep.subr.mxu0 0.0
  %1158 = vmatpush1.msra.mxu0 0.0
  %1159 = vmatprep.subr.mxu0 0.0
  %1160 = vmatpush1.msra.mxu0 0.0
  %1161 = vmatprep.subr.mxu0 0.0
  %1162 = vmatpush1.msra.mxu0 0.0
  %1163 = vmatprep.subr.mxu0 0.0
  %1164 = vmatpush1.msra.mxu0 0.0
  %1165 = vmatprep.subr.mxu0 0.0
  %1166 = vmatpush1.msra.mxu0 0.0
  %1167 = vmatprep.subr.mxu0 0.0
  %1168 = vmatpush1.msra.mxu0 0.0
  %1169 = vmatprep.subr.mxu0 0.0
  %1170 = vmatpush1.msra.mxu0 0.0
  %1171 = vmatprep.subr.mxu0 0.0
  %1172 = vmatpush1.msra.mxu0 0.0
  %1173 = vmatprep.subr.mxu0 0.0
  %1174 = vmatpush1.msra.mxu0 0.0
  %1175 = vmatprep.subr.mxu0 0.0
  %1176 = vmatpush1.msra.mxu0 0.0
  %1177 = vmatprep.subr.mxu0 0.0
  %1178 = vmatpush1.msra.mxu0 0.0
  %1179 = vmatprep.subr.mxu0 0.0
  %1180 = vmatpush1.msra.mxu0 0.0
  %1181 = vmatprep.subr.mxu0 0.0
  %1182 = vmatpush1.msra.mxu0 0.0
  %1183 = vmatprep.subr.mxu0 0.0
  %1184 = vmatpush1.msra.mxu0 0.0
  %1185 = vmatprep.subr.mxu0 0.0
  %1186 = vmatpush1.msra.mxu0 0.0
  %1187 = vmatprep.subr.mxu0 0.0
  %1188 = vmatpush1.msra.mxu0 0.0
  %1189 = vmatprep.subr.mxu0 0.0
  %1190 = vmatpush1.msra.mxu0 0.0
  %1191 = vmatprep.subr.mxu0 0.0
  %1192 = vmatpush1.msra.mxu0 0.0
  %1193 = vmatprep.subr.mxu0 0.0
  %1194 = vmatpush1.msra.mxu0 0.0
  %1195 = vmatprep.subr.mxu0 0.0
  %1196 = vmatpush1.msra.mxu0 0.0
  %1197 = vmatprep.subr.mxu0 0.0
  %1198 = vmatpush1.msra.mxu0 0.0
  %1199 = vmatprep.mubr.f32.mxu0 0.0
  %1200 = vmatmul.mubr.f32.gmra.mrb[0].mxu0 %v28
  %v1201 = vpop.f32.mrb[0].mxu0
  %v1202 = vadd.f32 %v1133, %v1201
  %v1203 = vpop.f32.mrb[0].mxu0
  %1204 = vdwg.mxu0
  %s1205 = scalar_lea.vmem %s3, 104
  %1206 = vst.msk [vmem:[%s1205] sm:$0xff] %vm100, %v1202
  %s1207 = scalar_lea.vmem %s1, 448
  %v1208 = vld [vmem:[%s1207] sm:$0xff]
  %v1209 = vld [vmem:[%s1207 + $0x8] sm:$0xff]
  %v1210 = vld [vmem:[%s1207 + $0x10] sm:$0xff]
  %v1211 = vld [vmem:[%s1207 + $0x18] sm:$0xff]
  %s1212 = scalar_lea.vmem %s2, 14
  %v1213 = vld [vmem:[%s1212] sm:$0x1]
  %v1215 = vlaneseq
  %v1216 = vshrl.u32 %v1215, 7
  %v1217 = vsub.s32 0, %v1216
  %v1218 = vrot.slane %v1213, %v1217
  %1220 = vmatprep.subr.mxu0 0.0
  %1221 = vmatpush1.msra.mxu0 %v1208
  %1222 = vmatprep.subr.mxu0 0.0
  %1223 = vmatpush1.msra.mxu0 %v1209
  %1224 = vmatprep.subr.mxu0 0.0
  %1225 = vmatpush1.msra.mxu0 %v1210
  %1226 = vmatprep.subr.mxu0 0.0
  %1227 = vmatpush1.msra.mxu0 %v1211
  %1228 = vmatprep.subr.mxu0 0.0
  %1229 = vmatpush1.msra.mxu0 0.0
  %1230 = vmatprep.subr.mxu0 0.0
  %1231 = vmatpush1.msra.mxu0 0.0
  %1232 = vmatprep.subr.mxu0 0.0
  %1233 = vmatpush1.msra.mxu0 0.0
  %1234 = vmatprep.subr.mxu0 0.0
  %1235 = vmatpush1.msra.mxu0 0.0
  %1236 = vmatprep.subr.mxu0 0.0
  %1237 = vmatpush1.msra.mxu0 0.0
  %1238 = vmatprep.subr.mxu0 0.0
  %1239 = vmatpush1.msra.mxu0 0.0
  %1240 = vmatprep.subr.mxu0 0.0
  %1241 = vmatpush1.msra.mxu0 0.0
  %1242 = vmatprep.subr.mxu0 0.0
  %1243 = vmatpush1.msra.mxu0 0.0
  %1244 = vmatprep.subr.mxu0 0.0
  %1245 = vmatpush1.msra.mxu0 0.0
  %1246 = vmatprep.subr.mxu0 0.0
  %1247 = vmatpush1.msra.mxu0 0.0
  %1248 = vmatprep.subr.mxu0 0.0
  %1249 = vmatpush1.msra.mxu0 0.0
  %1250 = vmatprep.subr.mxu0 0.0
  %1251 = vmatpush1.msra.mxu0 0.0
  %1252 = vmatprep.subr.mxu0 0.0
  %1253 = vmatpush1.msra.mxu0 0.0
  %1254 = vmatprep.subr.mxu0 0.0
  %1255 = vmatpush1.msra.mxu0 0.0
  %1256 = vmatprep.subr.mxu0 0.0
  %1257 = vmatpush1.msra.mxu0 0.0
  %1258 = vmatprep.subr.mxu0 0.0
  %1259 = vmatpush1.msra.mxu0 0.0
  %1260 = vmatprep.subr.mxu0 0.0
  %1261 = vmatpush1.msra.mxu0 0.0
  %1262 = vmatprep.subr.mxu0 0.0
  %1263 = vmatpush1.msra.mxu0 0.0
  %1264 = vmatprep.subr.mxu0 0.0
  %1265 = vmatpush1.msra.mxu0 0.0
  %1266 = vmatprep.subr.mxu0 0.0
  %1267 = vmatpush1.msra.mxu0 0.0
  %1268 = vmatprep.subr.mxu0 0.0
  %1269 = vmatpush1.msra.mxu0 0.0
  %1270 = vmatprep.subr.mxu0 0.0
  %1271 = vmatpush1.msra.mxu0 0.0
  %1272 = vmatprep.subr.mxu0 0.0
  %1273 = vmatpush1.msra.mxu0 0.0
  %1274 = vmatprep.subr.mxu0 0.0
  %1275 = vmatpush1.msra.mxu0 0.0
  %1276 = vmatprep.subr.mxu0 0.0
  %1277 = vmatpush1.msra.mxu0 0.0
  %1278 = vmatprep.subr.mxu0 0.0
  %1279 = vmatpush1.msra.mxu0 0.0
  %1280 = vmatprep.subr.mxu0 0.0
  %1281 = vmatpush1.msra.mxu0 0.0
  %1282 = vmatprep.subr.mxu0 0.0
  %1283 = vmatpush1.msra.mxu0 0.0
  %1284 = vmatprep.mubr.f32.mxu0 0.0
  %1285 = vmatmul.mubr.f32.gmra.mrb[0].mxu0 %v28
  %v1286 = vpop.f32.mrb[0].mxu0
  %v1287 = vadd.f32 %v1218, %v1286
  %v1288 = vpop.f32.mrb[0].mxu0
  %1289 = vdwg.mxu0
  %s1290 = scalar_lea.vmem %s3, 112
  %1291 = vst.msk [vmem:[%s1290] sm:$0xff] %vm100, %v1287
  %s1292 = scalar_lea.vmem %s1, 480
  %v1293 = vld [vmem:[%s1292] sm:$0xff]
  %v1294 = vld [vmem:[%s1292 + $0x8] sm:$0xff]
  %v1295 = vld [vmem:[%s1292 + $0x10] sm:$0xff]
  %v1296 = vld [vmem:[%s1292 + $0x18] sm:$0xff]
  %s1297 = scalar_lea.vmem %s2, 15
  %v1298 = vld [vmem:[%s1297] sm:$0x1]
  %v1300 = vlaneseq
  %v1301 = vshrl.u32 %v1300, 7
  %v1302 = vsub.s32 0, %v1301
  %v1303 = vrot.slane %v1298, %v1302
  %1305 = vmatprep.subr.mxu0 0.0
  %1306 = vmatpush1.msra.mxu0 %v1293
  %1307 = vmatprep.subr.mxu0 0.0
  %1308 = vmatpush1.msra.mxu0 %v1294
  %1309 = vmatprep.subr.mxu0 0.0
  %1310 = vmatpush1.msra.mxu0 %v1295
  %1311 = vmatprep.subr.mxu0 0.0
  %1312 = vmatpush1.msra.mxu0 %v1296
  %1313 = vmatprep.subr.mxu0 0.0
  %1314 = vmatpush1.msra.mxu0 0.0
  %1315 = vmatprep.subr.mxu0 0.0
  %1316 = vmatpush1.msra.mxu0 0.0
  %1317 = vmatprep.subr.mxu0 0.0
  %1318 = vmatpush1.msra.mxu0 0.0
  %1319 = vmatprep.subr.mxu0 0.0
  %1320 = vmatpush1.msra.mxu0 0.0
  %1321 = vmatprep.subr.mxu0 0.0
  %1322 = vmatpush1.msra.mxu0 0.0
  %1323 = vmatprep.subr.mxu0 0.0
  %1324 = vmatpush1.msra.mxu0 0.0
  %1325 = vmatprep.subr.mxu0 0.0
  %1326 = vmatpush1.msra.mxu0 0.0
  %1327 = vmatprep.subr.mxu0 0.0
  %1328 = vmatpush1.msra.mxu0 0.0
  %1329 = vmatprep.subr.mxu0 0.0
  %1330 = vmatpush1.msra.mxu0 0.0
  %1331 = vmatprep.subr.mxu0 0.0
  %1332 = vmatpush1.msra.mxu0 0.0
  %1333 = vmatprep.subr.mxu0 0.0
  %1334 = vmatpush1.msra.mxu0 0.0
  %1335 = vmatprep.subr.mxu0 0.0
  %1336 = vmatpush1.msra.mxu0 0.0
  %1337 = vmatprep.subr.mxu0 0.0
  %1338 = vmatpush1.msra.mxu0 0.0
  %1339 = vmatprep.subr.mxu0 0.0
  %1340 = vmatpush1.msra.mxu0 0.0
  %1341 = vmatprep.subr.mxu0 0.0
  %1342 = vmatpush1.msra.mxu0 0.0
  %1343 = vmatprep.subr.mxu0 0.0
  %1344 = vmatpush1.msra.mxu0 0.0
  %1345 = vmatprep.subr.mxu0 0.0
  %1346 = vmatpush1.msra.mxu0 0.0
  %1347 = vmatprep.subr.mxu0 0.0
  %1348 = vmatpush1.msra.mxu0 0.0
  %1349 = vmatprep.subr.mxu0 0.0
  %1350 = vmatpush1.msra.mxu0 0.0
  %1351 = vmatprep.subr.mxu0 0.0
  %1352 = vmatpush1.msra.mxu0 0.0
  %1353 = vmatprep.subr.mxu0 0.0
  %1354 = vmatpush1.msra.mxu0 0.0
  %1355 = vmatprep.subr.mxu0 0.0
  %1356 = vmatpush1.msra.mxu0 0.0
  %1357 = vmatprep.subr.mxu0 0.0
  %1358 = vmatpush1.msra.mxu0 0.0
  %1359 = vmatprep.subr.mxu0 0.0
  %1360 = vmatpush1.msra.mxu0 0.0
  %1361 = vmatprep.subr.mxu0 0.0
  %1362 = vmatpush1.msra.mxu0 0.0
  %1363 = vmatprep.subr.mxu0 0.0
  %1364 = vmatpush1.msra.mxu0 0.0
  %1365 = vmatprep.subr.mxu0 0.0
  %1366 = vmatpush1.msra.mxu0 0.0
  %1367 = vmatprep.subr.mxu0 0.0
  %1368 = vmatpush1.msra.mxu0 0.0
  %1369 = vmatprep.mubr.f32.mxu0 0.0
  %1370 = vmatmul.mubr.f32.gmra.mrb[0].mxu0 %v28
  %v1371 = vpop.f32.mrb[0].mxu0
  %v1372 = vadd.f32 %v1303, %v1371
  %v1373 = vpop.f32.mrb[0].mxu0
  %1374 = vdwg.mxu0
  %s1375 = scalar_lea.vmem %s3, 120
  %1376 = vst.msk [vmem:[%s1375] sm:$0xff] %vm100, %v1372
  %s1377 = scalar_lea.vmem %s1, 512
  %v1378 = vld [vmem:[%s1377] sm:$0xff]
  %v1379 = vld [vmem:[%s1377 + $0x8] sm:$0xff]
  %v1380 = vld [vmem:[%s1377 + $0x10] sm:$0xff]
  %v1381 = vld [vmem:[%s1377 + $0x18] sm:$0xff]
  %s1382 = scalar_lea.vmem %s2, 16
  %v1383 = vld [vmem:[%s1382] sm:$0x1]
  %v1385 = vlaneseq
  %v1386 = vshrl.u32 %v1385, 7
  %v1387 = vsub.s32 0, %v1386
  %v1388 = vrot.slane %v1383, %v1387
  %1390 = vmatprep.subr.mxu0 0.0
  %1391 = vmatpush1.msra.mxu0 %v1378
  %1392 = vmatprep.subr.mxu0 0.0
  %1393 = vmatpush1.msra.mxu0 %v1379
  %1394 = vmatprep.subr.mxu0 0.0
  %1395 = vmatpush1.msra.mxu0 %v1380
  %1396 = vmatprep.subr.mxu0 0.0
  %1397 = vmatpush1.msra.mxu0 %v1381
  %1398 = vmatprep.subr.mxu0 0.0
  %1399 = vmatpush1.msra.mxu0 0.0
  %1400 = vmatprep.subr.mxu0 0.0
  %1401 = vmatpush1.msra.mxu0 0.0
  %1402 = vmatprep.subr.mxu0 0.0
  %1403 = vmatpush1.msra.mxu0 0.0
  %1404 = vmatprep.subr.mxu0 0.0
  %1405 = vmatpush1.msra.mxu0 0.0
  %1406 = vmatprep.subr.mxu0 0.0
  %1407 = vmatpush1.msra.mxu0 0.0
  %1408 = vmatprep.subr.mxu0 0.0
  %1409 = vmatpush1.msra.mxu0 0.0
  %1410 = vmatprep.subr.mxu0 0.0
  %1411 = vmatpush1.msra.mxu0 0.0
  %1412 = vmatprep.subr.mxu0 0.0
  %1413 = vmatpush1.msra.mxu0 0.0
  %1414 = vmatprep.subr.mxu0 0.0
  %1415 = vmatpush1.msra.mxu0 0.0
  %1416 = vmatprep.subr.mxu0 0.0
  %1417 = vmatpush1.msra.mxu0 0.0
  %1418 = vmatprep.subr.mxu0 0.0
  %1419 = vmatpush1.msra.mxu0 0.0
  %1420 = vmatprep.subr.mxu0 0.0
  %1421 = vmatpush1.msra.mxu0 0.0
  %1422 = vmatprep.subr.mxu0 0.0
  %1423 = vmatpush1.msra.mxu0 0.0
  %1424 = vmatprep.subr.mxu0 0.0
  %1425 = vmatpush1.msra.mxu0 0.0
  %1426 = vmatprep.subr.mxu0 0.0
  %1427 = vmatpush1.msra.mxu0 0.0
  %1428 = vmatprep.subr.mxu0 0.0
  %1429 = vmatpush1.msra.mxu0 0.0
  %1430 = vmatprep.subr.mxu0 0.0
  %1431 = vmatpush1.msra.mxu0 0.0
  %1432 = vmatprep.subr.mxu0 0.0
  %1433 = vmatpush1.msra.mxu0 0.0
  %1434 = vmatprep.subr.mxu0 0.0
  %1435 = vmatpush1.msra.mxu0 0.0
  %1436 = vmatprep.subr.mxu0 0.0
  %1437 = vmatpush1.msra.mxu0 0.0
  %1438 = vmatprep.subr.mxu0 0.0
  %1439 = vmatpush1.msra.mxu0 0.0
  %1440 = vmatprep.subr.mxu0 0.0
  %1441 = vmatpush1.msra.mxu0 0.0
  %1442 = vmatprep.subr.mxu0 0.0
  %1443 = vmatpush1.msra.mxu0 0.0
  %1444 = vmatprep.subr.mxu0 0.0
  %1445 = vmatpush1.msra.mxu0 0.0
  %1446 = vmatprep.subr.mxu0 0.0
  %1447 = vmatpush1.msra.mxu0 0.0
  %1448 = vmatprep.subr.mxu0 0.0
  %1449 = vmatpush1.msra.mxu0 0.0
  %1450 = vmatprep.subr.mxu0 0.0
  %1451 = vmatpush1.msra.mxu0 0.0
  %1452 = vmatprep.subr.mxu0 0.0
  %1453 = vmatpush1.msra.mxu0 0.0
  %1454 = vmatprep.mubr.f32.mxu0 0.0
  %1455 = vmatmul.mubr.f32.gmra.mrb[0].mxu0 %v28
  %v1456 = vpop.f32.mrb[0].mxu0
  %v1457 = vadd.f32 %v1388, %v1456
  %v1458 = vpop.f32.mrb[0].mxu0
  %1459 = vdwg.mxu0
  %s1460 = scalar_lea.vmem %s3, 128
  %1461 = vst.msk [vmem:[%s1460] sm:$0xff] %vm100, %v1457
  %s1462 = scalar_lea.vmem %s1, 544
  %v1463 = vld [vmem:[%s1462] sm:$0xff]
  %v1464 = vld [vmem:[%s1462 + $0x8] sm:$0xff]
  %v1465 = vld [vmem:[%s1462 + $0x10] sm:$0xff]
  %v1466 = vld [vmem:[%s1462 + $0x18] sm:$0xff]
  %s1467 = scalar_lea.vmem %s2, 17
  %v1468 = vld [vmem:[%s1467] sm:$0x1]
  %v1470 = vlaneseq
  %v1471 = vshrl.u32 %v1470, 7
  %v1472 = vsub.s32 0, %v1471
  %v1473 = vrot.slane %v1468, %v1472
  %1475 = vmatprep.subr.mxu0 0.0
  %1476 = vmatpush1.msra.mxu0 %v1463
  %1477 = vmatprep.subr.mxu0 0.0
  %1478 = vmatpush1.msra.mxu0 %v1464
  %1479 = vmatprep.subr.mxu0 0.0
  %1480 = vmatpush1.msra.mxu0 %v1465
  %1481 = vmatprep.subr.mxu0 0.0
  %1482 = vmatpush1.msra.mxu0 %v1466
  %1483 = vmatprep.subr.mxu0 0.0
  %1484 = vmatpush1.msra.mxu0 0.0
  %1485 = vmatprep.subr.mxu0 0.0
  %1486 = vmatpush1.msra.mxu0 0.0
  %1487 = vmatprep.subr.mxu0 0.0
  %1488 = vmatpush1.msra.mxu0 0.0
  %1489 = vmatprep.subr.mxu0 0.0
  %1490 = vmatpush1.msra.mxu0 0.0
  %1491 = vmatprep.subr.mxu0 0.0
  %1492 = vmatpush1.msra.mxu0 0.0
  %1493 = vmatprep.subr.mxu0 0.0
  %1494 = vmatpush1.msra.mxu0 0.0
  %1495 = vmatprep.subr.mxu0 0.0
  %1496 = vmatpush1.msra.mxu0 0.0
  %1497 = vmatprep.subr.mxu0 0.0
  %1498 = vmatpush1.msra.mxu0 0.0
  %1499 = vmatprep.subr.mxu0 0.0
  %1500 = vmatpush1.msra.mxu0 0.0
  %1501 = vmatprep.subr.mxu0 0.0
  %1502 = vmatpush1.msra.mxu0 0.0
  %1503 = vmatprep.subr.mxu0 0.0
  %1504 = vmatpush1.msra.mxu0 0.0
  %1505 = vmatprep.subr.mxu0 0.0
  %1506 = vmatpush1.msra.mxu0 0.0
  %1507 = vmatprep.subr.mxu0 0.0
  %1508 = vmatpush1.msra.mxu0 0.0
  %1509 = vmatprep.subr.mxu0 0.0
  %1510 = vmatpush1.msra.mxu0 0.0
  %1511 = vmatprep.subr.mxu0 0.0
  %1512 = vmatpush1.msra.mxu0 0.0
  %1513 = vmatprep.subr.mxu0 0.0
  %1514 = vmatpush1.msra.mxu0 0.0
  %1515 = vmatprep.subr.mxu0 0.0
  %1516 = vmatpush1.msra.mxu0 0.0
  %1517 = vmatprep.subr.mxu0 0.0
  %1518 = vmatpush1.msra.mxu0 0.0
  %1519 = vmatprep.subr.mxu0 0.0
  %1520 = vmatpush1.msra.mxu0 0.0
  %1521 = vmatprep.subr.mxu0 0.0
  %1522 = vmatpush1.msra.mxu0 0.0
  %1523 = vmatprep.subr.mxu0 0.0
  %1524 = vmatpush1.msra.mxu0 0.0
  %1525 = vmatprep.subr.mxu0 0.0
  %1526 = vmatpush1.msra.mxu0 0.0
  %1527 = vmatprep.subr.mxu0 0.0
  %1528 = vmatpush1.msra.mxu0 0.0
  %1529 = vmatprep.subr.mxu0 0.0
  %1530 = vmatpush1.msra.mxu0 0.0
  %1531 = vmatprep.subr.mxu0 0.0
  %1532 = vmatpush1.msra.mxu0 0.0
  %1533 = vmatprep.subr.mxu0 0.0
  %1534 = vmatpush1.msra.mxu0 0.0
  %1535 = vmatprep.subr.mxu0 0.0
  %1536 = vmatpush1.msra.mxu0 0.0
  %1537 = vmatprep.subr.mxu0 0.0
  %1538 = vmatpush1.msra.mxu0 0.0
  %1539 = vmatprep.mubr.f32.mxu0 0.0
  %1540 = vmatmul.mubr.f32.gmra.mrb[0].mxu0 %v28
  %v1541 = vpop.f32.mrb[0].mxu0
  %v1542 = vadd.f32 %v1473, %v1541
  %v1543 = vpop.f32.mrb[0].mxu0
  %1544 = vdwg.mxu0
  %s1545 = scalar_lea.vmem %s3, 136
  %1546 = vst.msk [vmem:[%s1545] sm:$0xff] %vm100, %v1542
  %s1547 = scalar_lea.vmem %s1, 576
  %v1548 = vld [vmem:[%s1547] sm:$0xff]
  %v1549 = vld [vmem:[%s1547 + $0x8] sm:$0xff]
  %v1550 = vld [vmem:[%s1547 + $0x10] sm:$0xff]
  %v1551 = vld [vmem:[%s1547 + $0x18] sm:$0xff]
  %s1552 = scalar_lea.vmem %s2, 18
  %v1553 = vld [vmem:[%s1552] sm:$0x1]
  %v1555 = vlaneseq
  %v1556 = vshrl.u32 %v1555, 7
  %v1557 = vsub.s32 0, %v1556
  %v1558 = vrot.slane %v1553, %v1557
  %1560 = vmatprep.subr.mxu0 0.0
  %1561 = vmatpush1.msra.mxu0 %v1548
  %1562 = vmatprep.subr.mxu0 0.0
  %1563 = vmatpush1.msra.mxu0 %v1549
  %1564 = vmatprep.subr.mxu0 0.0
  %1565 = vmatpush1.msra.mxu0 %v1550
  %1566 = vmatprep.subr.mxu0 0.0
  %1567 = vmatpush1.msra.mxu0 %v1551
  %1568 = vmatprep.subr.mxu0 0.0
  %1569 = vmatpush1.msra.mxu0 0.0
  %1570 = vmatprep.subr.mxu0 0.0
  %1571 = vmatpush1.msra.mxu0 0.0
  %1572 = vmatprep.subr.mxu0 0.0
  %1573 = vmatpush1.msra.mxu0 0.0
  %1574 = vmatprep.subr.mxu0 0.0
  %1575 = vmatpush1.msra.mxu0 0.0
  %1576 = vmatprep.subr.mxu0 0.0
  %1577 = vmatpush1.msra.mxu0 0.0
  %1578 = vmatprep.subr.mxu0 0.0
  %1579 = vmatpush1.msra.mxu0 0.0
  %1580 = vmatprep.subr.mxu0 0.0
  %1581 = vmatpush1.msra.mxu0 0.0
  %1582 = vmatprep.subr.mxu0 0.0
  %1583 = vmatpush1.msra.mxu0 0.0
  %1584 = vmatprep.subr.mxu0 0.0
  %1585 = vmatpush1.msra.mxu0 0.0
  %1586 = vmatprep.subr.mxu0 0.0
  %1587 = vmatpush1.msra.mxu0 0.0
  %1588 = vmatprep.subr.mxu0 0.0
  %1589 = vmatpush1.msra.mxu0 0.0
  %1590 = vmatprep.subr.mxu0 0.0
  %1591 = vmatpush1.msra.mxu0 0.0
  %1592 = vmatprep.subr.mxu0 0.0
  %1593 = vmatpush1.msra.mxu0 0.0
  %1594 = vmatprep.subr.mxu0 0.0
  %1595 = vmatpush1.msra.mxu0 0.0
  %1596 = vmatprep.subr.mxu0 0.0
  %1597 = vmatpush1.msra.mxu0 0.0
  %1598 = vmatprep.subr.mxu0 0.0
  %1599 = vmatpush1.msra.mxu0 0.0
  %1600 = vmatprep.subr.mxu0 0.0
  %1601 = vmatpush1.msra.mxu0 0.0
  %1602 = vmatprep.subr.mxu0 0.0
  %1603 = vmatpush1.msra.mxu0 0.0
  %1604 = vmatprep.subr.mxu0 0.0
  %1605 = vmatpush1.msra.mxu0 0.0
  %1606 = vmatprep.subr.mxu0 0.0
  %1607 = vmatpush1.msra.mxu0 0.0
  %1608 = vmatprep.subr.mxu0 0.0
  %1609 = vmatpush1.msra.mxu0 0.0
  %1610 = vmatprep.subr.mxu0 0.0
  %1611 = vmatpush1.msra.mxu0 0.0
  %1612 = vmatprep.subr.mxu0 0.0
  %1613 = vmatpush1.msra.mxu0 0.0
  %1614 = vmatprep.subr.mxu0 0.0
  %1615 = vmatpush1.msra.mxu0 0.0
  %1616 = vmatprep.subr.mxu0 0.0
  %1617 = vmatpush1.msra.mxu0 0.0
  %1618 = vmatprep.subr.mxu0 0.0
  %1619 = vmatpush1.msra.mxu0 0.0
  %1620 = vmatprep.subr.mxu0 0.0
  %1621 = vmatpush1.msra.mxu0 0.0
  %1622 = vmatprep.subr.mxu0 0.0
  %1623 = vmatpush1.msra.mxu0 0.0
  %1624 = vmatprep.mubr.f32.mxu0 0.0
  %1625 = vmatmul.mubr.f32.gmra.mrb[0].mxu0 %v28
  %v1626 = vpop.f32.mrb[0].mxu0
  %v1627 = vadd.f32 %v1558, %v1626
  %v1628 = vpop.f32.mrb[0].mxu0
  %1629 = vdwg.mxu0
  %s1630 = scalar_lea.vmem %s3, 144
  %1631 = vst.msk [vmem:[%s1630] sm:$0xff] %vm100, %v1627
  %s1632 = scalar_lea.vmem %s1, 608
  %v1633 = vld [vmem:[%s1632] sm:$0xff]
  %v1634 = vld [vmem:[%s1632 + $0x8] sm:$0xff]
  %v1635 = vld [vmem:[%s1632 + $0x10] sm:$0xff]
  %v1636 = vld [vmem:[%s1632 + $0x18] sm:$0xff]
  %s1637 = scalar_lea.vmem %s2, 19
  %v1638 = vld [vmem:[%s1637] sm:$0x1]
  %v1640 = vlaneseq
  %v1641 = vshrl.u32 %v1640, 7
  %v1642 = vsub.s32 0, %v1641
  %v1643 = vrot.slane %v1638, %v1642
  %1645 = vmatprep.subr.mxu0 0.0
  %1646 = vmatpush1.msra.mxu0 %v1633
  %1647 = vmatprep.subr.mxu0 0.0
  %1648 = vmatpush1.msra.mxu0 %v1634
  %1649 = vmatprep.subr.mxu0 0.0
  %1650 = vmatpush1.msra.mxu0 %v1635
  %1651 = vmatprep.subr.mxu0 0.0
  %1652 = vmatpush1.msra.mxu0 %v1636
  %1653 = vmatprep.subr.mxu0 0.0
  %1654 = vmatpush1.msra.mxu0 0.0
  %1655 = vmatprep.subr.mxu0 0.0
  %1656 = vmatpush1.msra.mxu0 0.0
  %1657 = vmatprep.subr.mxu0 0.0
  %1658 = vmatpush1.msra.mxu0 0.0
  %1659 = vmatprep.subr.mxu0 0.0
  %1660 = vmatpush1.msra.mxu0 0.0
  %1661 = vmatprep.subr.mxu0 0.0
  %1662 = vmatpush1.msra.mxu0 0.0
  %1663 = vmatprep.subr.mxu0 0.0
  %1664 = vmatpush1.msra.mxu0 0.0
  %1665 = vmatprep.subr.mxu0 0.0
  %1666 = vmatpush1.msra.mxu0 0.0
  %1667 = vmatprep.subr.mxu0 0.0
  %1668 = vmatpush1.msra.mxu0 0.0
  %1669 = vmatprep.subr.mxu0 0.0
  %1670 = vmatpush1.msra.mxu0 0.0
  %1671 = vmatprep.subr.mxu0 0.0
  %1672 = vmatpush1.msra.mxu0 0.0
  %1673 = vmatprep.subr.mxu0 0.0
  %1674 = vmatpush1.msra.mxu0 0.0
  %1675 = vmatprep.subr.mxu0 0.0
  %1676 = vmatpush1.msra.mxu0 0.0
  %1677 = vmatprep.subr.mxu0 0.0
  %1678 = vmatpush1.msra.mxu0 0.0
  %1679 = vmatprep.subr.mxu0 0.0
  %1680 = vmatpush1.msra.mxu0 0.0
  %1681 = vmatprep.subr.mxu0 0.0
  %1682 = vmatpush1.msra.mxu0 0.0
  %1683 = vmatprep.subr.mxu0 0.0
  %1684 = vmatpush1.msra.mxu0 0.0
  %1685 = vmatprep.subr.mxu0 0.0
  %1686 = vmatpush1.msra.mxu0 0.0
  %1687 = vmatprep.subr.mxu0 0.0
  %1688 = vmatpush1.msra.mxu0 0.0
  %1689 = vmatprep.subr.mxu0 0.0
  %1690 = vmatpush1.msra.mxu0 0.0
  %1691 = vmatprep.subr.mxu0 0.0
  %1692 = vmatpush1.msra.mxu0 0.0
  %1693 = vmatprep.subr.mxu0 0.0
  %1694 = vmatpush1.msra.mxu0 0.0
  %1695 = vmatprep.subr.mxu0 0.0
  %1696 = vmatpush1.msra.mxu0 0.0
  %1697 = vmatprep.subr.mxu0 0.0
  %1698 = vmatpush1.msra.mxu0 0.0
  %1699 = vmatprep.subr.mxu0 0.0
  %1700 = vmatpush1.msra.mxu0 0.0
  %1701 = vmatprep.subr.mxu0 0.0
  %1702 = vmatpush1.msra.mxu0 0.0
  %1703 = vmatprep.subr.mxu0 0.0
  %1704 = vmatpush1.msra.mxu0 0.0
  %1705 = vmatprep.subr.mxu0 0.0
  %1706 = vmatpush1.msra.mxu0 0.0
  %1707 = vmatprep.subr.mxu0 0.0
  %1708 = vmatpush1.msra.mxu0 0.0
  %1709 = vmatprep.mubr.f32.mxu0 0.0
  %1710 = vmatmul.mubr.f32.gmra.mrb[0].mxu0 %v28
  %v1711 = vpop.f32.mrb[0].mxu0
  %v1712 = vadd.f32 %v1643, %v1711
  %v1713 = vpop.f32.mrb[0].mxu0
  %1714 = vdwg.mxu0
  %s1715 = scalar_lea.vmem %s3, 152
  %1716 = vst.msk [vmem:[%s1715] sm:$0xff] %vm100, %v1712
  %s1717 = scalar_lea.vmem %s1, 640
  %v1718 = vld [vmem:[%s1717] sm:$0xff]
  %v1719 = vld [vmem:[%s1717 + $0x8] sm:$0xff]
  %v1720 = vld [vmem:[%s1717 + $0x10] sm:$0xff]
  %v1721 = vld [vmem:[%s1717 + $0x18] sm:$0xff]
  %s1722 = scalar_lea.vmem %s2, 20
  %v1723 = vld [vmem:[%s1722] sm:$0x1]
  %v1725 = vlaneseq
  %v1726 = vshrl.u32 %v1725, 7
  %v1727 = vsub.s32 0, %v1726
  %v1728 = vrot.slane %v1723, %v1727
  %1730 = vmatprep.subr.mxu0 0.0
  %1731 = vmatpush1.msra.mxu0 %v1718
  %1732 = vmatprep.subr.mxu0 0.0
  %1733 = vmatpush1.msra.mxu0 %v1719
  %1734 = vmatprep.subr.mxu0 0.0
  %1735 = vmatpush1.msra.mxu0 %v1720
  %1736 = vmatprep.subr.mxu0 0.0
  %1737 = vmatpush1.msra.mxu0 %v1721
  %1738 = vmatprep.subr.mxu0 0.0
  %1739 = vmatpush1.msra.mxu0 0.0
  %1740 = vmatprep.subr.mxu0 0.0
  %1741 = vmatpush1.msra.mxu0 0.0
  %1742 = vmatprep.subr.mxu0 0.0
  %1743 = vmatpush1.msra.mxu0 0.0
  %1744 = vmatprep.subr.mxu0 0.0
  %1745 = vmatpush1.msra.mxu0 0.0
  %1746 = vmatprep.subr.mxu0 0.0
  %1747 = vmatpush1.msra.mxu0 0.0
  %1748 = vmatprep.subr.mxu0 0.0
  %1749 = vmatpush1.msra.mxu0 0.0
  %1750 = vmatprep.subr.mxu0 0.0
  %1751 = vmatpush1.msra.mxu0 0.0
  %1752 = vmatprep.subr.mxu0 0.0
  %1753 = vmatpush1.msra.mxu0 0.0
  %1754 = vmatprep.subr.mxu0 0.0
  %1755 = vmatpush1.msra.mxu0 0.0
  %1756 = vmatprep.subr.mxu0 0.0
  %1757 = vmatpush1.msra.mxu0 0.0
  %1758 = vmatprep.subr.mxu0 0.0
  %1759 = vmatpush1.msra.mxu0 0.0
  %1760 = vmatprep.subr.mxu0 0.0
  %1761 = vmatpush1.msra.mxu0 0.0
  %1762 = vmatprep.subr.mxu0 0.0
  %1763 = vmatpush1.msra.mxu0 0.0
  %1764 = vmatprep.subr.mxu0 0.0
  %1765 = vmatpush1.msra.mxu0 0.0
  %1766 = vmatprep.subr.mxu0 0.0
  %1767 = vmatpush1.msra.mxu0 0.0
  %1768 = vmatprep.subr.mxu0 0.0
  %1769 = vmatpush1.msra.mxu0 0.0
  %1770 = vmatprep.subr.mxu0 0.0
  %1771 = vmatpush1.msra.mxu0 0.0
  %1772 = vmatprep.subr.mxu0 0.0
  %1773 = vmatpush1.msra.mxu0 0.0
  %1774 = vmatprep.subr.mxu0 0.0
  %1775 = vmatpush1.msra.mxu0 0.0
  %1776 = vmatprep.subr.mxu0 0.0
  %1777 = vmatpush1.msra.mxu0 0.0
  %1778 = vmatprep.subr.mxu0 0.0
  %1779 = vmatpush1.msra.mxu0 0.0
  %1780 = vmatprep.subr.mxu0 0.0
  %1781 = vmatpush1.msra.mxu0 0.0
  %1782 = vmatprep.subr.mxu0 0.0
  %1783 = vmatpush1.msra.mxu0 0.0
  %1784 = vmatprep.subr.mxu0 0.0
  %1785 = vmatpush1.msra.mxu0 0.0
  %1786 = vmatprep.subr.mxu0 0.0
  %1787 = vmatpush1.msra.mxu0 0.0
  %1788 = vmatprep.subr.mxu0 0.0
  %1789 = vmatpush1.msra.mxu0 0.0
  %1790 = vmatprep.subr.mxu0 0.0
  %1791 = vmatpush1.msra.mxu0 0.0
  %1792 = vmatprep.subr.mxu0 0.0
  %1793 = vmatpush1.msra.mxu0 0.0
  %1794 = vmatprep.mubr.f32.mxu0 0.0
  %1795 = vmatmul.mubr.f32.gmra.mrb[0].mxu0 %v28
  %v1796 = vpop.f32.mrb[0].mxu0
  %v1797 = vadd.f32 %v1728, %v1796
  %v1798 = vpop.f32.mrb[0].mxu0
  %1799 = vdwg.mxu0
  %s1800 = scalar_lea.vmem %s3, 160
  %1801 = vst.msk [vmem:[%s1800] sm:$0xff] %vm100, %v1797
  %s1802 = scalar_lea.vmem %s1, 672
  %v1803 = vld [vmem:[%s1802] sm:$0xff]
  %v1804 = vld [vmem:[%s1802 + $0x8] sm:$0xff]
  %v1805 = vld [vmem:[%s1802 + $0x10] sm:$0xff]
  %v1806 = vld [vmem:[%s1802 + $0x18] sm:$0xff]
  %s1807 = scalar_lea.vmem %s2, 21
  %v1808 = vld [vmem:[%s1807] sm:$0x1]
  %v1810 = vlaneseq
  %v1811 = vshrl.u32 %v1810, 7
  %v1812 = vsub.s32 0, %v1811
  %v1813 = vrot.slane %v1808, %v1812
  %1815 = vmatprep.subr.mxu0 0.0
  %1816 = vmatpush1.msra.mxu0 %v1803
  %1817 = vmatprep.subr.mxu0 0.0
  %1818 = vmatpush1.msra.mxu0 %v1804
  %1819 = vmatprep.subr.mxu0 0.0
  %1820 = vmatpush1.msra.mxu0 %v1805
  %1821 = vmatprep.subr.mxu0 0.0
  %1822 = vmatpush1.msra.mxu0 %v1806
  %1823 = vmatprep.subr.mxu0 0.0
  %1824 = vmatpush1.msra.mxu0 0.0
  %1825 = vmatprep.subr.mxu0 0.0
  %1826 = vmatpush1.msra.mxu0 0.0
  %1827 = vmatprep.subr.mxu0 0.0
  %1828 = vmatpush1.msra.mxu0 0.0
  %1829 = vmatprep.subr.mxu0 0.0
  %1830 = vmatpush1.msra.mxu0 0.0
  %1831 = vmatprep.subr.mxu0 0.0
  %1832 = vmatpush1.msra.mxu0 0.0
  %1833 = vmatprep.subr.mxu0 0.0
  %1834 = vmatpush1.msra.mxu0 0.0
  %1835 = vmatprep.subr.mxu0 0.0
  %1836 = vmatpush1.msra.mxu0 0.0
  %1837 = vmatprep.subr.mxu0 0.0
  %1838 = vmatpush1.msra.mxu0 0.0
  %1839 = vmatprep.subr.mxu0 0.0
  %1840 = vmatpush1.msra.mxu0 0.0
  %1841 = vmatprep.subr.mxu0 0.0
  %1842 = vmatpush1.msra.mxu0 0.0
  %1843 = vmatprep.subr.mxu0 0.0
  %1844 = vmatpush1.msra.mxu0 0.0
  %1845 = vmatprep.subr.mxu0 0.0
  %1846 = vmatpush1.msra.mxu0 0.0
  %1847 = vmatprep.subr.mxu0 0.0
  %1848 = vmatpush1.msra.mxu0 0.0
  %1849 = vmatprep.subr.mxu0 0.0
  %1850 = vmatpush1.msra.mxu0 0.0
  %1851 = vmatprep.subr.mxu0 0.0
  %1852 = vmatpush1.msra.mxu0 0.0
  %1853 = vmatprep.subr.mxu0 0.0
  %1854 = vmatpush1.msra.mxu0 0.0
  %1855 = vmatprep.subr.mxu0 0.0
  %1856 = vmatpush1.msra.mxu0 0.0
  %1857 = vmatprep.subr.mxu0 0.0
  %1858 = vmatpush1.msra.mxu0 0.0
  %1859 = vmatprep.subr.mxu0 0.0
  %1860 = vmatpush1.msra.mxu0 0.0
  %1861 = vmatprep.subr.mxu0 0.0
  %1862 = vmatpush1.msra.mxu0 0.0
  %1863 = vmatprep.subr.mxu0 0.0
  %1864 = vmatpush1.msra.mxu0 0.0
  %1865 = vmatprep.subr.mxu0 0.0
  %1866 = vmatpush1.msra.mxu0 0.0
  %1867 = vmatprep.subr.mxu0 0.0
  %1868 = vmatpush1.msra.mxu0 0.0
  %1869 = vmatprep.subr.mxu0 0.0
  %1870 = vmatpush1.msra.mxu0 0.0
  %1871 = vmatprep.subr.mxu0 0.0
  %1872 = vmatpush1.msra.mxu0 0.0
  %1873 = vmatprep.subr.mxu0 0.0
  %1874 = vmatpush1.msra.mxu0 0.0
  %1875 = vmatprep.subr.mxu0 0.0
  %1876 = vmatpush1.msra.mxu0 0.0
  %1877 = vmatprep.subr.mxu0 0.0
  %1878 = vmatpush1.msra.mxu0 0.0
  %1879 = vmatprep.mubr.f32.mxu0 0.0
  %1880 = vmatmul.mubr.f32.gmra.mrb[0].mxu0 %v28
  %v1881 = vpop.f32.mrb[0].mxu0
  %v1882 = vadd.f32 %v1813, %v1881
  %v1883 = vpop.f32.mrb[0].mxu0
  %1884 = vdwg.mxu0
  %s1885 = scalar_lea.vmem %s3, 168
  %1886 = vst.msk [vmem:[%s1885] sm:$0xff] %vm100, %v1882
  %s1887 = scalar_lea.vmem %s1, 704
  %v1888 = vld [vmem:[%s1887] sm:$0xff]
  %v1889 = vld [vmem:[%s1887 + $0x8] sm:$0xff]
  %v1890 = vld [vmem:[%s1887 + $0x10] sm:$0xff]
  %v1891 = vld [vmem:[%s1887 + $0x18] sm:$0xff]
  %s1892 = scalar_lea.vmem %s2, 22
  %v1893 = vld [vmem:[%s1892] sm:$0x1]
  %v1895 = vlaneseq
  %v1896 = vshrl.u32 %v1895, 7
  %v1897 = vsub.s32 0, %v1896
  %v1898 = vrot.slane %v1893, %v1897
  %1900 = vmatprep.subr.mxu0 0.0
  %1901 = vmatpush1.msra.mxu0 %v1888
  %1902 = vmatprep.subr.mxu0 0.0
  %1903 = vmatpush1.msra.mxu0 %v1889
  %1904 = vmatprep.subr.mxu0 0.0
  %1905 = vmatpush1.msra.mxu0 %v1890
  %1906 = vmatprep.subr.mxu0 0.0
  %1907 = vmatpush1.msra.mxu0 %v1891
  %1908 = vmatprep.subr.mxu0 0.0
  %1909 = vmatpush1.msra.mxu0 0.0
  %1910 = vmatprep.subr.mxu0 0.0
  %1911 = vmatpush1.msra.mxu0 0.0
  %1912 = vmatprep.subr.mxu0 0.0
  %1913 = vmatpush1.msra.mxu0 0.0
  %1914 = vmatprep.subr.mxu0 0.0
  %1915 = vmatpush1.msra.mxu0 0.0
  %1916 = vmatprep.subr.mxu0 0.0
  %1917 = vmatpush1.msra.mxu0 0.0
  %1918 = vmatprep.subr.mxu0 0.0
  %1919 = vmatpush1.msra.mxu0 0.0
  %1920 = vmatprep.subr.mxu0 0.0
  %1921 = vmatpush1.msra.mxu0 0.0
  %1922 = vmatprep.subr.mxu0 0.0
  %1923 = vmatpush1.msra.mxu0 0.0
  %1924 = vmatprep.subr.mxu0 0.0
  %1925 = vmatpush1.msra.mxu0 0.0
  %1926 = vmatprep.subr.mxu0 0.0
  %1927 = vmatpush1.msra.mxu0 0.0
  %1928 = vmatprep.subr.mxu0 0.0
  %1929 = vmatpush1.msra.mxu0 0.0
  %1930 = vmatprep.subr.mxu0 0.0
  %1931 = vmatpush1.msra.mxu0 0.0
  %1932 = vmatprep.subr.mxu0 0.0
  %1933 = vmatpush1.msra.mxu0 0.0
  %1934 = vmatprep.subr.mxu0 0.0
  %1935 = vmatpush1.msra.mxu0 0.0
  %1936 = vmatprep.subr.mxu0 0.0
  %1937 = vmatpush1.msra.mxu0 0.0
  %1938 = vmatprep.subr.mxu0 0.0
  %1939 = vmatpush1.msra.mxu0 0.0
  %1940 = vmatprep.subr.mxu0 0.0
  %1941 = vmatpush1.msra.mxu0 0.0
  %1942 = vmatprep.subr.mxu0 0.0
  %1943 = vmatpush1.msra.mxu0 0.0
  %1944 = vmatprep.subr.mxu0 0.0
  %1945 = vmatpush1.msra.mxu0 0.0
  %1946 = vmatprep.subr.mxu0 0.0
  %1947 = vmatpush1.msra.mxu0 0.0
  %1948 = vmatprep.subr.mxu0 0.0
  %1949 = vmatpush1.msra.mxu0 0.0
  %1950 = vmatprep.subr.mxu0 0.0
  %1951 = vmatpush1.msra.mxu0 0.0
  %1952 = vmatprep.subr.mxu0 0.0
  %1953 = vmatpush1.msra.mxu0 0.0
  %1954 = vmatprep.subr.mxu0 0.0
  %1955 = vmatpush1.msra.mxu0 0.0
  %1956 = vmatprep.subr.mxu0 0.0
  %1957 = vmatpush1.msra.mxu0 0.0
  %1958 = vmatprep.subr.mxu0 0.0
  %1959 = vmatpush1.msra.mxu0 0.0
  %1960 = vmatprep.subr.mxu0 0.0
  %1961 = vmatpush1.msra.mxu0 0.0
  %1962 = vmatprep.subr.mxu0 0.0
  %1963 = vmatpush1.msra.mxu0 0.0
  %1964 = vmatprep.mubr.f32.mxu0 0.0
  %1965 = vmatmul.mubr.f32.gmra.mrb[0].mxu0 %v28
  %v1966 = vpop.f32.mrb[0].mxu0
  %v1967 = vadd.f32 %v1898, %v1966
  %v1968 = vpop.f32.mrb[0].mxu0
  %1969 = vdwg.mxu0
  %s1970 = scalar_lea.vmem %s3, 176
  %1971 = vst.msk [vmem:[%s1970] sm:$0xff] %vm100, %v1967
  %s1972 = scalar_lea.vmem %s1, 736
  %v1973 = vld [vmem:[%s1972] sm:$0xff]
  %v1974 = vld [vmem:[%s1972 + $0x8] sm:$0xff]
  %v1975 = vld [vmem:[%s1972 + $0x10] sm:$0xff]
  %v1976 = vld [vmem:[%s1972 + $0x18] sm:$0xff]
  %s1977 = scalar_lea.vmem %s2, 23
  %v1978 = vld [vmem:[%s1977] sm:$0x1]
  %v1980 = vlaneseq
  %v1981 = vshrl.u32 %v1980, 7
  %v1982 = vsub.s32 0, %v1981
  %v1983 = vrot.slane %v1978, %v1982
  %1985 = vmatprep.subr.mxu0 0.0
  %1986 = vmatpush1.msra.mxu0 %v1973
  %1987 = vmatprep.subr.mxu0 0.0
  %1988 = vmatpush1.msra.mxu0 %v1974
  %1989 = vmatprep.subr.mxu0 0.0
  %1990 = vmatpush1.msra.mxu0 %v1975
  %1991 = vmatprep.subr.mxu0 0.0
  %1992 = vmatpush1.msra.mxu0 %v1976
  %1993 = vmatprep.subr.mxu0 0.0
  %1994 = vmatpush1.msra.mxu0 0.0
  %1995 = vmatprep.subr.mxu0 0.0
  %1996 = vmatpush1.msra.mxu0 0.0
  %1997 = vmatprep.subr.mxu0 0.0
  %1998 = vmatpush1.msra.mxu0 0.0
  %1999 = vmatprep.subr.mxu0 0.0
  %2000 = vmatpush1.msra.mxu0 0.0
  %2001 = vmatprep.subr.mxu0 0.0
  %2002 = vmatpush1.msra.mxu0 0.0
  %2003 = vmatprep.subr.mxu0 0.0
  %2004 = vmatpush1.msra.mxu0 0.0
  %2005 = vmatprep.subr.mxu0 0.0
  %2006 = vmatpush1.msra.mxu0 0.0
  %2007 = vmatprep.subr.mxu0 0.0
  %2008 = vmatpush1.msra.mxu0 0.0
  %2009 = vmatprep.subr.mxu0 0.0
  %2010 = vmatpush1.msra.mxu0 0.0
  %2011 = vmatprep.subr.mxu0 0.0
  %2012 = vmatpush1.msra.mxu0 0.0
  %2013 = vmatprep.subr.mxu0 0.0
  %2014 = vmatpush1.msra.mxu0 0.0
  %2015 = vmatprep.subr.mxu0 0.0
  %2016 = vmatpush1.msra.mxu0 0.0
  %2017 = vmatprep.subr.mxu0 0.0
  %2018 = vmatpush1.msra.mxu0 0.0
  %2019 = vmatprep.subr.mxu0 0.0
  %2020 = vmatpush1.msra.mxu0 0.0
  %2021 = vmatprep.subr.mxu0 0.0
  %2022 = vmatpush1.msra.mxu0 0.0
  %2023 = vmatprep.subr.mxu0 0.0
  %2024 = vmatpush1.msra.mxu0 0.0
  %2025 = vmatprep.subr.mxu0 0.0
  %2026 = vmatpush1.msra.mxu0 0.0
  %2027 = vmatprep.subr.mxu0 0.0
  %2028 = vmatpush1.msra.mxu0 0.0
  %2029 = vmatprep.subr.mxu0 0.0
  %2030 = vmatpush1.msra.mxu0 0.0
  %2031 = vmatprep.subr.mxu0 0.0
  %2032 = vmatpush1.msra.mxu0 0.0
  %2033 = vmatprep.subr.mxu0 0.0
  %2034 = vmatpush1.msra.mxu0 0.0
  %2035 = vmatprep.subr.mxu0 0.0
  %2036 = vmatpush1.msra.mxu0 0.0
  %2037 = vmatprep.subr.mxu0 0.0
  %2038 = vmatpush1.msra.mxu0 0.0
  %2039 = vmatprep.subr.mxu0 0.0
  %2040 = vmatpush1.msra.mxu0 0.0
  %2041 = vmatprep.subr.mxu0 0.0
  %2042 = vmatpush1.msra.mxu0 0.0
  %2043 = vmatprep.subr.mxu0 0.0
  %2044 = vmatpush1.msra.mxu0 0.0
  %2045 = vmatprep.subr.mxu0 0.0
  %2046 = vmatpush1.msra.mxu0 0.0
  %2047 = vmatprep.subr.mxu0 0.0
  %2048 = vmatpush1.msra.mxu0 0.0
  %2049 = vmatprep.mubr.f32.mxu0 0.0
  %2050 = vmatmul.mubr.f32.gmra.mrb[0].mxu0 %v28
  %v2051 = vpop.f32.mrb[0].mxu0
  %v2052 = vadd.f32 %v1983, %v2051
  %v2053 = vpop.f32.mrb[0].mxu0
  %2054 = vdwg.mxu0
  %s2055 = scalar_lea.vmem %s3, 184
  %2056 = vst.msk [vmem:[%s2055] sm:$0xff] %vm100, %v2052
  %s2057 = scalar_lea.vmem %s1, 768
  %v2058 = vld [vmem:[%s2057] sm:$0xff]
  %v2059 = vld [vmem:[%s2057 + $0x8] sm:$0xff]
  %v2060 = vld [vmem:[%s2057 + $0x10] sm:$0xff]
  %v2061 = vld [vmem:[%s2057 + $0x18] sm:$0xff]
  %s2062 = scalar_lea.vmem %s2, 24
  %v2063 = vld [vmem:[%s2062] sm:$0x1]
  %v2065 = vlaneseq
  %v2066 = vshrl.u32 %v2065, 7
  %v2067 = vsub.s32 0, %v2066
  %v2068 = vrot.slane %v2063, %v2067
  %2070 = vmatprep.subr.mxu0 0.0
  %2071 = vmatpush1.msra.mxu0 %v2058
  %2072 = vmatprep.subr.mxu0 0.0
  %2073 = vmatpush1.msra.mxu0 %v2059
  %2074 = vmatprep.subr.mxu0 0.0
  %2075 = vmatpush1.msra.mxu0 %v2060
  %2076 = vmatprep.subr.mxu0 0.0
  %2077 = vmatpush1.msra.mxu0 %v2061
  %2078 = vmatprep.subr.mxu0 0.0
  %2079 = vmatpush1.msra.mxu0 0.0
  %2080 = vmatprep.subr.mxu0 0.0
  %2081 = vmatpush1.msra.mxu0 0.0
  %2082 = vmatprep.subr.mxu0 0.0
  %2083 = vmatpush1.msra.mxu0 0.0
  %2084 = vmatprep.subr.mxu0 0.0
  %2085 = vmatpush1.msra.mxu0 0.0
  %2086 = vmatprep.subr.mxu0 0.0
  %2087 = vmatpush1.msra.mxu0 0.0
  %2088 = vmatprep.subr.mxu0 0.0
  %2089 = vmatpush1.msra.mxu0 0.0
  %2090 = vmatprep.subr.mxu0 0.0
  %2091 = vmatpush1.msra.mxu0 0.0
  %2092 = vmatprep.subr.mxu0 0.0
  %2093 = vmatpush1.msra.mxu0 0.0
  %2094 = vmatprep.subr.mxu0 0.0
  %2095 = vmatpush1.msra.mxu0 0.0
  %2096 = vmatprep.subr.mxu0 0.0
  %2097 = vmatpush1.msra.mxu0 0.0
  %2098 = vmatprep.subr.mxu0 0.0
  %2099 = vmatpush1.msra.mxu0 0.0
  %2100 = vmatprep.subr.mxu0 0.0
  %2101 = vmatpush1.msra.mxu0 0.0
  %2102 = vmatprep.subr.mxu0 0.0
  %2103 = vmatpush1.msra.mxu0 0.0
  %2104 = vmatprep.subr.mxu0 0.0
  %2105 = vmatpush1.msra.mxu0 0.0
  %2106 = vmatprep.subr.mxu0 0.0
  %2107 = vmatpush1.msra.mxu0 0.0
  %2108 = vmatprep.subr.mxu0 0.0
  %2109 = vmatpush1.msra.mxu0 0.0
  %2110 = vmatprep.subr.mxu0 0.0
  %2111 = vmatpush1.msra.mxu0 0.0
  %2112 = vmatprep.subr.mxu0 0.0
  %2113 = vmatpush1.msra.mxu0 0.0
  %2114 = vmatprep.subr.mxu0 0.0
  %2115 = vmatpush1.msra.mxu0 0.0
  %2116 = vmatprep.subr.mxu0 0.0
  %2117 = vmatpush1.msra.mxu0 0.0
  %2118 = vmatprep.subr.mxu0 0.0
  %2119 = vmatpush1.msra.mxu0 0.0
  %2120 = vmatprep.subr.mxu0 0.0
  %2121 = vmatpush1.msra.mxu0 0.0
  %2122 = vmatprep.subr.mxu0 0.0
  %2123 = vmatpush1.msra.mxu0 0.0
  %2124 = vmatprep.subr.mxu0 0.0
  %2125 = vmatpush1.msra.mxu0 0.0
  %2126 = vmatprep.subr.mxu0 0.0
  %2127 = vmatpush1.msra.mxu0 0.0
  %2128 = vmatprep.subr.mxu0 0.0
  %2129 = vmatpush1.msra.mxu0 0.0
  %2130 = vmatprep.subr.mxu0 0.0
  %2131 = vmatpush1.msra.mxu0 0.0
  %2132 = vmatprep.subr.mxu0 0.0
  %2133 = vmatpush1.msra.mxu0 0.0
  %2134 = vmatprep.mubr.f32.mxu0 0.0
  %2135 = vmatmul.mubr.f32.gmra.mrb[0].mxu0 %v28
  %v2136 = vpop.f32.mrb[0].mxu0
  %v2137 = vadd.f32 %v2068, %v2136
  %v2138 = vpop.f32.mrb[0].mxu0
  %2139 = vdwg.mxu0
  %s2140 = scalar_lea.vmem %s3, 192
  %2141 = vst.msk [vmem:[%s2140] sm:$0xff] %vm100, %v2137
  %s2142 = scalar_lea.vmem %s1, 800
  %v2143 = vld [vmem:[%s2142] sm:$0xff]
  %v2144 = vld [vmem:[%s2142 + $0x8] sm:$0xff]
  %v2145 = vld [vmem:[%s2142 + $0x10] sm:$0xff]
  %v2146 = vld [vmem:[%s2142 + $0x18] sm:$0xff]
  %s2147 = scalar_lea.vmem %s2, 25
  %v2148 = vld [vmem:[%s2147] sm:$0x1]
  %v2150 = vlaneseq
  %v2151 = vshrl.u32 %v2150, 7
  %v2152 = vsub.s32 0, %v2151
  %v2153 = vrot.slane %v2148, %v2152
  %2155 = vmatprep.subr.mxu0 0.0
  %2156 = vmatpush1.msra.mxu0 %v2143
  %2157 = vmatprep.subr.mxu0 0.0
  %2158 = vmatpush1.msra.mxu0 %v2144
  %2159 = vmatprep.subr.mxu0 0.0
  %2160 = vmatpush1.msra.mxu0 %v2145
  %2161 = vmatprep.subr.mxu0 0.0
  %2162 = vmatpush1.msra.mxu0 %v2146
  %2163 = vmatprep.subr.mxu0 0.0
  %2164 = vmatpush1.msra.mxu0 0.0
  %2165 = vmatprep.subr.mxu0 0.0
  %2166 = vmatpush1.msra.mxu0 0.0
  %2167 = vmatprep.subr.mxu0 0.0
  %2168 = vmatpush1.msra.mxu0 0.0
  %2169 = vmatprep.subr.mxu0 0.0
  %2170 = vmatpush1.msra.mxu0 0.0
  %2171 = vmatprep.subr.mxu0 0.0
  %2172 = vmatpush1.msra.mxu0 0.0
  %2173 = vmatprep.subr.mxu0 0.0
  %2174 = vmatpush1.msra.mxu0 0.0
  %2175 = vmatprep.subr.mxu0 0.0
  %2176 = vmatpush1.msra.mxu0 0.0
  %2177 = vmatprep.subr.mxu0 0.0
  %2178 = vmatpush1.msra.mxu0 0.0
  %2179 = vmatprep.subr.mxu0 0.0
  %2180 = vmatpush1.msra.mxu0 0.0
  %2181 = vmatprep.subr.mxu0 0.0
  %2182 = vmatpush1.msra.mxu0 0.0
  %2183 = vmatprep.subr.mxu0 0.0
  %2184 = vmatpush1.msra.mxu0 0.0
  %2185 = vmatprep.subr.mxu0 0.0
  %2186 = vmatpush1.msra.mxu0 0.0
  %2187 = vmatprep.subr.mxu0 0.0
  %2188 = vmatpush1.msra.mxu0 0.0
  %2189 = vmatprep.subr.mxu0 0.0
  %2190 = vmatpush1.msra.mxu0 0.0
  %2191 = vmatprep.subr.mxu0 0.0
  %2192 = vmatpush1.msra.mxu0 0.0
  %2193 = vmatprep.subr.mxu0 0.0
  %2194 = vmatpush1.msra.mxu0 0.0
  %2195 = vmatprep.subr.mxu0 0.0
  %2196 = vmatpush1.msra.mxu0 0.0
  %2197 = vmatprep.subr.mxu0 0.0
  %2198 = vmatpush1.msra.mxu0 0.0
  %2199 = vmatprep.subr.mxu0 0.0
  %2200 = vmatpush1.msra.mxu0 0.0
  %2201 = vmatprep.subr.mxu0 0.0
  %2202 = vmatpush1.msra.mxu0 0.0
  %2203 = vmatprep.subr.mxu0 0.0
  %2204 = vmatpush1.msra.mxu0 0.0
  %2205 = vmatprep.subr.mxu0 0.0
  %2206 = vmatpush1.msra.mxu0 0.0
  %2207 = vmatprep.subr.mxu0 0.0
  %2208 = vmatpush1.msra.mxu0 0.0
  %2209 = vmatprep.subr.mxu0 0.0
  %2210 = vmatpush1.msra.mxu0 0.0
  %2211 = vmatprep.subr.mxu0 0.0
  %2212 = vmatpush1.msra.mxu0 0.0
  %2213 = vmatprep.subr.mxu0 0.0
  %2214 = vmatpush1.msra.mxu0 0.0
  %2215 = vmatprep.subr.mxu0 0.0
  %2216 = vmatpush1.msra.mxu0 0.0
  %2217 = vmatprep.subr.mxu0 0.0
  %2218 = vmatpush1.msra.mxu0 0.0
  %2219 = vmatprep.mubr.f32.mxu0 0.0
  %2220 = vmatmul.mubr.f32.gmra.mrb[0].mxu0 %v28
  %v2221 = vpop.f32.mrb[0].mxu0
  %v2222 = vadd.f32 %v2153, %v2221
  %v2223 = vpop.f32.mrb[0].mxu0
  %2224 = vdwg.mxu0
  %s2225 = scalar_lea.vmem %s3, 200
  %2226 = vst.msk [vmem:[%s2225] sm:$0xff] %vm100, %v2222
  %s2227 = scalar_lea.vmem %s1, 832
  %v2228 = vld [vmem:[%s2227] sm:$0xff]
  %v2229 = vld [vmem:[%s2227 + $0x8] sm:$0xff]
  %v2230 = vld [vmem:[%s2227 + $0x10] sm:$0xff]
  %v2231 = vld [vmem:[%s2227 + $0x18] sm:$0xff]
  %s2232 = scalar_lea.vmem %s2, 26
  %v2233 = vld [vmem:[%s2232] sm:$0x1]
  %v2235 = vlaneseq
  %v2236 = vshrl.u32 %v2235, 7
  %v2237 = vsub.s32 0, %v2236
  %v2238 = vrot.slane %v2233, %v2237
  %2240 = vmatprep.subr.mxu0 0.0
  %2241 = vmatpush1.msra.mxu0 %v2228
  %2242 = vmatprep.subr.mxu0 0.0
  %2243 = vmatpush1.msra.mxu0 %v2229
  %2244 = vmatprep.subr.mxu0 0.0
  %2245 = vmatpush1.msra.mxu0 %v2230
  %2246 = vmatprep.subr.mxu0 0.0
  %2247 = vmatpush1.msra.mxu0 %v2231
  %2248 = vmatprep.subr.mxu0 0.0
  %2249 = vmatpush1.msra.mxu0 0.0
  %2250 = vmatprep.subr.mxu0 0.0
  %2251 = vmatpush1.msra.mxu0 0.0
  %2252 = vmatprep.subr.mxu0 0.0
  %2253 = vmatpush1.msra.mxu0 0.0
  %2254 = vmatprep.subr.mxu0 0.0
  %2255 = vmatpush1.msra.mxu0 0.0
  %2256 = vmatprep.subr.mxu0 0.0
  %2257 = vmatpush1.msra.mxu0 0.0
  %2258 = vmatprep.subr.mxu0 0.0
  %2259 = vmatpush1.msra.mxu0 0.0
  %2260 = vmatprep.subr.mxu0 0.0
  %2261 = vmatpush1.msra.mxu0 0.0
  %2262 = vmatprep.subr.mxu0 0.0
  %2263 = vmatpush1.msra.mxu0 0.0
  %2264 = vmatprep.subr.mxu0 0.0
  %2265 = vmatpush1.msra.mxu0 0.0
  %2266 = vmatprep.subr.mxu0 0.0
  %2267 = vmatpush1.msra.mxu0 0.0
  %2268 = vmatprep.subr.mxu0 0.0
  %2269 = vmatpush1.msra.mxu0 0.0
  %2270 = vmatprep.subr.mxu0 0.0
  %2271 = vmatpush1.msra.mxu0 0.0
  %2272 = vmatprep.subr.mxu0 0.0
  %2273 = vmatpush1.msra.mxu0 0.0
  %2274 = vmatprep.subr.mxu0 0.0
  %2275 = vmatpush1.msra.mxu0 0.0
  %2276 = vmatprep.subr.mxu0 0.0
  %2277 = vmatpush1.msra.mxu0 0.0
  %2278 = vmatprep.subr.mxu0 0.0
  %2279 = vmatpush1.msra.mxu0 0.0
  %2280 = vmatprep.subr.mxu0 0.0
  %2281 = vmatpush1.msra.mxu0 0.0
  %2282 = vmatprep.subr.mxu0 0.0
  %2283 = vmatpush1.msra.mxu0 0.0
  %2284 = vmatprep.subr.mxu0 0.0
  %2285 = vmatpush1.msra.mxu0 0.0
  %2286 = vmatprep.subr.mxu0 0.0
  %2287 = vmatpush1.msra.mxu0 0.0
  %2288 = vmatprep.subr.mxu0 0.0
  %2289 = vmatpush1.msra.mxu0 0.0
  %2290 = vmatprep.subr.mxu0 0.0
  %2291 = vmatpush1.msra.mxu0 0.0
  %2292 = vmatprep.subr.mxu0 0.0
  %2293 = vmatpush1.msra.mxu0 0.0
  %2294 = vmatprep.subr.mxu0 0.0
  %2295 = vmatpush1.msra.mxu0 0.0
  %2296 = vmatprep.subr.mxu0 0.0
  %2297 = vmatpush1.msra.mxu0 0.0
  %2298 = vmatprep.subr.mxu0 0.0
  %2299 = vmatpush1.msra.mxu0 0.0
  %2300 = vmatprep.subr.mxu0 0.0
  %2301 = vmatpush1.msra.mxu0 0.0
  %2302 = vmatprep.subr.mxu0 0.0
  %2303 = vmatpush1.msra.mxu0 0.0
  %2304 = vmatprep.mubr.f32.mxu0 0.0
  %2305 = vmatmul.mubr.f32.gmra.mrb[0].mxu0 %v28
  %v2306 = vpop.f32.mrb[0].mxu0
  %v2307 = vadd.f32 %v2238, %v2306
  %v2308 = vpop.f32.mrb[0].mxu0
  %2309 = vdwg.mxu0
  %s2310 = scalar_lea.vmem %s3, 208
  %2311 = vst.msk [vmem:[%s2310] sm:$0xff] %vm100, %v2307
  %s2312 = scalar_lea.vmem %s1, 864
  %v2313 = vld [vmem:[%s2312] sm:$0xff]
  %v2314 = vld [vmem:[%s2312 + $0x8] sm:$0xff]
  %v2315 = vld [vmem:[%s2312 + $0x10] sm:$0xff]
  %v2316 = vld [vmem:[%s2312 + $0x18] sm:$0xff]
  %s2317 = scalar_lea.vmem %s2, 27
  %v2318 = vld [vmem:[%s2317] sm:$0x1]
  %v2320 = vlaneseq
  %v2321 = vshrl.u32 %v2320, 7
  %v2322 = vsub.s32 0, %v2321
  %v2323 = vrot.slane %v2318, %v2322
  %2325 = vmatprep.subr.mxu0 0.0
  %2326 = vmatpush1.msra.mxu0 %v2313
  %2327 = vmatprep.subr.mxu0 0.0
  %2328 = vmatpush1.msra.mxu0 %v2314
  %2329 = vmatprep.subr.mxu0 0.0
  %2330 = vmatpush1.msra.mxu0 %v2315
  %2331 = vmatprep.subr.mxu0 0.0
  %2332 = vmatpush1.msra.mxu0 %v2316
  %2333 = vmatprep.subr.mxu0 0.0
  %2334 = vmatpush1.msra.mxu0 0.0
  %2335 = vmatprep.subr.mxu0 0.0
  %2336 = vmatpush1.msra.mxu0 0.0
  %2337 = vmatprep.subr.mxu0 0.0
  %2338 = vmatpush1.msra.mxu0 0.0
  %2339 = vmatprep.subr.mxu0 0.0
  %2340 = vmatpush1.msra.mxu0 0.0
  %2341 = vmatprep.subr.mxu0 0.0
  %2342 = vmatpush1.msra.mxu0 0.0
  %2343 = vmatprep.subr.mxu0 0.0
  %2344 = vmatpush1.msra.mxu0 0.0
  %2345 = vmatprep.subr.mxu0 0.0
  %2346 = vmatpush1.msra.mxu0 0.0
  %2347 = vmatprep.subr.mxu0 0.0
  %2348 = vmatpush1.msra.mxu0 0.0
  %2349 = vmatprep.subr.mxu0 0.0
  %2350 = vmatpush1.msra.mxu0 0.0
  %2351 = vmatprep.subr.mxu0 0.0
  %2352 = vmatpush1.msra.mxu0 0.0
  %2353 = vmatprep.subr.mxu0 0.0
  %2354 = vmatpush1.msra.mxu0 0.0
  %2355 = vmatprep.subr.mxu0 0.0
  %2356 = vmatpush1.msra.mxu0 0.0
  %2357 = vmatprep.subr.mxu0 0.0
  %2358 = vmatpush1.msra.mxu0 0.0
  %2359 = vmatprep.subr.mxu0 0.0
  %2360 = vmatpush1.msra.mxu0 0.0
  %2361 = vmatprep.subr.mxu0 0.0
  %2362 = vmatpush1.msra.mxu0 0.0
  %2363 = vmatprep.subr.mxu0 0.0
  %2364 = vmatpush1.msra.mxu0 0.0
  %2365 = vmatprep.subr.mxu0 0.0
  %2366 = vmatpush1.msra.mxu0 0.0
  %2367 = vmatprep.subr.mxu0 0.0
  %2368 = vmatpush1.msra.mxu0 0.0
  %2369 = vmatprep.subr.mxu0 0.0
  %2370 = vmatpush1.msra.mxu0 0.0
  %2371 = vmatprep.subr.mxu0 0.0
  %2372 = vmatpush1.msra.mxu0 0.0
  %2373 = vmatprep.subr.mxu0 0.0
  %2374 = vmatpush1.msra.mxu0 0.0
  %2375 = vmatprep.subr.mxu0 0.0
  %2376 = vmatpush1.msra.mxu0 0.0
  %2377 = vmatprep.subr.mxu0 0.0
  %2378 = vmatpush1.msra.mxu0 0.0
  %2379 = vmatprep.subr.mxu0 0.0
  %2380 = vmatpush1.msra.mxu0 0.0
  %2381 = vmatprep.subr.mxu0 0.0
  %2382 = vmatpush1.msra.mxu0 0.0
  %2383 = vmatprep.subr.mxu0 0.0
  %2384 = vmatpush1.msra.mxu0 0.0
  %2385 = vmatprep.subr.mxu0 0.0
  %2386 = vmatpush1.msra.mxu0 0.0
  %2387 = vmatprep.subr.mxu0 0.0
  %2388 = vmatpush1.msra.mxu0 0.0
  %2389 = vmatprep.mubr.f32.mxu0 0.0
  %2390 = vmatmul.mubr.f32.gmra.mrb[0].mxu0 %v28
  %v2391 = vpop.f32.mrb[0].mxu0
  %v2392 = vadd.f32 %v2323, %v2391
  %v2393 = vpop.f32.mrb[0].mxu0
  %2394 = vdwg.mxu0
  %s2395 = scalar_lea.vmem %s3, 216
  %2396 = vst.msk [vmem:[%s2395] sm:$0xff] %vm100, %v2392
  %s2397 = scalar_lea.vmem %s1, 896
  %v2398 = vld [vmem:[%s2397] sm:$0xff]
  %v2399 = vld [vmem:[%s2397 + $0x8] sm:$0xff]
  %v2400 = vld [vmem:[%s2397 + $0x10] sm:$0xff]
  %v2401 = vld [vmem:[%s2397 + $0x18] sm:$0xff]
  %s2402 = scalar_lea.vmem %s2, 28
  %v2403 = vld [vmem:[%s2402] sm:$0x1]
  %v2405 = vlaneseq
  %v2406 = vshrl.u32 %v2405, 7
  %v2407 = vsub.s32 0, %v2406
  %v2408 = vrot.slane %v2403, %v2407
  %2410 = vmatprep.subr.mxu0 0.0
  %2411 = vmatpush1.msra.mxu0 %v2398
  %2412 = vmatprep.subr.mxu0 0.0
  %2413 = vmatpush1.msra.mxu0 %v2399
  %2414 = vmatprep.subr.mxu0 0.0
  %2415 = vmatpush1.msra.mxu0 %v2400
  %2416 = vmatprep.subr.mxu0 0.0
  %2417 = vmatpush1.msra.mxu0 %v2401
  %2418 = vmatprep.subr.mxu0 0.0
  %2419 = vmatpush1.msra.mxu0 0.0
  %2420 = vmatprep.subr.mxu0 0.0
  %2421 = vmatpush1.msra.mxu0 0.0
  %2422 = vmatprep.subr.mxu0 0.0
  %2423 = vmatpush1.msra.mxu0 0.0
  %2424 = vmatprep.subr.mxu0 0.0
  %2425 = vmatpush1.msra.mxu0 0.0
  %2426 = vmatprep.subr.mxu0 0.0
  %2427 = vmatpush1.msra.mxu0 0.0
  %2428 = vmatprep.subr.mxu0 0.0
  %2429 = vmatpush1.msra.mxu0 0.0
  %2430 = vmatprep.subr.mxu0 0.0
  %2431 = vmatpush1.msra.mxu0 0.0
  %2432 = vmatprep.subr.mxu0 0.0
  %2433 = vmatpush1.msra.mxu0 0.0
  %2434 = vmatprep.subr.mxu0 0.0
  %2435 = vmatpush1.msra.mxu0 0.0
  %2436 = vmatprep.subr.mxu0 0.0
  %2437 = vmatpush1.msra.mxu0 0.0
  %2438 = vmatprep.subr.mxu0 0.0
  %2439 = vmatpush1.msra.mxu0 0.0
  %2440 = vmatprep.subr.mxu0 0.0
  %2441 = vmatpush1.msra.mxu0 0.0
  %2442 = vmatprep.subr.mxu0 0.0
  %2443 = vmatpush1.msra.mxu0 0.0
  %2444 = vmatprep.subr.mxu0 0.0
  %2445 = vmatpush1.msra.mxu0 0.0
  %2446 = vmatprep.subr.mxu0 0.0
  %2447 = vmatpush1.msra.mxu0 0.0
  %2448 = vmatprep.subr.mxu0 0.0
  %2449 = vmatpush1.msra.mxu0 0.0
  %2450 = vmatprep.subr.mxu0 0.0
  %2451 = vmatpush1.msra.mxu0 0.0
  %2452 = vmatprep.subr.mxu0 0.0
  %2453 = vmatpush1.msra.mxu0 0.0
  %2454 = vmatprep.subr.mxu0 0.0
  %2455 = vmatpush1.msra.mxu0 0.0
  %2456 = vmatprep.subr.mxu0 0.0
  %2457 = vmatpush1.msra.mxu0 0.0
  %2458 = vmatprep.subr.mxu0 0.0
  %2459 = vmatpush1.msra.mxu0 0.0
  %2460 = vmatprep.subr.mxu0 0.0
  %2461 = vmatpush1.msra.mxu0 0.0
  %2462 = vmatprep.subr.mxu0 0.0
  %2463 = vmatpush1.msra.mxu0 0.0
  %2464 = vmatprep.subr.mxu0 0.0
  %2465 = vmatpush1.msra.mxu0 0.0
  %2466 = vmatprep.subr.mxu0 0.0
  %2467 = vmatpush1.msra.mxu0 0.0
  %2468 = vmatprep.subr.mxu0 0.0
  %2469 = vmatpush1.msra.mxu0 0.0
  %2470 = vmatprep.subr.mxu0 0.0
  %2471 = vmatpush1.msra.mxu0 0.0
  %2472 = vmatprep.subr.mxu0 0.0
  %2473 = vmatpush1.msra.mxu0 0.0
  %2474 = vmatprep.mubr.f32.mxu0 0.0
  %2475 = vmatmul.mubr.f32.gmra.mrb[0].mxu0 %v28
  %v2476 = vpop.f32.mrb[0].mxu0
  %v2477 = vadd.f32 %v2408, %v2476
  %v2478 = vpop.f32.mrb[0].mxu0
  %2479 = vdwg.mxu0
  %s2480 = scalar_lea.vmem %s3, 224
  %2481 = vst.msk [vmem:[%s2480] sm:$0xff] %vm100, %v2477
  %s2482 = scalar_lea.vmem %s1, 928
  %v2483 = vld [vmem:[%s2482] sm:$0xff]
  %v2484 = vld [vmem:[%s2482 + $0x8] sm:$0xff]
  %v2485 = vld [vmem:[%s2482 + $0x10] sm:$0xff]
  %v2486 = vld [vmem:[%s2482 + $0x18] sm:$0xff]
  %s2487 = scalar_lea.vmem %s2, 29
  %v2488 = vld [vmem:[%s2487] sm:$0x1]
  %v2490 = vlaneseq
  %v2491 = vshrl.u32 %v2490, 7
  %v2492 = vsub.s32 0, %v2491
  %v2493 = vrot.slane %v2488, %v2492
  %2495 = vmatprep.subr.mxu0 0.0
  %2496 = vmatpush1.msra.mxu0 %v2483
  %2497 = vmatprep.subr.mxu0 0.0
  %2498 = vmatpush1.msra.mxu0 %v2484
  %2499 = vmatprep.subr.mxu0 0.0
  %2500 = vmatpush1.msra.mxu0 %v2485
  %2501 = vmatprep.subr.mxu0 0.0
  %2502 = vmatpush1.msra.mxu0 %v2486
  %2503 = vmatprep.subr.mxu0 0.0
  %2504 = vmatpush1.msra.mxu0 0.0
  %2505 = vmatprep.subr.mxu0 0.0
  %2506 = vmatpush1.msra.mxu0 0.0
  %2507 = vmatprep.subr.mxu0 0.0
  %2508 = vmatpush1.msra.mxu0 0.0
  %2509 = vmatprep.subr.mxu0 0.0
  %2510 = vmatpush1.msra.mxu0 0.0
  %2511 = vmatprep.subr.mxu0 0.0
  %2512 = vmatpush1.msra.mxu0 0.0
  %2513 = vmatprep.subr.mxu0 0.0
  %2514 = vmatpush1.msra.mxu0 0.0
  %2515 = vmatprep.subr.mxu0 0.0
  %2516 = vmatpush1.msra.mxu0 0.0
  %2517 = vmatprep.subr.mxu0 0.0
  %2518 = vmatpush1.msra.mxu0 0.0
  %2519 = vmatprep.subr.mxu0 0.0
  %2520 = vmatpush1.msra.mxu0 0.0
  %2521 = vmatprep.subr.mxu0 0.0
  %2522 = vmatpush1.msra.mxu0 0.0
  %2523 = vmatprep.subr.mxu0 0.0
  %2524 = vmatpush1.msra.mxu0 0.0
  %2525 = vmatprep.subr.mxu0 0.0
  %2526 = vmatpush1.msra.mxu0 0.0
  %2527 = vmatprep.subr.mxu0 0.0
  %2528 = vmatpush1.msra.mxu0 0.0
  %2529 = vmatprep.subr.mxu0 0.0
  %2530 = vmatpush1.msra.mxu0 0.0
  %2531 = vmatprep.subr.mxu0 0.0
  %2532 = vmatpush1.msra.mxu0 0.0
  %2533 = vmatprep.subr.mxu0 0.0
  %2534 = vmatpush1.msra.mxu0 0.0
  %2535 = vmatprep.subr.mxu0 0.0
  %2536 = vmatpush1.msra.mxu0 0.0
  %2537 = vmatprep.subr.mxu0 0.0
  %2538 = vmatpush1.msra.mxu0 0.0
  %2539 = vmatprep.subr.mxu0 0.0
  %2540 = vmatpush1.msra.mxu0 0.0
  %2541 = vmatprep.subr.mxu0 0.0
  %2542 = vmatpush1.msra.mxu0 0.0
  %2543 = vmatprep.subr.mxu0 0.0
  %2544 = vmatpush1.msra.mxu0 0.0
  %2545 = vmatprep.subr.mxu0 0.0
  %2546 = vmatpush1.msra.mxu0 0.0
  %2547 = vmatprep.subr.mxu0 0.0
  %2548 = vmatpush1.msra.mxu0 0.0
  %2549 = vmatprep.subr.mxu0 0.0
  %2550 = vmatpush1.msra.mxu0 0.0
  %2551 = vmatprep.subr.mxu0 0.0
  %2552 = vmatpush1.msra.mxu0 0.0
  %2553 = vmatprep.subr.mxu0 0.0
  %2554 = vmatpush1.msra.mxu0 0.0
  %2555 = vmatprep.subr.mxu0 0.0
  %2556 = vmatpush1.msra.mxu0 0.0
  %2557 = vmatprep.subr.mxu0 0.0
  %2558 = vmatpush1.msra.mxu0 0.0
  %2559 = vmatprep.mubr.f32.mxu0 0.0
  %2560 = vmatmul.mubr.f32.gmra.mrb[0].mxu0 %v28
  %v2561 = vpop.f32.mrb[0].mxu0
  %v2562 = vadd.f32 %v2493, %v2561
  %v2563 = vpop.f32.mrb[0].mxu0
  %2564 = vdwg.mxu0
  %s2565 = scalar_lea.vmem %s3, 232
  %2566 = vst.msk [vmem:[%s2565] sm:$0xff] %vm100, %v2562
  %s2567 = scalar_lea.vmem %s1, 960
  %v2568 = vld [vmem:[%s2567] sm:$0xff]
  %v2569 = vld [vmem:[%s2567 + $0x8] sm:$0xff]
  %v2570 = vld [vmem:[%s2567 + $0x10] sm:$0xff]
  %v2571 = vld [vmem:[%s2567 + $0x18] sm:$0xff]
  %s2572 = scalar_lea.vmem %s2, 30
  %v2573 = vld [vmem:[%s2572] sm:$0x1]
  %v2575 = vlaneseq
  %v2576 = vshrl.u32 %v2575, 7
  %v2577 = vsub.s32 0, %v2576
  %v2578 = vrot.slane %v2573, %v2577
  %2580 = vmatprep.subr.mxu0 0.0
  %2581 = vmatpush1.msra.mxu0 %v2568
  %2582 = vmatprep.subr.mxu0 0.0
  %2583 = vmatpush1.msra.mxu0 %v2569
  %2584 = vmatprep.subr.mxu0 0.0
  %2585 = vmatpush1.msra.mxu0 %v2570
  %2586 = vmatprep.subr.mxu0 0.0
  %2587 = vmatpush1.msra.mxu0 %v2571
  %2588 = vmatprep.subr.mxu0 0.0
  %2589 = vmatpush1.msra.mxu0 0.0
  %2590 = vmatprep.subr.mxu0 0.0
  %2591 = vmatpush1.msra.mxu0 0.0
  %2592 = vmatprep.subr.mxu0 0.0
  %2593 = vmatpush1.msra.mxu0 0.0
  %2594 = vmatprep.subr.mxu0 0.0
  %2595 = vmatpush1.msra.mxu0 0.0
  %2596 = vmatprep.subr.mxu0 0.0
  %2597 = vmatpush1.msra.mxu0 0.0
  %2598 = vmatprep.subr.mxu0 0.0
  %2599 = vmatpush1.msra.mxu0 0.0
  %2600 = vmatprep.subr.mxu0 0.0
  %2601 = vmatpush1.msra.mxu0 0.0
  %2602 = vmatprep.subr.mxu0 0.0
  %2603 = vmatpush1.msra.mxu0 0.0
  %2604 = vmatprep.subr.mxu0 0.0
  %2605 = vmatpush1.msra.mxu0 0.0
  %2606 = vmatprep.subr.mxu0 0.0
  %2607 = vmatpush1.msra.mxu0 0.0
  %2608 = vmatprep.subr.mxu0 0.0
  %2609 = vmatpush1.msra.mxu0 0.0
  %2610 = vmatprep.subr.mxu0 0.0
  %2611 = vmatpush1.msra.mxu0 0.0
  %2612 = vmatprep.subr.mxu0 0.0
  %2613 = vmatpush1.msra.mxu0 0.0
  %2614 = vmatprep.subr.mxu0 0.0
  %2615 = vmatpush1.msra.mxu0 0.0
  %2616 = vmatprep.subr.mxu0 0.0
  %2617 = vmatpush1.msra.mxu0 0.0
  %2618 = vmatprep.subr.mxu0 0.0
  %2619 = vmatpush1.msra.mxu0 0.0
  %2620 = vmatprep.subr.mxu0 0.0
  %2621 = vmatpush1.msra.mxu0 0.0
  %2622 = vmatprep.subr.mxu0 0.0
  %2623 = vmatpush1.msra.mxu0 0.0
  %2624 = vmatprep.subr.mxu0 0.0
  %2625 = vmatpush1.msra.mxu0 0.0
  %2626 = vmatprep.subr.mxu0 0.0
  %2627 = vmatpush1.msra.mxu0 0.0
  %2628 = vmatprep.subr.mxu0 0.0
  %2629 = vmatpush1.msra.mxu0 0.0
  %2630 = vmatprep.subr.mxu0 0.0
  %2631 = vmatpush1.msra.mxu0 0.0
  %2632 = vmatprep.subr.mxu0 0.0
  %2633 = vmatpush1.msra.mxu0 0.0
  %2634 = vmatprep.subr.mxu0 0.0
  %2635 = vmatpush1.msra.mxu0 0.0
  %2636 = vmatprep.subr.mxu0 0.0
  %2637 = vmatpush1.msra.mxu0 0.0
  %2638 = vmatprep.subr.mxu0 0.0
  %2639 = vmatpush1.msra.mxu0 0.0
  %2640 = vmatprep.subr.mxu0 0.0
  %2641 = vmatpush1.msra.mxu0 0.0
  %2642 = vmatprep.subr.mxu0 0.0
  %2643 = vmatpush1.msra.mxu0 0.0
  %2644 = vmatprep.mubr.f32.mxu0 0.0
  %2645 = vmatmul.mubr.f32.gmra.mrb[0].mxu0 %v28
  %v2646 = vpop.f32.mrb[0].mxu0
  %v2647 = vadd.f32 %v2578, %v2646
  %v2648 = vpop.f32.mrb[0].mxu0
  %2649 = vdwg.mxu0
  %s2650 = scalar_lea.vmem %s3, 240
  %2651 = vst.msk [vmem:[%s2650] sm:$0xff] %vm100, %v2647
  %s2652 = scalar_lea.vmem %s1, 992
  %v2653 = vld [vmem:[%s2652] sm:$0xff]
  %v2654 = vld [vmem:[%s2652 + $0x8] sm:$0xff]
  %v2655 = vld [vmem:[%s2652 + $0x10] sm:$0xff]
  %v2656 = vld [vmem:[%s2652 + $0x18] sm:$0xff]
  %s2657 = scalar_lea.vmem %s2, 31
  %v2658 = vld [vmem:[%s2657] sm:$0x1]
  %v2660 = vlaneseq
  %v2661 = vshrl.u32 %v2660, 7
  %v2662 = vsub.s32 0, %v2661
  %v2663 = vrot.slane %v2658, %v2662
  %2665 = vmatprep.subr.mxu0 0.0
  %2666 = vmatpush1.msra.mxu0 %v2653
  %2667 = vmatprep.subr.mxu0 0.0
  %2668 = vmatpush1.msra.mxu0 %v2654
  %2669 = vmatprep.subr.mxu0 0.0
  %2670 = vmatpush1.msra.mxu0 %v2655
  %2671 = vmatprep.subr.mxu0 0.0
  %2672 = vmatpush1.msra.mxu0 %v2656
  %2673 = vmatprep.subr.mxu0 0.0
  %2674 = vmatpush1.msra.mxu0 0.0
  %2675 = vmatprep.subr.mxu0 0.0
  %2676 = vmatpush1.msra.mxu0 0.0
  %2677 = vmatprep.subr.mxu0 0.0
  %2678 = vmatpush1.msra.mxu0 0.0
  %2679 = vmatprep.subr.mxu0 0.0
  %2680 = vmatpush1.msra.mxu0 0.0
  %2681 = vmatprep.subr.mxu0 0.0
  %2682 = vmatpush1.msra.mxu0 0.0
  %2683 = vmatprep.subr.mxu0 0.0
  %2684 = vmatpush1.msra.mxu0 0.0
  %2685 = vmatprep.subr.mxu0 0.0
  %2686 = vmatpush1.msra.mxu0 0.0
  %2687 = vmatprep.subr.mxu0 0.0
  %2688 = vmatpush1.msra.mxu0 0.0
  %2689 = vmatprep.subr.mxu0 0.0
  %2690 = vmatpush1.msra.mxu0 0.0
  %2691 = vmatprep.subr.mxu0 0.0
  %2692 = vmatpush1.msra.mxu0 0.0
  %2693 = vmatprep.subr.mxu0 0.0
  %2694 = vmatpush1.msra.mxu0 0.0
  %2695 = vmatprep.subr.mxu0 0.0
  %2696 = vmatpush1.msra.mxu0 0.0
  %2697 = vmatprep.subr.mxu0 0.0
  %2698 = vmatpush1.msra.mxu0 0.0
  %2699 = vmatprep.subr.mxu0 0.0
  %2700 = vmatpush1.msra.mxu0 0.0
  %2701 = vmatprep.subr.mxu0 0.0
  %2702 = vmatpush1.msra.mxu0 0.0
  %2703 = vmatprep.subr.mxu0 0.0
  %2704 = vmatpush1.msra.mxu0 0.0
  %2705 = vmatprep.subr.mxu0 0.0
  %2706 = vmatpush1.msra.mxu0 0.0
  %2707 = vmatprep.subr.mxu0 0.0
  %2708 = vmatpush1.msra.mxu0 0.0
  %2709 = vmatprep.subr.mxu0 0.0
  %2710 = vmatpush1.msra.mxu0 0.0
  %2711 = vmatprep.subr.mxu0 0.0
  %2712 = vmatpush1.msra.mxu0 0.0
  %2713 = vmatprep.subr.mxu0 0.0
  %2714 = vmatpush1.msra.mxu0 0.0
  %2715 = vmatprep.subr.mxu0 0.0
  %2716 = vmatpush1.msra.mxu0 0.0
  %2717 = vmatprep.subr.mxu0 0.0
  %2718 = vmatpush1.msra.mxu0 0.0
  %2719 = vmatprep.subr.mxu0 0.0
  %2720 = vmatpush1.msra.mxu0 0.0
  %2721 = vmatprep.subr.mxu0 0.0
  %2722 = vmatpush1.msra.mxu0 0.0
  %2723 = vmatprep.subr.mxu0 0.0
  %2724 = vmatpush1.msra.mxu0 0.0
  %2725 = vmatprep.subr.mxu0 0.0
  %2726 = vmatpush1.msra.mxu0 0.0
  %2727 = vmatprep.subr.mxu0 0.0
  %2728 = vmatpush1.msra.mxu0 0.0
  %2729 = vmatprep.mubr.f32.mxu0 0.0
  %2730 = vmatmul.mubr.f32.gmra.mrb[0].mxu0 %v28
  %v2731 = vpop.f32.mrb[0].mxu0
  %v2732 = vadd.f32 %v2663, %v2731
  %v2733 = vpop.f32.mrb[0].mxu0
  %2734 = vdwg.mxu0
  %s2735 = scalar_lea.vmem %s3, 248
  %2736 = vst.msk [vmem:[%s2735] sm:$0xff] %vm100, %v2732
  %s2737 = scalar_lea.vmem %s1, 1024
  %v2738 = vld [vmem:[%s2737] sm:$0xff]
  %v2739 = vld [vmem:[%s2737 + $0x8] sm:$0xff]
  %v2740 = vld [vmem:[%s2737 + $0x10] sm:$0xff]
  %v2741 = vld [vmem:[%s2737 + $0x18] sm:$0xff]
  %s2742 = scalar_lea.vmem %s2, 32
  %v2743 = vld [vmem:[%s2742] sm:$0x1]
  %v2745 = vlaneseq
  %v2746 = vshrl.u32 %v2745, 7
  %v2747 = vsub.s32 0, %v2746
  %v2748 = vrot.slane %v2743, %v2747
  %2750 = vmatprep.subr.mxu0 0.0
  %2751 = vmatpush1.msra.mxu0 %v2738
  %2752 = vmatprep.subr.mxu0 0.0
  %2753 = vmatpush1.msra.mxu0 %v2739
  %2754 = vmatprep.subr.mxu0 0.0
  %2755 = vmatpush1.msra.mxu0 %v2740
  %2756 = vmatprep.subr.mxu0 0.0
  %2757 = vmatpush1.msra.mxu0 %v2741
  %2758 = vmatprep.subr.mxu0 0.0
  %2759 = vmatpush1.msra.mxu0 0.0
  %2760 = vmatprep.subr.mxu0 0.0
  %2761 = vmatpush1.msra.mxu0 0.0
  %2762 = vmatprep.subr.mxu0 0.0
  %2763 = vmatpush1.msra.mxu0 0.0
  %2764 = vmatprep.subr.mxu0 0.0
  %2765 = vmatpush1.msra.mxu0 0.0
  %2766 = vmatprep.subr.mxu0 0.0
  %2767 = vmatpush1.msra.mxu0 0.0
  %2768 = vmatprep.subr.mxu0 0.0
  %2769 = vmatpush1.msra.mxu0 0.0
  %2770 = vmatprep.subr.mxu0 0.0
  %2771 = vmatpush1.msra.mxu0 0.0
  %2772 = vmatprep.subr.mxu0 0.0
  %2773 = vmatpush1.msra.mxu0 0.0
  %2774 = vmatprep.subr.mxu0 0.0
  %2775 = vmatpush1.msra.mxu0 0.0
  %2776 = vmatprep.subr.mxu0 0.0
  %2777 = vmatpush1.msra.mxu0 0.0
  %2778 = vmatprep.subr.mxu0 0.0
  %2779 = vmatpush1.msra.mxu0 0.0
  %2780 = vmatprep.subr.mxu0 0.0
  %2781 = vmatpush1.msra.mxu0 0.0
  %2782 = vmatprep.subr.mxu0 0.0
  %2783 = vmatpush1.msra.mxu0 0.0
  %2784 = vmatprep.subr.mxu0 0.0
  %2785 = vmatpush1.msra.mxu0 0.0
  %2786 = vmatprep.subr.mxu0 0.0
  %2787 = vmatpush1.msra.mxu0 0.0
  %2788 = vmatprep.subr.mxu0 0.0
  %2789 = vmatpush1.msra.mxu0 0.0
  %2790 = vmatprep.subr.mxu0 0.0
  %2791 = vmatpush1.msra.mxu0 0.0
  %2792 = vmatprep.subr.mxu0 0.0
  %2793 = vmatpush1.msra.mxu0 0.0
  %2794 = vmatprep.subr.mxu0 0.0
  %2795 = vmatpush1.msra.mxu0 0.0
  %2796 = vmatprep.subr.mxu0 0.0
  %2797 = vmatpush1.msra.mxu0 0.0
  %2798 = vmatprep.subr.mxu0 0.0
  %2799 = vmatpush1.msra.mxu0 0.0
  %2800 = vmatprep.subr.mxu0 0.0
  %2801 = vmatpush1.msra.mxu0 0.0
  %2802 = vmatprep.subr.mxu0 0.0
  %2803 = vmatpush1.msra.mxu0 0.0
  %2804 = vmatprep.subr.mxu0 0.0
  %2805 = vmatpush1.msra.mxu0 0.0
  %2806 = vmatprep.subr.mxu0 0.0
  %2807 = vmatpush1.msra.mxu0 0.0
  %2808 = vmatprep.subr.mxu0 0.0
  %2809 = vmatpush1.msra.mxu0 0.0
  %2810 = vmatprep.subr.mxu0 0.0
  %2811 = vmatpush1.msra.mxu0 0.0
  %2812 = vmatprep.subr.mxu0 0.0
  %2813 = vmatpush1.msra.mxu0 0.0
  %2814 = vmatprep.mubr.f32.mxu0 0.0
  %2815 = vmatmul.mubr.f32.gmra.mrb[0].mxu0 %v28
  %v2816 = vpop.f32.mrb[0].mxu0
  %v2817 = vadd.f32 %v2748, %v2816
  %v2818 = vpop.f32.mrb[0].mxu0
  %2819 = vdwg.mxu0
  %s2820 = scalar_lea.vmem %s3, 256
  %2821 = vst.msk [vmem:[%s2820] sm:$0xff] %vm100, %v2817
  %s2822 = scalar_lea.vmem %s1, 1056
  %v2823 = vld [vmem:[%s2822] sm:$0xff]
  %v2824 = vld [vmem:[%s2822 + $0x8] sm:$0xff]
  %v2825 = vld [vmem:[%s2822 + $0x10] sm:$0xff]
  %v2826 = vld [vmem:[%s2822 + $0x18] sm:$0xff]
  %s2827 = scalar_lea.vmem %s2, 33
  %v2828 = vld [vmem:[%s2827] sm:$0x1]
  %v2830 = vlaneseq
  %v2831 = vshrl.u32 %v2830, 7
  %v2832 = vsub.s32 0, %v2831
  %v2833 = vrot.slane %v2828, %v2832
  %2835 = vmatprep.subr.mxu0 0.0
  %2836 = vmatpush1.msra.mxu0 %v2823
  %2837 = vmatprep.subr.mxu0 0.0
  %2838 = vmatpush1.msra.mxu0 %v2824
  %2839 = vmatprep.subr.mxu0 0.0
  %2840 = vmatpush1.msra.mxu0 %v2825
  %2841 = vmatprep.subr.mxu0 0.0
  %2842 = vmatpush1.msra.mxu0 %v2826
  %2843 = vmatprep.subr.mxu0 0.0
  %2844 = vmatpush1.msra.mxu0 0.0
  %2845 = vmatprep.subr.mxu0 0.0
  %2846 = vmatpush1.msra.mxu0 0.0
  %2847 = vmatprep.subr.mxu0 0.0
  %2848 = vmatpush1.msra.mxu0 0.0
  %2849 = vmatprep.subr.mxu0 0.0
  %2850 = vmatpush1.msra.mxu0 0.0
  %2851 = vmatprep.subr.mxu0 0.0
  %2852 = vmatpush1.msra.mxu0 0.0
  %2853 = vmatprep.subr.mxu0 0.0
  %2854 = vmatpush1.msra.mxu0 0.0
  %2855 = vmatprep.subr.mxu0 0.0
  %2856 = vmatpush1.msra.mxu0 0.0
  %2857 = vmatprep.subr.mxu0 0.0
  %2858 = vmatpush1.msra.mxu0 0.0
  %2859 = vmatprep.subr.mxu0 0.0
  %2860 = vmatpush1.msra.mxu0 0.0
  %2861 = vmatprep.subr.mxu0 0.0
  %2862 = vmatpush1.msra.mxu0 0.0
  %2863 = vmatprep.subr.mxu0 0.0
  %2864 = vmatpush1.msra.mxu0 0.0
  %2865 = vmatprep.subr.mxu0 0.0
  %2866 = vmatpush1.msra.mxu0 0.0
  %2867 = vmatprep.subr.mxu0 0.0
  %2868 = vmatpush1.msra.mxu0 0.0
  %2869 = vmatprep.subr.mxu0 0.0
  %2870 = vmatpush1.msra.mxu0 0.0
  %2871 = vmatprep.subr.mxu0 0.0
  %2872 = vmatpush1.msra.mxu0 0.0
  %2873 = vmatprep.subr.mxu0 0.0
  %2874 = vmatpush1.msra.mxu0 0.0
  %2875 = vmatprep.subr.mxu0 0.0
  %2876 = vmatpush1.msra.mxu0 0.0
  %2877 = vmatprep.subr.mxu0 0.0
  %2878 = vmatpush1.msra.mxu0 0.0
  %2879 = vmatprep.subr.mxu0 0.0
  %2880 = vmatpush1.msra.mxu0 0.0
  %2881 = vmatprep.subr.mxu0 0.0
  %2882 = vmatpush1.msra.mxu0 0.0
  %2883 = vmatprep.subr.mxu0 0.0
  %2884 = vmatpush1.msra.mxu0 0.0
  %2885 = vmatprep.subr.mxu0 0.0
  %2886 = vmatpush1.msra.mxu0 0.0
  %2887 = vmatprep.subr.mxu0 0.0
  %2888 = vmatpush1.msra.mxu0 0.0
  %2889 = vmatprep.subr.mxu0 0.0
  %2890 = vmatpush1.msra.mxu0 0.0
  %2891 = vmatprep.subr.mxu0 0.0
  %2892 = vmatpush1.msra.mxu0 0.0
  %2893 = vmatprep.subr.mxu0 0.0
  %2894 = vmatpush1.msra.mxu0 0.0
  %2895 = vmatprep.subr.mxu0 0.0
  %2896 = vmatpush1.msra.mxu0 0.0
  %2897 = vmatprep.subr.mxu0 0.0
  %2898 = vmatpush1.msra.mxu0 0.0
  %2899 = vmatprep.mubr.f32.mxu0 0.0
  %2900 = vmatmul.mubr.f32.gmra.mrb[0].mxu0 %v28
  %v2901 = vpop.f32.mrb[0].mxu0
  %v2902 = vadd.f32 %v2833, %v2901
  %v2903 = vpop.f32.mrb[0].mxu0
  %2904 = vdwg.mxu0
  %s2905 = scalar_lea.vmem %s3, 264
  %2906 = vst.msk [vmem:[%s2905] sm:$0xff] %vm100, %v2902
  %s2907 = scalar_lea.vmem %s1, 1088
  %v2908 = vld [vmem:[%s2907] sm:$0xff]
  %v2909 = vld [vmem:[%s2907 + $0x8] sm:$0xff]
  %v2910 = vld [vmem:[%s2907 + $0x10] sm:$0xff]
  %v2911 = vld [vmem:[%s2907 + $0x18] sm:$0xff]
  %s2912 = scalar_lea.vmem %s2, 34
  %v2913 = vld [vmem:[%s2912] sm:$0x1]
  %v2915 = vlaneseq
  %v2916 = vshrl.u32 %v2915, 7
  %v2917 = vsub.s32 0, %v2916
  %v2918 = vrot.slane %v2913, %v2917
  %2920 = vmatprep.subr.mxu0 0.0
  %2921 = vmatpush1.msra.mxu0 %v2908
  %2922 = vmatprep.subr.mxu0 0.0
  %2923 = vmatpush1.msra.mxu0 %v2909
  %2924 = vmatprep.subr.mxu0 0.0
  %2925 = vmatpush1.msra.mxu0 %v2910
  %2926 = vmatprep.subr.mxu0 0.0
  %2927 = vmatpush1.msra.mxu0 %v2911
  %2928 = vmatprep.subr.mxu0 0.0
  %2929 = vmatpush1.msra.mxu0 0.0
  %2930 = vmatprep.subr.mxu0 0.0
  %2931 = vmatpush1.msra.mxu0 0.0
  %2932 = vmatprep.subr.mxu0 0.0
  %2933 = vmatpush1.msra.mxu0 0.0
  %2934 = vmatprep.subr.mxu0 0.0
  %2935 = vmatpush1.msra.mxu0 0.0
  %2936 = vmatprep.subr.mxu0 0.0
  %2937 = vmatpush1.msra.mxu0 0.0
  %2938 = vmatprep.subr.mxu0 0.0
  %2939 = vmatpush1.msra.mxu0 0.0
  %2940 = vmatprep.subr.mxu0 0.0
  %2941 = vmatpush1.msra.mxu0 0.0
  %2942 = vmatprep.subr.mxu0 0.0
  %2943 = vmatpush1.msra.mxu0 0.0
  %2944 = vmatprep.subr.mxu0 0.0
  %2945 = vmatpush1.msra.mxu0 0.0
  %2946 = vmatprep.subr.mxu0 0.0
  %2947 = vmatpush1.msra.mxu0 0.0
  %2948 = vmatprep.subr.mxu0 0.0
  %2949 = vmatpush1.msra.mxu0 0.0
  %2950 = vmatprep.subr.mxu0 0.0
  %2951 = vmatpush1.msra.mxu0 0.0
  %2952 = vmatprep.subr.mxu0 0.0
  %2953 = vmatpush1.msra.mxu0 0.0
  %2954 = vmatprep.subr.mxu0 0.0
  %2955 = vmatpush1.msra.mxu0 0.0
  %2956 = vmatprep.subr.mxu0 0.0
  %2957 = vmatpush1.msra.mxu0 0.0
  %2958 = vmatprep.subr.mxu0 0.0
  %2959 = vmatpush1.msra.mxu0 0.0
  %2960 = vmatprep.subr.mxu0 0.0
  %2961 = vmatpush1.msra.mxu0 0.0
  %2962 = vmatprep.subr.mxu0 0.0
  %2963 = vmatpush1.msra.mxu0 0.0
  %2964 = vmatprep.subr.mxu0 0.0
  %2965 = vmatpush1.msra.mxu0 0.0
  %2966 = vmatprep.subr.mxu0 0.0
  %2967 = vmatpush1.msra.mxu0 0.0
  %2968 = vmatprep.subr.mxu0 0.0
  %2969 = vmatpush1.msra.mxu0 0.0
  %2970 = vmatprep.subr.mxu0 0.0
  %2971 = vmatpush1.msra.mxu0 0.0
  %2972 = vmatprep.subr.mxu0 0.0
  %2973 = vmatpush1.msra.mxu0 0.0
  %2974 = vmatprep.subr.mxu0 0.0
  %2975 = vmatpush1.msra.mxu0 0.0
  %2976 = vmatprep.subr.mxu0 0.0
  %2977 = vmatpush1.msra.mxu0 0.0
  %2978 = vmatprep.subr.mxu0 0.0
  %2979 = vmatpush1.msra.mxu0 0.0
  %2980 = vmatprep.subr.mxu0 0.0
  %2981 = vmatpush1.msra.mxu0 0.0
  %2982 = vmatprep.subr.mxu0 0.0
  %2983 = vmatpush1.msra.mxu0 0.0
  %2984 = vmatprep.mubr.f32.mxu0 0.0
  %2985 = vmatmul.mubr.f32.gmra.mrb[0].mxu0 %v28
  %v2986 = vpop.f32.mrb[0].mxu0
  %v2987 = vadd.f32 %v2918, %v2986
  %v2988 = vpop.f32.mrb[0].mxu0
  %2989 = vdwg.mxu0
  %s2990 = scalar_lea.vmem %s3, 272
  %2991 = vst.msk [vmem:[%s2990] sm:$0xff] %vm100, %v2987
  %s2992 = scalar_lea.vmem %s1, 1120
  %v2993 = vld [vmem:[%s2992] sm:$0xff]
  %v2994 = vld [vmem:[%s2992 + $0x8] sm:$0xff]
  %v2995 = vld [vmem:[%s2992 + $0x10] sm:$0xff]
  %v2996 = vld [vmem:[%s2992 + $0x18] sm:$0xff]
  %s2997 = scalar_lea.vmem %s2, 35
  %v2998 = vld [vmem:[%s2997] sm:$0x1]
  %v3000 = vlaneseq
  %v3001 = vshrl.u32 %v3000, 7
  %v3002 = vsub.s32 0, %v3001
  %v3003 = vrot.slane %v2998, %v3002
  %3005 = vmatprep.subr.mxu0 0.0
  %3006 = vmatpush1.msra.mxu0 %v2993
  %3007 = vmatprep.subr.mxu0 0.0
  %3008 = vmatpush1.msra.mxu0 %v2994
  %3009 = vmatprep.subr.mxu0 0.0
  %3010 = vmatpush1.msra.mxu0 %v2995
  %3011 = vmatprep.subr.mxu0 0.0
  %3012 = vmatpush1.msra.mxu0 %v2996
  %3013 = vmatprep.subr.mxu0 0.0
  %3014 = vmatpush1.msra.mxu0 0.0
  %3015 = vmatprep.subr.mxu0 0.0
  %3016 = vmatpush1.msra.mxu0 0.0
  %3017 = vmatprep.subr.mxu0 0.0
  %3018 = vmatpush1.msra.mxu0 0.0
  %3019 = vmatprep.subr.mxu0 0.0
  %3020 = vmatpush1.msra.mxu0 0.0
  %3021 = vmatprep.subr.mxu0 0.0
  %3022 = vmatpush1.msra.mxu0 0.0
  %3023 = vmatprep.subr.mxu0 0.0
  %3024 = vmatpush1.msra.mxu0 0.0
  %3025 = vmatprep.subr.mxu0 0.0
  %3026 = vmatpush1.msra.mxu0 0.0
  %3027 = vmatprep.subr.mxu0 0.0
  %3028 = vmatpush1.msra.mxu0 0.0
  %3029 = vmatprep.subr.mxu0 0.0
  %3030 = vmatpush1.msra.mxu0 0.0
  %3031 = vmatprep.subr.mxu0 0.0
  %3032 = vmatpush1.msra.mxu0 0.0
  %3033 = vmatprep.subr.mxu0 0.0
  %3034 = vmatpush1.msra.mxu0 0.0
  %3035 = vmatprep.subr.mxu0 0.0
  %3036 = vmatpush1.msra.mxu0 0.0
  %3037 = vmatprep.subr.mxu0 0.0
  %3038 = vmatpush1.msra.mxu0 0.0
  %3039 = vmatprep.subr.mxu0 0.0
  %3040 = vmatpush1.msra.mxu0 0.0
  %3041 = vmatprep.subr.mxu0 0.0
  %3042 = vmatpush1.msra.mxu0 0.0
  %3043 = vmatprep.subr.mxu0 0.0
  %3044 = vmatpush1.msra.mxu0 0.0
  %3045 = vmatprep.subr.mxu0 0.0
  %3046 = vmatpush1.msra.mxu0 0.0
  %3047 = vmatprep.subr.mxu0 0.0
  %3048 = vmatpush1.msra.mxu0 0.0
  %3049 = vmatprep.subr.mxu0 0.0
  %3050 = vmatpush1.msra.mxu0 0.0
  %3051 = vmatprep.subr.mxu0 0.0
  %3052 = vmatpush1.msra.mxu0 0.0
  %3053 = vmatprep.subr.mxu0 0.0
  %3054 = vmatpush1.msra.mxu0 0.0
  %3055 = vmatprep.subr.mxu0 0.0
  %3056 = vmatpush1.msra.mxu0 0.0
  %3057 = vmatprep.subr.mxu0 0.0
  %3058 = vmatpush1.msra.mxu0 0.0
  %3059 = vmatprep.subr.mxu0 0.0
  %3060 = vmatpush1.msra.mxu0 0.0
  %3061 = vmatprep.subr.mxu0 0.0
  %3062 = vmatpush1.msra.mxu0 0.0
  %3063 = vmatprep.subr.mxu0 0.0
  %3064 = vmatpush1.msra.mxu0 0.0
  %3065 = vmatprep.subr.mxu0 0.0
  %3066 = vmatpush1.msra.mxu0 0.0
  %3067 = vmatprep.subr.mxu0 0.0
  %3068 = vmatpush1.msra.mxu0 0.0
  %3069 = vmatprep.mubr.f32.mxu0 0.0
  %3070 = vmatmul.mubr.f32.gmra.mrb[0].mxu0 %v28
  %v3071 = vpop.f32.mrb[0].mxu0
  %v3072 = vadd.f32 %v3003, %v3071
  %v3073 = vpop.f32.mrb[0].mxu0
  %3074 = vdwg.mxu0
  %s3075 = scalar_lea.vmem %s3, 280
  %3076 = vst.msk [vmem:[%s3075] sm:$0xff] %vm100, %v3072
  %s3077 = scalar_lea.vmem %s1, 1152
  %v3078 = vld [vmem:[%s3077] sm:$0xff]
  %v3079 = vld [vmem:[%s3077 + $0x8] sm:$0xff]
  %v3080 = vld [vmem:[%s3077 + $0x10] sm:$0xff]
  %v3081 = vld [vmem:[%s3077 + $0x18] sm:$0xff]
  %s3082 = scalar_lea.vmem %s2, 36
  %v3083 = vld [vmem:[%s3082] sm:$0x1]
  %v3085 = vlaneseq
  %v3086 = vshrl.u32 %v3085, 7
  %v3087 = vsub.s32 0, %v3086
  %v3088 = vrot.slane %v3083, %v3087
  %3090 = vmatprep.subr.mxu0 0.0
  %3091 = vmatpush1.msra.mxu0 %v3078
  %3092 = vmatprep.subr.mxu0 0.0
  %3093 = vmatpush1.msra.mxu0 %v3079
  %3094 = vmatprep.subr.mxu0 0.0
  %3095 = vmatpush1.msra.mxu0 %v3080
  %3096 = vmatprep.subr.mxu0 0.0
  %3097 = vmatpush1.msra.mxu0 %v3081
  %3098 = vmatprep.subr.mxu0 0.0
  %3099 = vmatpush1.msra.mxu0 0.0
  %3100 = vmatprep.subr.mxu0 0.0
  %3101 = vmatpush1.msra.mxu0 0.0
  %3102 = vmatprep.subr.mxu0 0.0
  %3103 = vmatpush1.msra.mxu0 0.0
  %3104 = vmatprep.subr.mxu0 0.0
  %3105 = vmatpush1.msra.mxu0 0.0
  %3106 = vmatprep.subr.mxu0 0.0
  %3107 = vmatpush1.msra.mxu0 0.0
  %3108 = vmatprep.subr.mxu0 0.0
  %3109 = vmatpush1.msra.mxu0 0.0
  %3110 = vmatprep.subr.mxu0 0.0
  %3111 = vmatpush1.msra.mxu0 0.0
  %3112 = vmatprep.subr.mxu0 0.0
  %3113 = vmatpush1.msra.mxu0 0.0
  %3114 = vmatprep.subr.mxu0 0.0
  %3115 = vmatpush1.msra.mxu0 0.0
  %3116 = vmatprep.subr.mxu0 0.0
  %3117 = vmatpush1.msra.mxu0 0.0
  %3118 = vmatprep.subr.mxu0 0.0
  %3119 = vmatpush1.msra.mxu0 0.0
  %3120 = vmatprep.subr.mxu0 0.0
  %3121 = vmatpush1.msra.mxu0 0.0
  %3122 = vmatprep.subr.mxu0 0.0
  %3123 = vmatpush1.msra.mxu0 0.0
  %3124 = vmatprep.subr.mxu0 0.0
  %3125 = vmatpush1.msra.mxu0 0.0
  %3126 = vmatprep.subr.mxu0 0.0
  %3127 = vmatpush1.msra.mxu0 0.0
  %3128 = vmatprep.subr.mxu0 0.0
  %3129 = vmatpush1.msra.mxu0 0.0
  %3130 = vmatprep.subr.mxu0 0.0
  %3131 = vmatpush1.msra.mxu0 0.0
  %3132 = vmatprep.subr.mxu0 0.0
  %3133 = vmatpush1.msra.mxu0 0.0
  %3134 = vmatprep.subr.mxu0 0.0
  %3135 = vmatpush1.msra.mxu0 0.0
  %3136 = vmatprep.subr.mxu0 0.0
  %3137 = vmatpush1.msra.mxu0 0.0
  %3138 = vmatprep.subr.mxu0 0.0
  %3139 = vmatpush1.msra.mxu0 0.0
  %3140 = vmatprep.subr.mxu0 0.0
  %3141 = vmatpush1.msra.mxu0 0.0
  %3142 = vmatprep.subr.mxu0 0.0
  %3143 = vmatpush1.msra.mxu0 0.0
  %3144 = vmatprep.subr.mxu0 0.0
  %3145 = vmatpush1.msra.mxu0 0.0
  %3146 = vmatprep.subr.mxu0 0.0
  %3147 = vmatpush1.msra.mxu0 0.0
  %3148 = vmatprep.subr.mxu0 0.0
  %3149 = vmatpush1.msra.mxu0 0.0
  %3150 = vmatprep.subr.mxu0 0.0
  %3151 = vmatpush1.msra.mxu0 0.0
  %3152 = vmatprep.subr.mxu0 0.0
  %3153 = vmatpush1.msra.mxu0 0.0
  %3154 = vmatprep.mubr.f32.mxu0 0.0
  %3155 = vmatmul.mubr.f32.gmra.mrb[0].mxu0 %v28
  %v3156 = vpop.f32.mrb[0].mxu0
  %v3157 = vadd.f32 %v3088, %v3156
  %v3158 = vpop.f32.mrb[0].mxu0
  %3159 = vdwg.mxu0
  %s3160 = scalar_lea.vmem %s3, 288
  %3161 = vst.msk [vmem:[%s3160] sm:$0xff] %vm100, %v3157
  %s3162 = scalar_lea.vmem %s1, 1184
  %v3163 = vld [vmem:[%s3162] sm:$0xff]
  %v3164 = vld [vmem:[%s3162 + $0x8] sm:$0xff]
  %v3165 = vld [vmem:[%s3162 + $0x10] sm:$0xff]
  %v3166 = vld [vmem:[%s3162 + $0x18] sm:$0xff]
  %s3167 = scalar_lea.vmem %s2, 37
  %v3168 = vld [vmem:[%s3167] sm:$0x1]
  %v3170 = vlaneseq
  %v3171 = vshrl.u32 %v3170, 7
  %v3172 = vsub.s32 0, %v3171
  %v3173 = vrot.slane %v3168, %v3172
  %3175 = vmatprep.subr.mxu0 0.0
  %3176 = vmatpush1.msra.mxu0 %v3163
  %3177 = vmatprep.subr.mxu0 0.0
  %3178 = vmatpush1.msra.mxu0 %v3164
  %3179 = vmatprep.subr.mxu0 0.0
  %3180 = vmatpush1.msra.mxu0 %v3165
  %3181 = vmatprep.subr.mxu0 0.0
  %3182 = vmatpush1.msra.mxu0 %v3166
  %3183 = vmatprep.subr.mxu0 0.0
  %3184 = vmatpush1.msra.mxu0 0.0
  %3185 = vmatprep.subr.mxu0 0.0
  %3186 = vmatpush1.msra.mxu0 0.0
  %3187 = vmatprep.subr.mxu0 0.0
  %3188 = vmatpush1.msra.mxu0 0.0
  %3189 = vmatprep.subr.mxu0 0.0
  %3190 = vmatpush1.msra.mxu0 0.0
  %3191 = vmatprep.subr.mxu0 0.0
  %3192 = vmatpush1.msra.mxu0 0.0
  %3193 = vmatprep.subr.mxu0 0.0
  %3194 = vmatpush1.msra.mxu0 0.0
  %3195 = vmatprep.subr.mxu0 0.0
  %3196 = vmatpush1.msra.mxu0 0.0
  %3197 = vmatprep.subr.mxu0 0.0
  %3198 = vmatpush1.msra.mxu0 0.0
  %3199 = vmatprep.subr.mxu0 0.0
  %3200 = vmatpush1.msra.mxu0 0.0
  %3201 = vmatprep.subr.mxu0 0.0
  %3202 = vmatpush1.msra.mxu0 0.0
  %3203 = vmatprep.subr.mxu0 0.0
  %3204 = vmatpush1.msra.mxu0 0.0
  %3205 = vmatprep.subr.mxu0 0.0
  %3206 = vmatpush1.msra.mxu0 0.0
  %3207 = vmatprep.subr.mxu0 0.0
  %3208 = vmatpush1.msra.mxu0 0.0
  %3209 = vmatprep.subr.mxu0 0.0
  %3210 = vmatpush1.msra.mxu0 0.0
  %3211 = vmatprep.subr.mxu0 0.0
  %3212 = vmatpush1.msra.mxu0 0.0
  %3213 = vmatprep.subr.mxu0 0.0
  %3214 = vmatpush1.msra.mxu0 0.0
  %3215 = vmatprep.subr.mxu0 0.0
  %3216 = vmatpush1.msra.mxu0 0.0
  %3217 = vmatprep.subr.mxu0 0.0
  %3218 = vmatpush1.msra.mxu0 0.0
  %3219 = vmatprep.subr.mxu0 0.0
  %3220 = vmatpush1.msra.mxu0 0.0
  %3221 = vmatprep.subr.mxu0 0.0
  %3222 = vmatpush1.msra.mxu0 0.0
  %3223 = vmatprep.subr.mxu0 0.0
  %3224 = vmatpush1.msra.mxu0 0.0
  %3225 = vmatprep.subr.mxu0 0.0
  %3226 = vmatpush1.msra.mxu0 0.0
  %3227 = vmatprep.subr.mxu0 0.0
  %3228 = vmatpush1.msra.mxu0 0.0
  %3229 = vmatprep.subr.mxu0 0.0
  %3230 = vmatpush1.msra.mxu0 0.0
  %3231 = vmatprep.subr.mxu0 0.0
  %3232 = vmatpush1.msra.mxu0 0.0
  %3233 = vmatprep.subr.mxu0 0.0
  %3234 = vmatpush1.msra.mxu0 0.0
  %3235 = vmatprep.subr.mxu0 0.0
  %3236 = vmatpush1.msra.mxu0 0.0
  %3237 = vmatprep.subr.mxu0 0.0
  %3238 = vmatpush1.msra.mxu0 0.0
  %3239 = vmatprep.mubr.f32.mxu0 0.0
  %3240 = vmatmul.mubr.f32.gmra.mrb[0].mxu0 %v28
  %v3241 = vpop.f32.mrb[0].mxu0
  %v3242 = vadd.f32 %v3173, %v3241
  %v3243 = vpop.f32.mrb[0].mxu0
  %3244 = vdwg.mxu0
  %s3245 = scalar_lea.vmem %s3, 296
  %3246 = vst.msk [vmem:[%s3245] sm:$0xff] %vm100, %v3242
  %s3247 = scalar_lea.vmem %s1, 1216
  %v3248 = vld [vmem:[%s3247] sm:$0xff]
  %v3249 = vld [vmem:[%s3247 + $0x8] sm:$0xff]
  %v3250 = vld [vmem:[%s3247 + $0x10] sm:$0xff]
  %v3251 = vld [vmem:[%s3247 + $0x18] sm:$0xff]
  %s3252 = scalar_lea.vmem %s2, 38
  %v3253 = vld [vmem:[%s3252] sm:$0x1]
  %v3255 = vlaneseq
  %v3256 = vshrl.u32 %v3255, 7
  %v3257 = vsub.s32 0, %v3256
  %v3258 = vrot.slane %v3253, %v3257
  %3260 = vmatprep.subr.mxu0 0.0
  %3261 = vmatpush1.msra.mxu0 %v3248
  %3262 = vmatprep.subr.mxu0 0.0
  %3263 = vmatpush1.msra.mxu0 %v3249
  %3264 = vmatprep.subr.mxu0 0.0
  %3265 = vmatpush1.msra.mxu0 %v3250
  %3266 = vmatprep.subr.mxu0 0.0
  %3267 = vmatpush1.msra.mxu0 %v3251
  %3268 = vmatprep.subr.mxu0 0.0
  %3269 = vmatpush1.msra.mxu0 0.0
  %3270 = vmatprep.subr.mxu0 0.0
  %3271 = vmatpush1.msra.mxu0 0.0
  %3272 = vmatprep.subr.mxu0 0.0
  %3273 = vmatpush1.msra.mxu0 0.0
  %3274 = vmatprep.subr.mxu0 0.0
  %3275 = vmatpush1.msra.mxu0 0.0
  %3276 = vmatprep.subr.mxu0 0.0
  %3277 = vmatpush1.msra.mxu0 0.0
  %3278 = vmatprep.subr.mxu0 0.0
  %3279 = vmatpush1.msra.mxu0 0.0
  %3280 = vmatprep.subr.mxu0 0.0
  %3281 = vmatpush1.msra.mxu0 0.0
  %3282 = vmatprep.subr.mxu0 0.0
  %3283 = vmatpush1.msra.mxu0 0.0
  %3284 = vmatprep.subr.mxu0 0.0
  %3285 = vmatpush1.msra.mxu0 0.0
  %3286 = vmatprep.subr.mxu0 0.0
  %3287 = vmatpush1.msra.mxu0 0.0
  %3288 = vmatprep.subr.mxu0 0.0
  %3289 = vmatpush1.msra.mxu0 0.0
  %3290 = vmatprep.subr.mxu0 0.0
  %3291 = vmatpush1.msra.mxu0 0.0
  %3292 = vmatprep.subr.mxu0 0.0
  %3293 = vmatpush1.msra.mxu0 0.0
  %3294 = vmatprep.subr.mxu0 0.0
  %3295 = vmatpush1.msra.mxu0 0.0
  %3296 = vmatprep.subr.mxu0 0.0
  %3297 = vmatpush1.msra.mxu0 0.0
  %3298 = vmatprep.subr.mxu0 0.0
  %3299 = vmatpush1.msra.mxu0 0.0
  %3300 = vmatprep.subr.mxu0 0.0
  %3301 = vmatpush1.msra.mxu0 0.0
  %3302 = vmatprep.subr.mxu0 0.0
  %3303 = vmatpush1.msra.mxu0 0.0
  %3304 = vmatprep.subr.mxu0 0.0
  %3305 = vmatpush1.msra.mxu0 0.0
  %3306 = vmatprep.subr.mxu0 0.0
  %3307 = vmatpush1.msra.mxu0 0.0
  %3308 = vmatprep.subr.mxu0 0.0
  %3309 = vmatpush1.msra.mxu0 0.0
  %3310 = vmatprep.subr.mxu0 0.0
  %3311 = vmatpush1.msra.mxu0 0.0
  %3312 = vmatprep.subr.mxu0 0.0
  %3313 = vmatpush1.msra.mxu0 0.0
  %3314 = vmatprep.subr.mxu0 0.0
  %3315 = vmatpush1.msra.mxu0 0.0
  %3316 = vmatprep.subr.mxu0 0.0
  %3317 = vmatpush1.msra.mxu0 0.0
  %3318 = vmatprep.subr.mxu0 0.0
  %3319 = vmatpush1.msra.mxu0 0.0
  %3320 = vmatprep.subr.mxu0 0.0
  %3321 = vmatpush1.msra.mxu0 0.0
  %3322 = vmatprep.subr.mxu0 0.0
  %3323 = vmatpush1.msra.mxu0 0.0
  %3324 = vmatprep.mubr.f32.mxu0 0.0
  %3325 = vmatmul.mubr.f32.gmra.mrb[0].mxu0 %v28
  %v3326 = vpop.f32.mrb[0].mxu0
  %v3327 = vadd.f32 %v3258, %v3326
  %v3328 = vpop.f32.mrb[0].mxu0
  %3329 = vdwg.mxu0
  %s3330 = scalar_lea.vmem %s3, 304
  %3331 = vst.msk [vmem:[%s3330] sm:$0xff] %vm100, %v3327
  %s3332 = scalar_lea.vmem %s1, 1248
  %v3333 = vld [vmem:[%s3332] sm:$0xff]
  %v3334 = vld [vmem:[%s3332 + $0x8] sm:$0xff]
  %v3335 = vld [vmem:[%s3332 + $0x10] sm:$0xff]
  %v3336 = vld [vmem:[%s3332 + $0x18] sm:$0xff]
  %s3337 = scalar_lea.vmem %s2, 39
  %v3338 = vld [vmem:[%s3337] sm:$0x1]
  %v3340 = vlaneseq
  %v3341 = vshrl.u32 %v3340, 7
  %v3342 = vsub.s32 0, %v3341
  %v3343 = vrot.slane %v3338, %v3342
  %3345 = vmatprep.subr.mxu0 0.0
  %3346 = vmatpush1.msra.mxu0 %v3333
  %3347 = vmatprep.subr.mxu0 0.0
  %3348 = vmatpush1.msra.mxu0 %v3334
  %3349 = vmatprep.subr.mxu0 0.0
  %3350 = vmatpush1.msra.mxu0 %v3335
  %3351 = vmatprep.subr.mxu0 0.0
  %3352 = vmatpush1.msra.mxu0 %v3336
  %3353 = vmatprep.subr.mxu0 0.0
  %3354 = vmatpush1.msra.mxu0 0.0
  %3355 = vmatprep.subr.mxu0 0.0
  %3356 = vmatpush1.msra.mxu0 0.0
  %3357 = vmatprep.subr.mxu0 0.0
  %3358 = vmatpush1.msra.mxu0 0.0
  %3359 = vmatprep.subr.mxu0 0.0
  %3360 = vmatpush1.msra.mxu0 0.0
  %3361 = vmatprep.subr.mxu0 0.0
  %3362 = vmatpush1.msra.mxu0 0.0
  %3363 = vmatprep.subr.mxu0 0.0
  %3364 = vmatpush1.msra.mxu0 0.0
  %3365 = vmatprep.subr.mxu0 0.0
  %3366 = vmatpush1.msra.mxu0 0.0
  %3367 = vmatprep.subr.mxu0 0.0
  %3368 = vmatpush1.msra.mxu0 0.0
  %3369 = vmatprep.subr.mxu0 0.0
  %3370 = vmatpush1.msra.mxu0 0.0
  %3371 = vmatprep.subr.mxu0 0.0
  %3372 = vmatpush1.msra.mxu0 0.0
  %3373 = vmatprep.subr.mxu0 0.0
  %3374 = vmatpush1.msra.mxu0 0.0
  %3375 = vmatprep.subr.mxu0 0.0
  %3376 = vmatpush1.msra.mxu0 0.0
  %3377 = vmatprep.subr.mxu0 0.0
  %3378 = vmatpush1.msra.mxu0 0.0
  %3379 = vmatprep.subr.mxu0 0.0
  %3380 = vmatpush1.msra.mxu0 0.0
  %3381 = vmatprep.subr.mxu0 0.0
  %3382 = vmatpush1.msra.mxu0 0.0
  %3383 = vmatprep.subr.mxu0 0.0
  %3384 = vmatpush1.msra.mxu0 0.0
  %3385 = vmatprep.subr.mxu0 0.0
  %3386 = vmatpush1.msra.mxu0 0.0
  %3387 = vmatprep.subr.mxu0 0.0
  %3388 = vmatpush1.msra.mxu0 0.0
  %3389 = vmatprep.subr.mxu0 0.0
  %3390 = vmatpush1.msra.mxu0 0.0
  %3391 = vmatprep.subr.mxu0 0.0
  %3392 = vmatpush1.msra.mxu0 0.0
  %3393 = vmatprep.subr.mxu0 0.0
  %3394 = vmatpush1.msra.mxu0 0.0
  %3395 = vmatprep.subr.mxu0 0.0
  %3396 = vmatpush1.msra.mxu0 0.0
  %3397 = vmatprep.subr.mxu0 0.0
  %3398 = vmatpush1.msra.mxu0 0.0
  %3399 = vmatprep.subr.mxu0 0.0
  %3400 = vmatpush1.msra.mxu0 0.0
  %3401 = vmatprep.subr.mxu0 0.0
  %3402 = vmatpush1.msra.mxu0 0.0
  %3403 = vmatprep.subr.mxu0 0.0
  %3404 = vmatpush1.msra.mxu0 0.0
  %3405 = vmatprep.subr.mxu0 0.0
  %3406 = vmatpush1.msra.mxu0 0.0
  %3407 = vmatprep.subr.mxu0 0.0
  %3408 = vmatpush1.msra.mxu0 0.0
  %3409 = vmatprep.mubr.f32.mxu0 0.0
  %3410 = vmatmul.mubr.f32.gmra.mrb[0].mxu0 %v28
  %v3411 = vpop.f32.mrb[0].mxu0
  %v3412 = vadd.f32 %v3343, %v3411
  %v3413 = vpop.f32.mrb[0].mxu0
  %3414 = vdwg.mxu0
  %s3415 = scalar_lea.vmem %s3, 312
  %3416 = vst.msk [vmem:[%s3415] sm:$0xff] %vm100, %v3412
  // Predicated region
  $region14: #{list2model_forward.1} parent=0 // pred_check
    _
  $region15: #{list2model_forward.1} parent=0 // pred_check_branch
    %3418 = sbr.rel (0) target = $region17
  $region16: #{list2model_forward.1} parent=0 // pred_region
    _
  $region17: #{list2model_forward.1} parent=0 // pred_fallthru
    _
  // Predicated region
  $region18: #{list2model_forward.1} parent=0 // pred_check
    _
  $region19: #{list2model_forward.1} parent=0 // pred_check_branch
    %3420 = sbr.rel (0) target = $region21
  $region20: #{list2model_forward.1} parent=0 // pred_region
    _
  $region21: #{list2model_forward.1} parent=0 // pred_fallthru
    _

</llo_original>
